<compile_context>
chip_gen: v5e
topology: v5e:2x2
jax: 0.10.0
libtpu: 0.0.40
codegen_flags: <defaults>
</compile_context>

<pallas_src>
import jax
import jax.numpy as jnp
from jax import lax
from jax.experimental import pallas as pl
from jax.experimental.pallas import tpu as pltpu

# ----------------------------- model hyperparams -----------------------------
VOCAB = 20            # len(input) list
PAD_IDX = 0           # input.index(PAD)
EMBED = 16            # embed_sz
H = 32                # hidden_sz
NL = 4                # num_layers
OUT = 8               # output_sz
T = 8                 # sequence length fed to the module
IN_MAX = max(EMBED, 2 * H)   # 64: padded per-layer input width
G = 4 * H                    # 128 gates per direction
G2 = 2 * G                   # 256 gates for both directions (fused step)
FC_IN = H * 4 * NL           # fc1_input_sz = 512


# --------------------------------- kernel ------------------------------------
def lstm_fc_softmax_kernel(len_ref,          # SMEM (1,) int32: num_non_pads
                           emb_ref,          # VMEM (T, IN_MAX) padded embeddings
                           msame_ref,        # VMEM (NL, IN_MAX, G2) input proj ("same-row")
                           mcross_ref,       # VMEM (NL, IN_MAX, G2) input proj ("cross-row")
                           whh_ref,          # VMEM (NL, 2H, G2) block-diag recurrent weight
                           b_ref,            # VMEM (NL, 1, G2) combined bias
                           fcw_ref,          # VMEM (FC_IN, OUT) row-permuted fc1 weight
                           fcb_ref,          # VMEM (1, OUT) fc1 bias
                           out_ref,          # VMEM (1, OUT)
                           gxs_s, gxc_s,     # scratch (T, G2) f32 each
                           seq_a, seq_b):    # scratch (T, IN_MAX) f32 each (ping-pong)
    L = len_ref[0]
    lane = lax.broadcasted_iota(jnp.int32, (1, 2 * H), 1)   # loop-invariant lane ids
    finals = []
    seq_bufs = (seq_a, seq_b)

    for layer in range(NL):
        in_ref = emb_ref if layer == 0 else seq_bufs[(layer - 1) % 2]
        out_buf = seq_bufs[layer % 2]

        # Hoisted input projection for BOTH directions of this layer:
        #   gx_total(step i) = gxs[i] + gxc[T-1-i]   (handled inside the step).
        x = in_ref[...]                                            # (T, IN_MAX)
        gxs_s[...] = jnp.dot(x, msame_ref[layer],
                             preferred_element_type=jnp.float32)   # (T, G2)
        gxc_s[...] = jnp.dot(x, mcross_ref[layer],
                             preferred_element_type=jnp.float32)   # (T, G2)
        whh = whh_ref[layer]                                       # (2H, G2)
        b = b_ref[layer]                                           # (1, G2)
        write_seq = layer < NL - 1                                 # last layer's seq unused

        def step(i, carry, whh=whh, b=b, out_buf=out_buf, write_seq=write_seq):
            h, c = carry                                           # (1, 2H) each [fwd|bwd]
            gx = gxs_s[pl.ds(i, 1), :] + gxc_s[pl.ds(T - 1 - i, 1), :]   # (1, G2)
            gates = gx + jnp.dot(h, whh, preferred_element_type=jnp.float32) + b
            # column layout: [i_f,i_b,f_f,f_b,o_f,o_b,g_f,g_b], each H wide
            sig = jax.nn.sigmoid(gates[:, 0:6 * H])                # one sigmoid, 6H lanes
            g_cat = jnp.tanh(gates[:, 6 * H:])                     # one tanh, 2H lanes
            i_cat = sig[:, 0:2 * H]
            f_cat = sig[:, 2 * H:4 * H]
            o_cat = sig[:, 4 * H:6 * H]
            c_new = f_cat * c + i_cat * g_cat
            h_new = o_cat * jnp.tanh(c_new)
            # packed-sequence semantics: fwd half processes t=i, bwd half t=T-1-i;
            # freeze each half at padded positions (t >= L).
            t_lane = jnp.where(lane < H, i, T - 1 - i)
            valid = t_lane < L
            h_upd = jnp.where(valid, h_new, h)
            c_upd = jnp.where(valid, c_new, c)
            if write_seq:
                out_buf[pl.ds(i, 1), :] = h_upd                    # step-major (1, 2H) row
            return (h_upd, c_upd)

        zeros = jnp.zeros((1, 2 * H), jnp.float32)
        h_fin, c_fin = lax.fori_loop(0, T, step, (zeros, zeros), unroll=True)
        finals.append(h_fin)
        finals.append(c_fin)

    # fc1 (fcw rows were permuted in the wrapper to match [h_f|h_b|c_f|c_b] per layer)
    flat = jnp.concatenate(finals, axis=1)                         # (1, FC_IN)
    logits = jnp.dot(flat, fcw_ref[...],
                     preferred_element_type=jnp.float32) + fcb_ref[...]
    # TODO(synk): nn.Dropout is identity in eval mode; training-mode dropout not implemented.
    m = jnp.max(logits, axis=-1, keepdims=True)
    e = jnp.exp(logits - m)
    out_ref[...] = e / jnp.sum(e, axis=-1, keepdims=True)          # Softmax(dim=0)


# --------------------------------- wrapper -----------------------------------
@jax.jit
def name_format_forward(tokens, num_non_pads, emb_table,
                        msame, mcross, whh_all, bias_all, fcw_perm, fcb2):
    emb = emb_table[tokens]                                        # (T, EMBED)
    emb_p = jnp.zeros((T, IN_MAX), jnp.float32).at[:, :EMBED].set(emb)
    lens = jnp.reshape(num_non_pads.astype(jnp.int32), (1,))

    out = pl.pallas_call(
        lstm_fc_softmax_kernel,
        out_shape=jax.ShapeDtypeStruct((1, OUT), jnp.float32),
        in_specs=[
            pl.BlockSpec(memory_space=pltpu.MemorySpace.SMEM),   # num_non_pads
            pl.BlockSpec(memory_space=pltpu.MemorySpace.VMEM),   # emb
            pl.BlockSpec(memory_space=pltpu.MemorySpace.VMEM),   # M_same
            pl.BlockSpec(memory_space=pltpu.MemorySpace.VMEM),   # M_cross
            pl.BlockSpec(memory_space=pltpu.MemorySpace.VMEM),   # W_hh block-diag
            pl.BlockSpec(memory_space=pltpu.MemorySpace.VMEM),   # bias
            pl.BlockSpec(memory_space=pltpu.MemorySpace.VMEM),   # fc1 weight (permuted)
            pl.BlockSpec(memory_space=pltpu.MemorySpace.VMEM),   # fc1 bias
        ],
        out_specs=pl.BlockSpec(memory_space=pltpu.MemorySpace.VMEM),
        scratch_shapes=[
            pltpu.VMEM((T, G2), jnp.float32),       # gx "same-row"
            pltpu.VMEM((T, G2), jnp.float32),       # gx "cross-row"
            pltpu.VMEM((T, IN_MAX), jnp.float32),   # layer output ping
            pltpu.VMEM((T, IN_MAX), jnp.float32),   # layer output pong
        ],
    )(lens, emb_p, msame, mcross, whh_all, bias_all, fcw_perm, fcb2)
    return out[0]                                                  # (OUT,)


# --------------------------- weight preparation --------------------------------
def _place_gates(mat, d):
    """mat: (rows, 4H) in PyTorch gate order [i,f,g,o]; scatter into (rows, G2)
    combined layout [i_f,i_b,f_f,f_b,o_f,o_b,g_f,g_b] for direction d."""
    rows = mat.shape[0]
    out = jnp.zeros((rows, G2), jnp.float32)
    dest = {'i': 0, 'f': 2, 'o': 4, 'g': 6}
    src = {'i': mat[:, 0:H], 'f': mat[:, H:2 * H],
           'g': mat[:, 2 * H:3 * H], 'o': mat[:, 3 * H:4 * H]}
    for name in ('i', 'f', 'o', 'g'):
        c = (dest[name] + d) * H
        out = out.at[:, c:c + H].set(src[name])
    return out


def prepare_params(raw_params, fcw, fcb):
    msame_l, mcross_l, whh_l, bias_l = [], [], [], []
    for layer in range(NL):
        w_ih_f, w_hh_f, b_ih_f, b_hh_f = raw_params[layer * 2 + 0]
        w_ih_b, w_hh_b, b_ih_b, b_hh_b = raw_params[layer * 2 + 1]
        wihT_f, wihT_b = w_ih_f.T, w_ih_b.T          # (in_sz, 4H)
        whhT_f, whhT_b = w_hh_f.T, w_hh_b.T          # (H, 4H)

        m_same = jnp.zeros((IN_MAX, G2), jnp.float32)
        m_cross = jnp.zeros((IN_MAX, G2), jnp.float32)
        if layer == 0:
            # layer-0 input is time-major embeddings
            m_same = m_same.at[:EMBED, :].set(_place_gates(wihT_f, 0))
            m_cross = m_cross.at[:EMBED, :].set(_place_gates(wihT_b, 1))
        else:
            # layer>0 input is the previous layer's step-major buffer:
            # row j = [h_f(t=j) | h_b(t=T-1-j)]
            m_same = m_same.at[0:H, :].set(_place_gates(wihT_f[0:H], 0))        # h_f -> fwd gates
            m_same = m_same.at[H:2 * H, :].set(_place_gates(wihT_b[H:2 * H], 1))  # h_b -> bwd gates
            m_cross = m_cross.at[0:H, :].set(_place_gates(wihT_b[0:H], 1))      # h_f -> bwd gates
            m_cross = m_cross.at[H:2 * H, :].set(_place_gates(wihT_f[H:2 * H], 0))  # h_b -> fwd gates

        whh_bd = jnp.zeros((2 * H, G2), jnp.float32)
        whh_bd = whh_bd.at[0:H, :].set(_place_gates(whhT_f, 0))
        whh_bd = whh_bd.at[H:2 * H, :].set(_place_gates(whhT_b, 1))
        b_comb = (_place_gates((b_ih_f + b_hh_f)[None, :], 0)
                  + _place_gates((b_ih_b + b_hh_b)[None, :], 1))
        msame_l.append(m_same); mcross_l.append(m_cross)
        whh_l.append(whh_bd); bias_l.append(b_comb)

    msame = jnp.stack(msame_l)        # (NL, IN_MAX, G2)
    mcross = jnp.stack(mcross_l)      # (NL, IN_MAX, G2)
    whh_all = jnp.stack(whh_l)        # (NL, 2H, G2)
    bias_all = jnp.stack(bias_l)      # (NL, 1, G2)

    # fc1 row permutation: kernel flat layout per layer is [h_f | h_b | c_f | c_b];
    # PyTorch layout is [h_idx | c_idx] for idx = layer*2 + d.
    perm = []
    for layer in range(NL):
        for part in range(2):          # 0: hidden, 1: cell
            for d in range(2):         # 0: fwd, 1: bwd
                base = (layer * 2 + d) * 2 * H + part * H
                perm.append(jnp.arange(base, base + H))
    perm = jnp.concatenate(perm)
    fcw_perm = fcw[perm, :]
    return msame, mcross, whh_all, bias_all, fcw_perm, fcb.reshape(1, OUT)


# --------------------------- pure-JAX reference -------------------------------
def reference_forward(tokens, L, emb_table, raw_params, fcw, fcb):
    emb = emb_table[tokens]
    x_seq = emb
    finals = []
    for layer in range(NL):
        outs = []
        for d in range(2):
            w_ih, w_hh, b_ih, b_hh = raw_params[layer * 2 + d]
            h = jnp.zeros((H,), jnp.float32)
            c = jnp.zeros((H,), jnp.float32)
            seq_h = [jnp.zeros((H,), jnp.float32)] * T
            order = range(L) if d == 0 else range(L - 1, -1, -1)
            for t in order:
                gates = w_ih @ x_seq[t] + w_hh @ h + b_ih + b_hh
                i_g = jax.nn.sigmoid(gates[0:H])
                f_g = jax.nn.sigmoid(gates[H:2 * H])
                g_g = jnp.tanh(gates[2 * H:3 * H])
                o_g = jax.nn.sigmoid(gates[3 * H:4 * H])
                c = f_g * c + i_g * g_g
                h = o_g * jnp.tanh(c)
                seq_h[t] = h
            outs.append(seq_h)
            finals.append((h, c))
        x_seq = jnp.stack([jnp.concatenate([outs[0][t], outs[1][t]])
                           for t in range(T)], axis=0)
    flat = jnp.concatenate([jnp.concatenate([h, c]) for (h, c) in finals])
    logits = flat @ fcw + fcb
    return jax.nn.softmax(logits)


# ----------------------------------- main -------------------------------------
if __name__ == "__main__":
    key = jax.random.PRNGKey(0)
    k_emb, k_lstm, k_fcw, k_fcb, k_tok = jax.random.split(key, 5)

    # Embedding table (padding_idx row zeroed)
    emb_table = 0.5 * jax.random.normal(k_emb, (VOCAB, EMBED), jnp.float32)
    emb_table = emb_table.at[PAD_IDX].set(0.0)

    # LSTM weights, PyTorch layout: w_ih (4H, in), w_hh (4H, H), biases (4H,)
    scale = 1.0 / float(H) ** 0.5
    lstm_keys = iter(jax.random.split(k_lstm, NL * 2 * 4))
    raw_params = []
    for layer in range(NL):
        in_sz = EMBED if layer == 0 else 2 * H
        for d in range(2):
            w_ih = jax.random.uniform(next(lstm_keys), (G, in_sz), jnp.float32, -scale, scale)
            w_hh = jax.random.uniform(next(lstm_keys), (G, H), jnp.float32, -scale, scale)
            b_ih = jax.random.uniform(next(lstm_keys), (G,), jnp.float32, -scale, scale)
            b_hh = jax.random.uniform(next(lstm_keys), (G,), jnp.float32, -scale, scale)
            raw_params.append((w_ih, w_hh, b_ih, b_hh))

    fc_scale = 1.0 / float(FC_IN) ** 0.5
    fcw = jax.random.uniform(k_fcw, (FC_IN, OUT), jnp.float32, -fc_scale, fc_scale)
    fcb = jax.random.uniform(k_fcb, (OUT,), jnp.float32, -fc_scale, fc_scale)

    msame, mcross, whh_all, bias_all, fcw_perm, fcb2 = prepare_params(raw_params, fcw, fcb)

    # Example input: a length-8 "name" with 6 real tokens and 2 PADs.
    tokens = jax.random.randint(k_tok, (T,), 1, VOCAB, jnp.int32)
    L = 6
    tokens = tokens.at[L:].set(PAD_IDX)
    num_non_pads = jnp.array([L], jnp.int32)

    out = name_format_forward(tokens, num_non_pads, emb_table,
                              msame, mcross, whh_all, bias_all, fcw_perm, fcb2)
    out = jax.block_until_ready(out)

    ref = reference_forward(tokens, L, emb_table, raw_params, fcw, fcb)
    assert out.shape == (OUT,)
    assert jnp.allclose(jnp.sum(out), 1.0, atol=1e-5)
    assert jnp.allclose(out, ref, atol=2e-5, rtol=2e-5), (out, ref)

    print("KERNEL_OK")
</pallas_src>

<mosaic_0001>
module attributes {stable_mosaic.version = 11 : i64} {
  func.func @lstm_fc_softmax_kernel(%arg0: memref<1xi32, #tpu.memory_space<smem>>, %arg1: memref<8x64xf32, #tpu.memory_space<vmem>>, %arg2: memref<4x64x256xf32, #tpu.memory_space<vmem>>, %arg3: memref<4x64x256xf32, #tpu.memory_space<vmem>>, %arg4: memref<4x64x256xf32, #tpu.memory_space<vmem>>, %arg5: memref<4x1x256xf32, #tpu.memory_space<vmem>>, %arg6: memref<512x8xf32, #tpu.memory_space<vmem>>, %arg7: memref<1x8xf32, #tpu.memory_space<vmem>>, %arg8: memref<1x8xf32, #tpu.memory_space<vmem>>, %arg9: memref<8x256xf32, #tpu.memory_space<vmem>>, %arg10: memref<8x256xf32, #tpu.memory_space<vmem>>, %arg11: memref<8x64xf32, #tpu.memory_space<vmem>>, %arg12: memref<8x64xf32, #tpu.memory_space<vmem>>) attributes {dimension_semantics = [], scalar_prefetch = 0 : i64, scratch_operands = 4 : i64, tpu.core_type = #tpu.core_type<tc>} {
    %c0 = arith.constant 0 : index
    %0 = memref.load %arg0[%c0] : memref<1xi32, #tpu.memory_space<smem>>
    %1 = tpu.iota {dimensions = array<i32: 1>} : vector<1x64xi32>
    %c0_0 = arith.constant 0 : index
    %c0_1 = arith.constant 0 : index
    %2 = vector.load %arg1[%c0_0, %c0_1] : memref<8x64xf32, #tpu.memory_space<vmem>>, vector<8x64xf32>
    %c0_2 = arith.constant 0 : index
    %c0_3 = arith.constant 0 : index
    %c0_4 = arith.constant 0 : index
    %3 = vector.load %arg2[%c0_2, %c0_3, %c0_4] : memref<4x64x256xf32, #tpu.memory_space<vmem>>, vector<1x64x256xf32>
    %4 = vector.shape_cast %3 : vector<1x64x256xf32> to vector<64x256xf32>
    %cst = arith.constant dense<0.000000e+00> : vector<8x256xf32>
    %5 = tpu.matmul %2, %4, %cst {dimension_numbers = #tpu.dot_dimension_numbers<[1], [0], [0], [1], [0, 0, 1, 1], [], []>} : vector<8x64xf32>, vector<64x256xf32>, vector<8x256xf32> -> vector<8x256xf32>
    %c0_5 = arith.constant 0 : index
    %c0_6 = arith.constant 0 : index
    %6 = vector.load %arg9[%c0_5, %c0_6] : memref<8x256xf32, #tpu.memory_space<vmem>>, vector<8x256xf32>
    tpu.vector_store %arg9[%c0_5, %c0_6], %5 {strides = array<i32>} : memref<8x256xf32, #tpu.memory_space<vmem>>, vector<8x256xf32>,
    %c0_7 = arith.constant 0 : index
    %c0_8 = arith.constant 0 : index
    %c0_9 = arith.constant 0 : index
    %7 = vector.load %arg3[%c0_7, %c0_8, %c0_9] : memref<4x64x256xf32, #tpu.memory_space<vmem>>, vector<1x64x256xf32>
    %8 = vector.shape_cast %7 : vector<1x64x256xf32> to vector<64x256xf32>
    %cst_10 = arith.constant dense<0.000000e+00> : vector<8x256xf32>
    %9 = tpu.matmul %2, %8, %cst_10 {dimension_numbers = #tpu.dot_dimension_numbers<[1], [0], [0], [1], [0, 0, 1, 1], [], []>} : vector<8x64xf32>, vector<64x256xf32>, vector<8x256xf32> -> vector<8x256xf32>
    %c0_11 = arith.constant 0 : index
    %c0_12 = arith.constant 0 : index
    %10 = vector.load %arg10[%c0_11, %c0_12] : memref<8x256xf32, #tpu.memory_space<vmem>>, vector<8x256xf32>
    tpu.vector_store %arg10[%c0_11, %c0_12], %9 {strides = array<i32>} : memref<8x256xf32, #tpu.memory_space<vmem>>, vector<8x256xf32>,
    %c0_13 = arith.constant 0 : index
    %c0_14 = arith.constant 0 : index
    %c0_15 = arith.constant 0 : index
    %11 = vector.load %arg4[%c0_13, %c0_14, %c0_15] : memref<4x64x256xf32, #tpu.memory_space<vmem>>, vector<1x64x256xf32>
    %12 = vector.shape_cast %11 : vector<1x64x256xf32> to vector<64x256xf32>
    %c0_16 = arith.constant 0 : index
    %c0_17 = arith.constant 0 : index
    %c0_18 = arith.constant 0 : index
    %13 = vector.load %arg5[%c0_16, %c0_17, %c0_18] : memref<4x1x256xf32, #tpu.memory_space<vmem>>, vector<1x1x256xf32>
    %14 = vector.shape_cast %13 : vector<1x1x256xf32> to vector<1x256xf32>
    %cst_19 = arith.constant 0.000000e+00 : f32
    %15 = vector.broadcast %cst_19 : f32 to vector<1x64xf32>
    %c0_i32 = arith.constant 0 : i32
    %16 = arith.index_cast %c0_i32 : i32 to index
    %c0_20 = arith.constant 0 : index
    %17 = vector.load %arg9[%16, %c0_20] : memref<8x256xf32, #tpu.memory_space<vmem>>, vector<1x256xf32>
    %c7_i32 = arith.constant 7 : i32
    %18 = arith.subi %c7_i32, %c0_i32 : i32
    %19 = arith.index_cast %18 : i32 to index
    %c0_21 = arith.constant 0 : index
    %20 = vector.load %arg10[%19, %c0_21] : memref<8x256xf32, #tpu.memory_space<vmem>>, vector<1x256xf32>
    %21 = arith.addf %17, %20 : vector<1x256xf32>
    %cst_22 = arith.constant dense<0.000000e+00> : vector<1x256xf32>
    %22 = tpu.matmul %15, %12, %cst_22 {dimension_numbers = #tpu.dot_dimension_numbers<[1], [0], [0], [1], [0, 0, 1, 1], [], []>} : vector<1x64xf32>, vector<64x256xf32>, vector<1x256xf32> -> vector<1x256xf32>
    %23 = arith.addf %21, %22 : vector<1x256xf32>
    %24 = arith.addf %23, %14 : vector<1x256xf32>
    %25 = vector.extract_strided_slice %24 {offsets = [0, 0], sizes = [1, 192], strides = [1, 1]} : vector<1x256xf32> to vector<1x192xf32>
    %26 = arith.negf %25 : vector<1x192xf32>
    %27 = math.exp %26 : vector<1x192xf32>
    %cst_23 = arith.constant 1.000000e+00 : f32
    %28 = vector.broadcast %cst_23 : f32 to vector<1x192xf32>
    %29 = arith.addf %28, %27 : vector<1x192xf32>
    %30 = arith.divf %28, %29 : vector<1x192xf32>
    %31 = vector.extract_strided_slice %24 {offsets = [0, 192], sizes = [1, 64], strides = [1, 1]} : vector<1x256xf32> to vector<1x64xf32>
    %32 = math.tanh %31 : vector<1x64xf32>
    %33 = vector.extract_strided_slice %30 {offsets = [0, 0], sizes = [1, 64], strides = [1, 1]} : vector<1x192xf32> to vector<1x64xf32>
    %34 = vector.extract_strided_slice %30 {offsets = [0, 64], sizes = [1, 64], strides = [1, 1]} : vector<1x192xf32> to vector<1x64xf32>
    %35 = vector.extract_strided_slice %30 {offsets = [0, 128], sizes = [1, 64], strides = [1, 1]} : vector<1x192xf32> to vector<1x64xf32>
    %36 = arith.mulf %34, %15 : vector<1x64xf32>
    %37 = arith.mulf %33, %32 : vector<1x64xf32>
    %38 = arith.addf %36, %37 : vector<1x64xf32>
    %39 = math.tanh %38 : vector<1x64xf32>
    %40 = arith.mulf %35, %39 : vector<1x64xf32>
    %c32_i32 = arith.constant 32 : i32
    %41 = vector.broadcast %c32_i32 : i32 to vector<1x64xi32>
    %42 = arith.cmpi slt, %1, %41 : vector<1x64xi32>
    %c7_i32_24 = arith.constant 7 : i32
    %43 = arith.subi %c7_i32_24, %c0_i32 : i32
    %44 = vector.broadcast %c0_i32 : i32 to vector<1x64xi32>
    %45 = vector.broadcast %43 : i32 to vector<1x64xi32>
    %46 = arith.select %42, %44, %45 : vector<1x64xi1>, vector<1x64xi32>
    %47 = vector.broadcast %0 : i32 to vector<1x64xi32>
    %48 = arith.cmpi slt, %46, %47 : vector<1x64xi32>
    %49 = arith.select %48, %40, %15 : vector<1x64xi1>, vector<1x64xf32>
    %50 = arith.select %48, %38, %15 : vector<1x64xi1>, vector<1x64xf32>
    %51 = arith.index_cast %c0_i32 : i32 to index
    %c0_25 = arith.constant 0 : index
    %52 = vector.load %arg11[%51, %c0_25] : memref<8x64xf32, #tpu.memory_space<vmem>>, vector<1x64xf32>
    tpu.vector_store %arg11[%51, %c0_25], %49 {strides = array<i32>} : memref<8x64xf32, #tpu.memory_space<vmem>>, vector<1x64xf32>,
    %c1_i32 = arith.constant 1 : i32
    %53 = arith.index_cast %c1_i32 : i32 to index
    %c0_26 = arith.constant 0 : index
    %54 = vector.load %arg9[%53, %c0_26] : memref<8x256xf32, #tpu.memory_space<vmem>>, vector<1x256xf32>
    %c7_i32_27 = arith.constant 7 : i32
    %55 = arith.subi %c7_i32_27, %c1_i32 : i32
    %56 = arith.index_cast %55 : i32 to index
    %c0_28 = arith.constant 0 : index
    %57 = vector.load %arg10[%56, %c0_28] : memref<8x256xf32, #tpu.memory_space<vmem>>, vector<1x256xf32>
    %58 = arith.addf %54, %57 : vector<1x256xf32>
    %cst_29 = arith.constant dense<0.000000e+00> : vector<1x256xf32>
    %59 = tpu.matmul %49, %12, %cst_29 {dimension_numbers = #tpu.dot_dimension_numbers<[1], [0], [0], [1], [0, 0, 1, 1], [], []>} : vector<1x64xf32>, vector<64x256xf32>, vector<1x256xf32> -> vector<1x256xf32>
    %60 = arith.addf %58, %59 : vector<1x256xf32>
    %61 = arith.addf %60, %14 : vector<1x256xf32>
    %62 = vector.extract_strided_slice %61 {offsets = [0, 0], sizes = [1, 192], strides = [1, 1]} : vector<1x256xf32> to vector<1x192xf32>
    %63 = arith.negf %62 : vector<1x192xf32>
    %64 = math.exp %63 : vector<1x192xf32>
    %cst_30 = arith.constant 1.000000e+00 : f32
    %65 = vector.broadcast %cst_30 : f32 to vector<1x192xf32>
    %66 = arith.addf %65, %64 : vector<1x192xf32>
    %67 = arith.divf %65, %66 : vector<1x192xf32>
    %68 = vector.extract_strided_slice %61 {offsets = [0, 192], sizes = [1, 64], strides = [1, 1]} : vector<1x256xf32> to vector<1x64xf32>
    %69 = math.tanh %68 : vector<1x64xf32>
    %70 = vector.extract_strided_slice %67 {offsets = [0, 0], sizes = [1, 64], strides = [1, 1]} : vector<1x192xf32> to vector<1x64xf32>
    %71 = vector.extract_strided_slice %67 {offsets = [0, 64], sizes = [1, 64], strides = [1, 1]} : vector<1x192xf32> to vector<1x64xf32>
    %72 = vector.extract_strided_slice %67 {offsets = [0, 128], sizes = [1, 64], strides = [1, 1]} : vector<1x192xf32> to vector<1x64xf32>
    %73 = arith.mulf %71, %50 : vector<1x64xf32>
    %74 = arith.mulf %70, %69 : vector<1x64xf32>
    %75 = arith.addf %73, %74 : vector<1x64xf32>
    %76 = math.tanh %75 : vector<1x64xf32>
    %77 = arith.mulf %72, %76 : vector<1x64xf32>
    %c32_i32_31 = arith.constant 32 : i32
    %78 = vector.broadcast %c32_i32_31 : i32 to vector<1x64xi32>
    %79 = arith.cmpi slt, %1, %78 : vector<1x64xi32>
    %c7_i32_32 = arith.constant 7 : i32
    %80 = arith.subi %c7_i32_32, %c1_i32 : i32
    %81 = vector.broadcast %c1_i32 : i32 to vector<1x64xi32>
    %82 = vector.broadcast %80 : i32 to vector<1x64xi32>
    %83 = arith.select %79, %81, %82 : vector<1x64xi1>, vector<1x64xi32>
    %84 = vector.broadcast %0 : i32 to vector<1x64xi32>
    %85 = arith.cmpi slt, %83, %84 : vector<1x64xi32>
    %86 = arith.select %85, %77, %49 : vector<1x64xi1>, vector<1x64xf32>
    %87 = arith.select %85, %75, %50 : vector<1x64xi1>, vector<1x64xf32>
    %88 = arith.index_cast %c1_i32 : i32 to index
    %c0_33 = arith.constant 0 : index
    %89 = vector.load %arg11[%88, %c0_33] : memref<8x64xf32, #tpu.memory_space<vmem>>, vector<1x64xf32>
    tpu.vector_store %arg11[%88, %c0_33], %86 {strides = array<i32>} : memref<8x64xf32, #tpu.memory_space<vmem>>, vector<1x64xf32>,
    %c2_i32 = arith.constant 2 : i32
    %90 = arith.index_cast %c2_i32 : i32 to index
    %c0_34 = arith.constant 0 : index
    %91 = vector.load %arg9[%90, %c0_34] : memref<8x256xf32, #tpu.memory_space<vmem>>, vector<1x256xf32>
    %c7_i32_35 = arith.constant 7 : i32
    %92 = arith.subi %c7_i32_35, %c2_i32 : i32
    %93 = arith.index_cast %92 : i32 to index
    %c0_36 = arith.constant 0 : index
    %94 = vector.load %arg10[%93, %c0_36] : memref<8x256xf32, #tpu.memory_space<vmem>>, vector<1x256xf32>
    %95 = arith.addf %91, %94 : vector<1x256xf32>
    %cst_37 = arith.constant dense<0.000000e+00> : vector<1x256xf32>
    %96 = tpu.matmul %86, %12, %cst_37 {dimension_numbers = #tpu.dot_dimension_numbers<[1], [0], [0], [1], [0, 0, 1, 1], [], []>} : vector<1x64xf32>, vector<64x256xf32>, vector<1x256xf32> -> vector<1x256xf32>
    %97 = arith.addf %95, %96 : vector<1x256xf32>
    %98 = arith.addf %97, %14 : vector<1x256xf32>
    %99 = vector.extract_strided_slice %98 {offsets = [0, 0], sizes = [1, 192], strides = [1, 1]} : vector<1x256xf32> to vector<1x192xf32>
    %100 = arith.negf %99 : vector<1x192xf32>
    %101 = math.exp %100 : vector<1x192xf32>
    %cst_38 = arith.constant 1.000000e+00 : f32
    %102 = vector.broadcast %cst_38 : f32 to vector<1x192xf32>
    %103 = arith.addf %102, %101 : vector<1x192xf32>
    %104 = arith.divf %102, %103 : vector<1x192xf32>
    %105 = vector.extract_strided_slice %98 {offsets = [0, 192], sizes = [1, 64], strides = [1, 1]} : vector<1x256xf32> to vector<1x64xf32>
    %106 = math.tanh %105 : vector<1x64xf32>
    %107 = vector.extract_strided_slice %104 {offsets = [0, 0], sizes = [1, 64], strides = [1, 1]} : vector<1x192xf32> to vector<1x64xf32>
    %108 = vector.extract_strided_slice %104 {offsets = [0, 64], sizes = [1, 64], strides = [1, 1]} : vector<1x192xf32> to vector<1x64xf32>
    %109 = vector.extract_strided_slice %104 {offsets = [0, 128], sizes = [1, 64], strides = [1, 1]} : vector<1x192xf32> to vector<1x64xf32>
    %110 = arith.mulf %108, %87 : vector<1x64xf32>
    %111 = arith.mulf %107, %106 : vector<1x64xf32>
    %112 = arith.addf %110, %111 : vector<1x64xf32>
    %113 = math.tanh %112 : vector<1x64xf32>
    %114 = arith.mulf %109, %113 : vector<1x64xf32>
    %c32_i32_39 = arith.constant 32 : i32
    %115 = vector.broadcast %c32_i32_39 : i32 to vector<1x64xi32>
    %116 = arith.cmpi slt, %1, %115 : vector<1x64xi32>
    %c7_i32_40 = arith.constant 7 : i32
    %117 = arith.subi %c7_i32_40, %c2_i32 : i32
    %118 = vector.broadcast %c2_i32 : i32 to vector<1x64xi32>
    %119 = vector.broadcast %117 : i32 to vector<1x64xi32>
    %120 = arith.select %116, %118, %119 : vector<1x64xi1>, vector<1x64xi32>
    %121 = vector.broadcast %0 : i32 to vector<1x64xi32>
    %122 = arith.cmpi slt, %120, %121 : vector<1x64xi32>
    %123 = arith.select %122, %114, %86 : vector<1x64xi1>, vector<1x64xf32>
    %124 = arith.select %122, %112, %87 : vector<1x64xi1>, vector<1x64xf32>
    %125 = arith.index_cast %c2_i32 : i32 to index
    %c0_41 = arith.constant 0 : index
    %126 = vector.load %arg11[%125, %c0_41] : memref<8x64xf32, #tpu.memory_space<vmem>>, vector<1x64xf32>
    tpu.vector_store %arg11[%125, %c0_41], %123 {strides = array<i32>} : memref<8x64xf32, #tpu.memory_space<vmem>>, vector<1x64xf32>,
    %c3_i32 = arith.constant 3 : i32
    %127 = arith.index_cast %c3_i32 : i32 to index
    %c0_42 = arith.constant 0 : index
    %128 = vector.load %arg9[%127, %c0_42] : memref<8x256xf32, #tpu.memory_space<vmem>>, vector<1x256xf32>
    %c7_i32_43 = arith.constant 7 : i32
    %129 = arith.subi %c7_i32_43, %c3_i32 : i32
    %130 = arith.index_cast %129 : i32 to index
    %c0_44 = arith.constant 0 : index
    %131 = vector.load %arg10[%130, %c0_44] : memref<8x256xf32, #tpu.memory_space<vmem>>, vector<1x256xf32>
    %132 = arith.addf %128, %131 : vector<1x256xf32>
    %cst_45 = arith.constant dense<0.000000e+00> : vector<1x256xf32>
    %133 = tpu.matmul %123, %12, %cst_45 {dimension_numbers = #tpu.dot_dimension_numbers<[1], [0], [0], [1], [0, 0, 1, 1], [], []>} : vector<1x64xf32>, vector<64x256xf32>, vector<1x256xf32> -> vector<1x256xf32>
    %134 = arith.addf %132, %133 : vector<1x256xf32>
    %135 = arith.addf %134, %14 : vector<1x256xf32>
    %136 = vector.extract_strided_slice %135 {offsets = [0, 0], sizes = [1, 192], strides = [1, 1]} : vector<1x256xf32> to vector<1x192xf32>
    %137 = arith.negf %136 : vector<1x192xf32>
    %138 = math.exp %137 : vector<1x192xf32>
    %cst_46 = arith.constant 1.000000e+00 : f32
    %139 = vector.broadcast %cst_46 : f32 to vector<1x192xf32>
    %140 = arith.addf %139, %138 : vector<1x192xf32>
    %141 = arith.divf %139, %140 : vector<1x192xf32>
    %142 = vector.extract_strided_slice %135 {offsets = [0, 192], sizes = [1, 64], strides = [1, 1]} : vector<1x256xf32> to vector<1x64xf32>
    %143 = math.tanh %142 : vector<1x64xf32>
    %144 = vector.extract_strided_slice %141 {offsets = [0, 0], sizes = [1, 64], strides = [1, 1]} : vector<1x192xf32> to vector<1x64xf32>
    %145 = vector.extract_strided_slice %141 {offsets = [0, 64], sizes = [1, 64], strides = [1, 1]} : vector<1x192xf32> to vector<1x64xf32>
    %146 = vector.extract_strided_slice %141 {offsets = [0, 128], sizes = [1, 64], strides = [1, 1]} : vector<1x192xf32> to vector<1x64xf32>
    %147 = arith.mulf %145, %124 : vector<1x64xf32>
    %148 = arith.mulf %144, %143 : vector<1x64xf32>
    %149 = arith.addf %147, %148 : vector<1x64xf32>
    %150 = math.tanh %149 : vector<1x64xf32>
    %151 = arith.mulf %146, %150 : vector<1x64xf32>
    %c32_i32_47 = arith.constant 32 : i32
    %152 = vector.broadcast %c32_i32_47 : i32 to vector<1x64xi32>
    %153 = arith.cmpi slt, %1, %152 : vector<1x64xi32>
    %c7_i32_48 = arith.constant 7 : i32
    %154 = arith.subi %c7_i32_48, %c3_i32 : i32
    %155 = vector.broadcast %c3_i32 : i32 to vector<1x64xi32>
    %156 = vector.broadcast %154 : i32 to vector<1x64xi32>
    %157 = arith.select %153, %155, %156 : vector<1x64xi1>, vector<1x64xi32>
    %158 = vector.broadcast %0 : i32 to vector<1x64xi32>
    %159 = arith.cmpi slt, %157, %158 : vector<1x64xi32>
    %160 = arith.select %159, %151, %123 : vector<1x64xi1>, vector<1x64xf32>
    %161 = arith.select %159, %149, %124 : vector<1x64xi1>, vector<1x64xf32>
    %162 = arith.index_cast %c3_i32 : i32 to index
    %c0_49 = arith.constant 0 : index
    %163 = vector.load %arg11[%162, %c0_49] : memref<8x64xf32, #tpu.memory_space<vmem>>, vector<1x64xf32>
    tpu.vector_store %arg11[%162, %c0_49], %160 {strides = array<i32>} : memref<8x64xf32, #tpu.memory_space<vmem>>, vector<1x64xf32>,
    %c4_i32 = arith.constant 4 : i32
    %164 = arith.index_cast %c4_i32 : i32 to index
    %c0_50 = arith.constant 0 : index
    %165 = vector.load %arg9[%164, %c0_50] : memref<8x256xf32, #tpu.memory_space<vmem>>, vector<1x256xf32>
    %c7_i32_51 = arith.constant 7 : i32
    %166 = arith.subi %c7_i32_51, %c4_i32 : i32
    %167 = arith.index_cast %166 : i32 to index
    %c0_52 = arith.constant 0 : index
    %168 = vector.load %arg10[%167, %c0_52] : memref<8x256xf32, #tpu.memory_space<vmem>>, vector<1x256xf32>
    %169 = arith.addf %165, %168 : vector<1x256xf32>
    %cst_53 = arith.constant dense<0.000000e+00> : vector<1x256xf32>
    %170 = tpu.matmul %160, %12, %cst_53 {dimension_numbers = #tpu.dot_dimension_numbers<[1], [0], [0], [1], [0, 0, 1, 1], [], []>} : vector<1x64xf32>, vector<64x256xf32>, vector<1x256xf32> -> vector<1x256xf32>
    %171 = arith.addf %169, %170 : vector<1x256xf32>
    %172 = arith.addf %171, %14 : vector<1x256xf32>
    %173 = vector.extract_strided_slice %172 {offsets = [0, 0], sizes = [1, 192], strides = [1, 1]} : vector<1x256xf32> to vector<1x192xf32>
    %174 = arith.negf %173 : vector<1x192xf32>
    %175 = math.exp %174 : vector<1x192xf32>
    %cst_54 = arith.constant 1.000000e+00 : f32
    %176 = vector.broadcast %cst_54 : f32 to vector<1x192xf32>
    %177 = arith.addf %176, %175 : vector<1x192xf32>
    %178 = arith.divf %176, %177 : vector<1x192xf32>
    %179 = vector.extract_strided_slice %172 {offsets = [0, 192], sizes = [1, 64], strides = [1, 1]} : vector<1x256xf32> to vector<1x64xf32>
    %180 = math.tanh %179 : vector<1x64xf32>
    %181 = vector.extract_strided_slice %178 {offsets = [0, 0], sizes = [1, 64], strides = [1, 1]} : vector<1x192xf32> to vector<1x64xf32>
    %182 = vector.extract_strided_slice %178 {offsets = [0, 64], sizes = [1, 64], strides = [1, 1]} : vector<1x192xf32> to vector<1x64xf32>
    %183 = vector.extract_strided_slice %178 {offsets = [0, 128], sizes = [1, 64], strides = [1, 1]} : vector<1x192xf32> to vector<1x64xf32>
    %184 = arith.mulf %182, %161 : vector<1x64xf32>
    %185 = arith.mulf %181, %180 : vector<1x64xf32>
    %186 = arith.addf %184, %185 : vector<1x64xf32>
    %187 = math.tanh %186 : vector<1x64xf32>
    %188 = arith.mulf %183, %187 : vector<1x64xf32>
    %c32_i32_55 = arith.constant 32 : i32
    %189 = vector.broadcast %c32_i32_55 : i32 to vector<1x64xi32>
    %190 = arith.cmpi slt, %1, %189 : vector<1x64xi32>
    %c7_i32_56 = arith.constant 7 : i32
    %191 = arith.subi %c7_i32_56, %c4_i32 : i32
    %192 = vector.broadcast %c4_i32 : i32 to vector<1x64xi32>
    %193 = vector.broadcast %191 : i32 to vector<1x64xi32>
    %194 = arith.select %190, %192, %193 : vector<1x64xi1>, vector<1x64xi32>
    %195 = vector.broadcast %0 : i32 to vector<1x64xi32>
    %196 = arith.cmpi slt, %194, %195 : vector<1x64xi32>
    %197 = arith.select %196, %188, %160 : vector<1x64xi1>, vector<1x64xf32>
    %198 = arith.select %196, %186, %161 : vector<1x64xi1>, vector<1x64xf32>
    %199 = arith.index_cast %c4_i32 : i32 to index
    %c0_57 = arith.constant 0 : index
    %200 = vector.load %arg11[%199, %c0_57] : memref<8x64xf32, #tpu.memory_space<vmem>>, vector<1x64xf32>
    tpu.vector_store %arg11[%199, %c0_57], %197 {strides = array<i32>} : memref<8x64xf32, #tpu.memory_space<vmem>>, vector<1x64xf32>,
    %c5_i32 = arith.constant 5 : i32
    %201 = arith.index_cast %c5_i32 : i32 to index
    %c0_58 = arith.constant 0 : index
    %202 = vector.load %arg9[%201, %c0_58] : memref<8x256xf32, #tpu.memory_space<vmem>>, vector<1x256xf32>
    %c7_i32_59 = arith.constant 7 : i32
    %203 = arith.subi %c7_i32_59, %c5_i32 : i32
    %204 = arith.index_cast %203 : i32 to index
    %c0_60 = arith.constant 0 : index
    %205 = vector.load %arg10[%204, %c0_60] : memref<8x256xf32, #tpu.memory_space<vmem>>, vector<1x256xf32>
    %206 = arith.addf %202, %205 : vector<1x256xf32>
    %cst_61 = arith.constant dense<0.000000e+00> : vector<1x256xf32>
    %207 = tpu.matmul %197, %12, %cst_61 {dimension_numbers = #tpu.dot_dimension_numbers<[1], [0], [0], [1], [0, 0, 1, 1], [], []>} : vector<1x64xf32>, vector<64x256xf32>, vector<1x256xf32> -> vector<1x256xf32>
    %208 = arith.addf %206, %207 : vector<1x256xf32>
    %209 = arith.addf %208, %14 : vector<1x256xf32>
    %210 = vector.extract_strided_slice %209 {offsets = [0, 0], sizes = [1, 192], strides = [1, 1]} : vector<1x256xf32> to vector<1x192xf32>
    %211 = arith.negf %210 : vector<1x192xf32>
    %212 = math.exp %211 : vector<1x192xf32>
    %cst_62 = arith.constant 1.000000e+00 : f32
    %213 = vector.broadcast %cst_62 : f32 to vector<1x192xf32>
    %214 = arith.addf %213, %212 : vector<1x192xf32>
    %215 = arith.divf %213, %214 : vector<1x192xf32>
    %216 = vector.extract_strided_slice %209 {offsets = [0, 192], sizes = [1, 64], strides = [1, 1]} : vector<1x256xf32> to vector<1x64xf32>
    %217 = math.tanh %216 : vector<1x64xf32>
    %218 = vector.extract_strided_slice %215 {offsets = [0, 0], sizes = [1, 64], strides = [1, 1]} : vector<1x192xf32> to vector<1x64xf32>
    %219 = vector.extract_strided_slice %215 {offsets = [0, 64], sizes = [1, 64], strides = [1, 1]} : vector<1x192xf32> to vector<1x64xf32>
    %220 = vector.extract_strided_slice %215 {offsets = [0, 128], sizes = [1, 64], strides = [1, 1]} : vector<1x192xf32> to vector<1x64xf32>
    %221 = arith.mulf %219, %198 : vector<1x64xf32>
    %222 = arith.mulf %218, %217 : vector<1x64xf32>
    %223 = arith.addf %221, %222 : vector<1x64xf32>
    %224 = math.tanh %223 : vector<1x64xf32>
    %225 = arith.mulf %220, %224 : vector<1x64xf32>
    %c32_i32_63 = arith.constant 32 : i32
    %226 = vector.broadcast %c32_i32_63 : i32 to vector<1x64xi32>
    %227 = arith.cmpi slt, %1, %226 : vector<1x64xi32>
    %c7_i32_64 = arith.constant 7 : i32
    %228 = arith.subi %c7_i32_64, %c5_i32 : i32
    %229 = vector.broadcast %c5_i32 : i32 to vector<1x64xi32>
    %230 = vector.broadcast %228 : i32 to vector<1x64xi32>
    %231 = arith.select %227, %229, %230 : vector<1x64xi1>, vector<1x64xi32>
    %232 = vector.broadcast %0 : i32 to vector<1x64xi32>
    %233 = arith.cmpi slt, %231, %232 : vector<1x64xi32>
    %234 = arith.select %233, %225, %197 : vector<1x64xi1>, vector<1x64xf32>
    %235 = arith.select %233, %223, %198 : vector<1x64xi1>, vector<1x64xf32>
    %236 = arith.index_cast %c5_i32 : i32 to index
    %c0_65 = arith.constant 0 : index
    %237 = vector.load %arg11[%236, %c0_65] : memref<8x64xf32, #tpu.memory_space<vmem>>, vector<1x64xf32>
    tpu.vector_store %arg11[%236, %c0_65], %234 {strides = array<i32>} : memref<8x64xf32, #tpu.memory_space<vmem>>, vector<1x64xf32>,
    %c6_i32 = arith.constant 6 : i32
    %238 = arith.index_cast %c6_i32 : i32 to index
    %c0_66 = arith.constant 0 : index
    %239 = vector.load %arg9[%238, %c0_66] : memref<8x256xf32, #tpu.memory_space<vmem>>, vector<1x256xf32>
    %c7_i32_67 = arith.constant 7 : i32
    %240 = arith.subi %c7_i32_67, %c6_i32 : i32
    %241 = arith.index_cast %240 : i32 to index
    %c0_68 = arith.constant 0 : index
    %242 = vector.load %arg10[%241, %c0_68] : memref<8x256xf32, #tpu.memory_space<vmem>>, vector<1x256xf32>
    %243 = arith.addf %239, %242 : vector<1x256xf32>
    %cst_69 = arith.constant dense<0.000000e+00> : vector<1x256xf32>
    %244 = tpu.matmul %234, %12, %cst_69 {dimension_numbers = #tpu.dot_dimension_numbers<[1], [0], [0], [1], [0, 0, 1, 1], [], []>} : vector<1x64xf32>, vector<64x256xf32>, vector<1x256xf32> -> vector<1x256xf32>
    %245 = arith.addf %243, %244 : vector<1x256xf32>
    %246 = arith.addf %245, %14 : vector<1x256xf32>
    %247 = vector.extract_strided_slice %246 {offsets = [0, 0], sizes = [1, 192], strides = [1, 1]} : vector<1x256xf32> to vector<1x192xf32>
    %248 = arith.negf %247 : vector<1x192xf32>
    %249 = math.exp %248 : vector<1x192xf32>
    %cst_70 = arith.constant 1.000000e+00 : f32
    %250 = vector.broadcast %cst_70 : f32 to vector<1x192xf32>
    %251 = arith.addf %250, %249 : vector<1x192xf32>
    %252 = arith.divf %250, %251 : vector<1x192xf32>
    %253 = vector.extract_strided_slice %246 {offsets = [0, 192], sizes = [1, 64], strides = [1, 1]} : vector<1x256xf32> to vector<1x64xf32>
    %254 = math.tanh %253 : vector<1x64xf32>
    %255 = vector.extract_strided_slice %252 {offsets = [0, 0], sizes = [1, 64], strides = [1, 1]} : vector<1x192xf32> to vector<1x64xf32>
    %256 = vector.extract_strided_slice %252 {offsets = [0, 64], sizes = [1, 64], strides = [1, 1]} : vector<1x192xf32> to vector<1x64xf32>
    %257 = vector.extract_strided_slice %252 {offsets = [0, 128], sizes = [1, 64], strides = [1, 1]} : vector<1x192xf32> to vector<1x64xf32>
    %258 = arith.mulf %256, %235 : vector<1x64xf32>
    %259 = arith.mulf %255, %254 : vector<1x64xf32>
    %260 = arith.addf %258, %259 : vector<1x64xf32>
    %261 = math.tanh %260 : vector<1x64xf32>
    %262 = arith.mulf %257, %261 : vector<1x64xf32>
    %c32_i32_71 = arith.constant 32 : i32
    %263 = vector.broadcast %c32_i32_71 : i32 to vector<1x64xi32>
    %264 = arith.cmpi slt, %1, %263 : vector<1x64xi32>
    %c7_i32_72 = arith.constant 7 : i32
    %265 = arith.subi %c7_i32_72, %c6_i32 : i32
    %266 = vector.broadcast %c6_i32 : i32 to vector<1x64xi32>
    %267 = vector.broadcast %265 : i32 to vector<1x64xi32>
    %268 = arith.select %264, %266, %267 : vector<1x64xi1>, vector<1x64xi32>
    %269 = vector.broadcast %0 : i32 to vector<1x64xi32>
    %270 = arith.cmpi slt, %268, %269 : vector<1x64xi32>
    %271 = arith.select %270, %262, %234 : vector<1x64xi1>, vector<1x64xf32>
    %272 = arith.select %270, %260, %235 : vector<1x64xi1>, vector<1x64xf32>
    %273 = arith.index_cast %c6_i32 : i32 to index
    %c0_73 = arith.constant 0 : index
    %274 = vector.load %arg11[%273, %c0_73] : memref<8x64xf32, #tpu.memory_space<vmem>>, vector<1x64xf32>
    tpu.vector_store %arg11[%273, %c0_73], %271 {strides = array<i32>} : memref<8x64xf32, #tpu.memory_space<vmem>>, vector<1x64xf32>,
    %c7_i32_74 = arith.constant 7 : i32
    %275 = arith.index_cast %c7_i32_74 : i32 to index
    %c0_75 = arith.constant 0 : index
    %276 = vector.load %arg9[%275, %c0_75] : memref<8x256xf32, #tpu.memory_space<vmem>>, vector<1x256xf32>
    %c7_i32_76 = arith.constant 7 : i32
    %277 = arith.subi %c7_i32_76, %c7_i32_74 : i32
    %278 = arith.index_cast %277 : i32 to index
    %c0_77 = arith.constant 0 : index
    %279 = vector.load %arg10[%278, %c0_77] : memref<8x256xf32, #tpu.memory_space<vmem>>, vector<1x256xf32>
    %280 = arith.addf %276, %279 : vector<1x256xf32>
    %cst_78 = arith.constant dense<0.000000e+00> : vector<1x256xf32>
    %281 = tpu.matmul %271, %12, %cst_78 {dimension_numbers = #tpu.dot_dimension_numbers<[1], [0], [0], [1], [0, 0, 1, 1], [], []>} : vector<1x64xf32>, vector<64x256xf32>, vector<1x256xf32> -> vector<1x256xf32>
    %282 = arith.addf %280, %281 : vector<1x256xf32>
    %283 = arith.addf %282, %14 : vector<1x256xf32>
    %284 = vector.extract_strided_slice %283 {offsets = [0, 0], sizes = [1, 192], strides = [1, 1]} : vector<1x256xf32> to vector<1x192xf32>
    %285 = arith.negf %284 : vector<1x192xf32>
    %286 = math.exp %285 : vector<1x192xf32>
    %cst_79 = arith.constant 1.000000e+00 : f32
    %287 = vector.broadcast %cst_79 : f32 to vector<1x192xf32>
    %288 = arith.addf %287, %286 : vector<1x192xf32>
    %289 = arith.divf %287, %288 : vector<1x192xf32>
    %290 = vector.extract_strided_slice %283 {offsets = [0, 192], sizes = [1, 64], strides = [1, 1]} : vector<1x256xf32> to vector<1x64xf32>
    %291 = math.tanh %290 : vector<1x64xf32>
    %292 = vector.extract_strided_slice %289 {offsets = [0, 0], sizes = [1, 64], strides = [1, 1]} : vector<1x192xf32> to vector<1x64xf32>
    %293 = vector.extract_strided_slice %289 {offsets = [0, 64], sizes = [1, 64], strides = [1, 1]} : vector<1x192xf32> to vector<1x64xf32>
    %294 = vector.extract_strided_slice %289 {offsets = [0, 128], sizes = [1, 64], strides = [1, 1]} : vector<1x192xf32> to vector<1x64xf32>
    %295 = arith.mulf %293, %272 : vector<1x64xf32>
    %296 = arith.mulf %292, %291 : vector<1x64xf32>
    %297 = arith.addf %295, %296 : vector<1x64xf32>
    %298 = math.tanh %297 : vector<1x64xf32>
    %299 = arith.mulf %294, %298 : vector<1x64xf32>
    %c32_i32_80 = arith.constant 32 : i32
    %300 = vector.broadcast %c32_i32_80 : i32 to vector<1x64xi32>
    %301 = arith.cmpi slt, %1, %300 : vector<1x64xi32>
    %c7_i32_81 = arith.constant 7 : i32
    %302 = arith.subi %c7_i32_81, %c7_i32_74 : i32
    %303 = vector.broadcast %c7_i32_74 : i32 to vector<1x64xi32>
    %304 = vector.broadcast %302 : i32 to vector<1x64xi32>
    %305 = arith.select %301, %303, %304 : vector<1x64xi1>, vector<1x64xi32>
    %306 = vector.broadcast %0 : i32 to vector<1x64xi32>
    %307 = arith.cmpi slt, %305, %306 : vector<1x64xi32>
    %308 = arith.select %307, %299, %271 : vector<1x64xi1>, vector<1x64xf32>
    %309 = arith.select %307, %297, %272 : vector<1x64xi1>, vector<1x64xf32>
    %310 = arith.index_cast %c7_i32_74 : i32 to index
    %c0_82 = arith.constant 0 : index
    %311 = vector.load %arg11[%310, %c0_82] : memref<8x64xf32, #tpu.memory_space<vmem>>, vector<1x64xf32>
    tpu.vector_store %arg11[%310, %c0_82], %308 {strides = array<i32>} : memref<8x64xf32, #tpu.memory_space<vmem>>, vector<1x64xf32>,
    %c8_i32 = arith.constant 8 : i32
    %c0_83 = arith.constant 0 : index
    %c0_84 = arith.constant 0 : index
    %312 = vector.load %arg11[%c0_83, %c0_84] : memref<8x64xf32, #tpu.memory_space<vmem>>, vector<8x64xf32>
    %c1 = arith.constant 1 : index
    %c0_85 = arith.constant 0 : index
    %c0_86 = arith.constant 0 : index
    %313 = vector.load %arg2[%c1, %c0_85, %c0_86] : memref<4x64x256xf32, #tpu.memory_space<vmem>>, vector<1x64x256xf32>
    %314 = vector.shape_cast %313 : vector<1x64x256xf32> to vector<64x256xf32>
    %cst_87 = arith.constant dense<0.000000e+00> : vector<8x256xf32>
    %315 = tpu.matmul %312, %314, %cst_87 {dimension_numbers = #tpu.dot_dimension_numbers<[1], [0], [0], [1], [0, 0, 1, 1], [], []>} : vector<8x64xf32>, vector<64x256xf32>, vector<8x256xf32> -> vector<8x256xf32>
    %c0_88 = arith.constant 0 : index
    %c0_89 = arith.constant 0 : index
    %316 = vector.load %arg9[%c0_88, %c0_89] : memref<8x256xf32, #tpu.memory_space<vmem>>, vector<8x256xf32>
    tpu.vector_store %arg9[%c0_88, %c0_89], %315 {strides = array<i32>} : memref<8x256xf32, #tpu.memory_space<vmem>>, vector<8x256xf32>,
    %c1_90 = arith.constant 1 : index
    %c0_91 = arith.constant 0 : index
    %c0_92 = arith.constant 0 : index
    %317 = vector.load %arg3[%c1_90, %c0_91, %c0_92] : memref<4x64x256xf32, #tpu.memory_space<vmem>>, vector<1x64x256xf32>
    %318 = vector.shape_cast %317 : vector<1x64x256xf32> to vector<64x256xf32>
    %cst_93 = arith.constant dense<0.000000e+00> : vector<8x256xf32>
    %319 = tpu.matmul %312, %318, %cst_93 {dimension_numbers = #tpu.dot_dimension_numbers<[1], [0], [0], [1], [0, 0, 1, 1], [], []>} : vector<8x64xf32>, vector<64x256xf32>, vector<8x256xf32> -> vector<8x256xf32>
    %c0_94 = arith.constant 0 : index
    %c0_95 = arith.constant 0 : index
    %320 = vector.load %arg10[%c0_94, %c0_95] : memref<8x256xf32, #tpu.memory_space<vmem>>, vector<8x256xf32>
    tpu.vector_store %arg10[%c0_94, %c0_95], %319 {strides = array<i32>} : memref<8x256xf32, #tpu.memory_space<vmem>>, vector<8x256xf32>,
    %c1_96 = arith.constant 1 : index
    %c0_97 = arith.constant 0 : index
    %c0_98 = arith.constant 0 : index
    %321 = vector.load %arg4[%c1_96, %c0_97, %c0_98] : memref<4x64x256xf32, #tpu.memory_space<vmem>>, vector<1x64x256xf32>
    %322 = vector.shape_cast %321 : vector<1x64x256xf32> to vector<64x256xf32>
    %c1_99 = arith.constant 1 : index
    %c0_100 = arith.constant 0 : index
    %c0_101 = arith.constant 0 : index
    %323 = vector.load %arg5[%c1_99, %c0_100, %c0_101] : memref<4x1x256xf32, #tpu.memory_space<vmem>>, vector<1x1x256xf32>
    %324 = vector.shape_cast %323 : vector<1x1x256xf32> to vector<1x256xf32>
    %cst_102 = arith.constant 0.000000e+00 : f32
    %325 = vector.broadcast %cst_102 : f32 to vector<1x64xf32>
    %c0_i32_103 = arith.constant 0 : i32
    %326 = arith.index_cast %c0_i32_103 : i32 to index
    %c0_104 = arith.constant 0 : index
    %327 = vector.load %arg9[%326, %c0_104] : memref<8x256xf32, #tpu.memory_space<vmem>>, vector<1x256xf32>
    %c7_i32_105 = arith.constant 7 : i32
    %328 = arith.subi %c7_i32_105, %c0_i32_103 : i32
    %329 = arith.index_cast %328 : i32 to index
    %c0_106 = arith.constant 0 : index
    %330 = vector.load %arg10[%329, %c0_106] : memref<8x256xf32, #tpu.memory_space<vmem>>, vector<1x256xf32>
    %331 = arith.addf %327, %330 : vector<1x256xf32>
    %cst_107 = arith.constant dense<0.000000e+00> : vector<1x256xf32>
    %332 = tpu.matmul %325, %322, %cst_107 {dimension_numbers = #tpu.dot_dimension_numbers<[1], [0], [0], [1], [0, 0, 1, 1], [], []>} : vector<1x64xf32>, vector<64x256xf32>, vector<1x256xf32> -> vector<1x256xf32>
    %333 = arith.addf %331, %332 : vector<1x256xf32>
    %334 = arith.addf %333, %324 : vector<1x256xf32>
    %335 = vector.extract_strided_slice %334 {offsets = [0, 0], sizes = [1, 192], strides = [1, 1]} : vector<1x256xf32> to vector<1x192xf32>
    %336 = arith.negf %335 : vector<1x192xf32>
    %337 = math.exp %336 : vector<1x192xf32>
    %cst_108 = arith.constant 1.000000e+00 : f32
    %338 = vector.broadcast %cst_108 : f32 to vector<1x192xf32>
    %339 = arith.addf %338, %337 : vector<1x192xf32>
    %340 = arith.divf %338, %339 : vector<1x192xf32>
    %341 = vector.extract_strided_slice %334 {offsets = [0, 192], sizes = [1, 64], strides = [1, 1]} : vector<1x256xf32> to vector<1x64xf32>
    %342 = math.tanh %341 : vector<1x64xf32>
    %343 = vector.extract_strided_slice %340 {offsets = [0, 0], sizes = [1, 64], strides = [1, 1]} : vector<1x192xf32> to vector<1x64xf32>
    %344 = vector.extract_strided_slice %340 {offsets = [0, 64], sizes = [1, 64], strides = [1, 1]} : vector<1x192xf32> to vector<1x64xf32>
    %345 = vector.extract_strided_slice %340 {offsets = [0, 128], sizes = [1, 64], strides = [1, 1]} : vector<1x192xf32> to vector<1x64xf32>
    %346 = arith.mulf %344, %325 : vector<1x64xf32>
    %347 = arith.mulf %343, %342 : vector<1x64xf32>
    %348 = arith.addf %346, %347 : vector<1x64xf32>
    %349 = math.tanh %348 : vector<1x64xf32>
    %350 = arith.mulf %345, %349 : vector<1x64xf32>
    %c32_i32_109 = arith.constant 32 : i32
    %351 = vector.broadcast %c32_i32_109 : i32 to vector<1x64xi32>
    %352 = arith.cmpi slt, %1, %351 : vector<1x64xi32>
    %c7_i32_110 = arith.constant 7 : i32
    %353 = arith.subi %c7_i32_110, %c0_i32_103 : i32
    %354 = vector.broadcast %c0_i32_103 : i32 to vector<1x64xi32>
    %355 = vector.broadcast %353 : i32 to vector<1x64xi32>
    %356 = arith.select %352, %354, %355 : vector<1x64xi1>, vector<1x64xi32>
    %357 = vector.broadcast %0 : i32 to vector<1x64xi32>
    %358 = arith.cmpi slt, %356, %357 : vector<1x64xi32>
    %359 = arith.select %358, %350, %325 : vector<1x64xi1>, vector<1x64xf32>
    %360 = arith.select %358, %348, %325 : vector<1x64xi1>, vector<1x64xf32>
    %361 = arith.index_cast %c0_i32_103 : i32 to index
    %c0_111 = arith.constant 0 : index
    %362 = vector.load %arg12[%361, %c0_111] : memref<8x64xf32, #tpu.memory_space<vmem>>, vector<1x64xf32>
    tpu.vector_store %arg12[%361, %c0_111], %359 {strides = array<i32>} : memref<8x64xf32, #tpu.memory_space<vmem>>, vector<1x64xf32>,
    %c1_i32_112 = arith.constant 1 : i32
    %363 = arith.index_cast %c1_i32_112 : i32 to index
    %c0_113 = arith.constant 0 : index
    %364 = vector.load %arg9[%363, %c0_113] : memref<8x256xf32, #tpu.memory_space<vmem>>, vector<1x256xf32>
    %c7_i32_114 = arith.constant 7 : i32
    %365 = arith.subi %c7_i32_114, %c1_i32_112 : i32
    %366 = arith.index_cast %365 : i32 to index
    %c0_115 = arith.constant 0 : index
    %367 = vector.load %arg10[%366, %c0_115] : memref<8x256xf32, #tpu.memory_space<vmem>>, vector<1x256xf32>
    %368 = arith.addf %364, %367 : vector<1x256xf32>
    %cst_116 = arith.constant dense<0.000000e+00> : vector<1x256xf32>
    %369 = tpu.matmul %359, %322, %cst_116 {dimension_numbers = #tpu.dot_dimension_numbers<[1], [0], [0], [1], [0, 0, 1, 1], [], []>} : vector<1x64xf32>, vector<64x256xf32>, vector<1x256xf32> -> vector<1x256xf32>
    %370 = arith.addf %368, %369 : vector<1x256xf32>
    %371 = arith.addf %370, %324 : vector<1x256xf32>
    %372 = vector.extract_strided_slice %371 {offsets = [0, 0], sizes = [1, 192], strides = [1, 1]} : vector<1x256xf32> to vector<1x192xf32>
    %373 = arith.negf %372 : vector<1x192xf32>
    %374 = math.exp %373 : vector<1x192xf32>
    %cst_117 = arith.constant 1.000000e+00 : f32
    %375 = vector.broadcast %cst_117 : f32 to vector<1x192xf32>
    %376 = arith.addf %375, %374 : vector<1x192xf32>
    %377 = arith.divf %375, %376 : vector<1x192xf32>
    %378 = vector.extract_strided_slice %371 {offsets = [0, 192], sizes = [1, 64], strides = [1, 1]} : vector<1x256xf32> to vector<1x64xf32>
    %379 = math.tanh %378 : vector<1x64xf32>
    %380 = vector.extract_strided_slice %377 {offsets = [0, 0], sizes = [1, 64], strides = [1, 1]} : vector<1x192xf32> to vector<1x64xf32>
    %381 = vector.extract_strided_slice %377 {offsets = [0, 64], sizes = [1, 64], strides = [1, 1]} : vector<1x192xf32> to vector<1x64xf32>
    %382 = vector.extract_strided_slice %377 {offsets = [0, 128], sizes = [1, 64], strides = [1, 1]} : vector<1x192xf32> to vector<1x64xf32>
    %383 = arith.mulf %381, %360 : vector<1x64xf32>
    %384 = arith.mulf %380, %379 : vector<1x64xf32>
    %385 = arith.addf %383, %384 : vector<1x64xf32>
    %386 = math.tanh %385 : vector<1x64xf32>
    %387 = arith.mulf %382, %386 : vector<1x64xf32>
    %c32_i32_118 = arith.constant 32 : i32
    %388 = vector.broadcast %c32_i32_118 : i32 to vector<1x64xi32>
    %389 = arith.cmpi slt, %1, %388 : vector<1x64xi32>
    %c7_i32_119 = arith.constant 7 : i32
    %390 = arith.subi %c7_i32_119, %c1_i32_112 : i32
    %391 = vector.broadcast %c1_i32_112 : i32 to vector<1x64xi32>
    %392 = vector.broadcast %390 : i32 to vector<1x64xi32>
    %393 = arith.select %389, %391, %392 : vector<1x64xi1>, vector<1x64xi32>
    %394 = vector.broadcast %0 : i32 to vector<1x64xi32>
    %395 = arith.cmpi slt, %393, %394 : vector<1x64xi32>
    %396 = arith.select %395, %387, %359 : vector<1x64xi1>, vector<1x64xf32>
    %397 = arith.select %395, %385, %360 : vector<1x64xi1>, vector<1x64xf32>
    %398 = arith.index_cast %c1_i32_112 : i32 to index
    %c0_120 = arith.constant 0 : index
    %399 = vector.load %arg12[%398, %c0_120] : memref<8x64xf32, #tpu.memory_space<vmem>>, vector<1x64xf32>
    tpu.vector_store %arg12[%398, %c0_120], %396 {strides = array<i32>} : memref<8x64xf32, #tpu.memory_space<vmem>>, vector<1x64xf32>,
    %c2_i32_121 = arith.constant 2 : i32
    %400 = arith.index_cast %c2_i32_121 : i32 to index
    %c0_122 = arith.constant 0 : index
    %401 = vector.load %arg9[%400, %c0_122] : memref<8x256xf32, #tpu.memory_space<vmem>>, vector<1x256xf32>
    %c7_i32_123 = arith.constant 7 : i32
    %402 = arith.subi %c7_i32_123, %c2_i32_121 : i32
    %403 = arith.index_cast %402 : i32 to index
    %c0_124 = arith.constant 0 : index
    %404 = vector.load %arg10[%403, %c0_124] : memref<8x256xf32, #tpu.memory_space<vmem>>, vector<1x256xf32>
    %405 = arith.addf %401, %404 : vector<1x256xf32>
    %cst_125 = arith.constant dense<0.000000e+00> : vector<1x256xf32>
    %406 = tpu.matmul %396, %322, %cst_125 {dimension_numbers = #tpu.dot_dimension_numbers<[1], [0], [0], [1], [0, 0, 1, 1], [], []>} : vector<1x64xf32>, vector<64x256xf32>, vector<1x256xf32> -> vector<1x256xf32>
    %407 = arith.addf %405, %406 : vector<1x256xf32>
    %408 = arith.addf %407, %324 : vector<1x256xf32>
    %409 = vector.extract_strided_slice %408 {offsets = [0, 0], sizes = [1, 192], strides = [1, 1]} : vector<1x256xf32> to vector<1x192xf32>
    %410 = arith.negf %409 : vector<1x192xf32>
    %411 = math.exp %410 : vector<1x192xf32>
    %cst_126 = arith.constant 1.000000e+00 : f32
    %412 = vector.broadcast %cst_126 : f32 to vector<1x192xf32>
    %413 = arith.addf %412, %411 : vector<1x192xf32>
    %414 = arith.divf %412, %413 : vector<1x192xf32>
    %415 = vector.extract_strided_slice %408 {offsets = [0, 192], sizes = [1, 64], strides = [1, 1]} : vector<1x256xf32> to vector<1x64xf32>
    %416 = math.tanh %415 : vector<1x64xf32>
    %417 = vector.extract_strided_slice %414 {offsets = [0, 0], sizes = [1, 64], strides = [1, 1]} : vector<1x192xf32> to vector<1x64xf32>
    %418 = vector.extract_strided_slice %414 {offsets = [0, 64], sizes = [1, 64], strides = [1, 1]} : vector<1x192xf32> to vector<1x64xf32>
    %419 = vector.extract_strided_slice %414 {offsets = [0, 128], sizes = [1, 64], strides = [1, 1]} : vector<1x192xf32> to vector<1x64xf32>
    %420 = arith.mulf %418, %397 : vector<1x64xf32>
    %421 = arith.mulf %417, %416 : vector<1x64xf32>
    %422 = arith.addf %420, %421 : vector<1x64xf32>
    %423 = math.tanh %422 : vector<1x64xf32>
    %424 = arith.mulf %419, %423 : vector<1x64xf32>
    %c32_i32_127 = arith.constant 32 : i32
    %425 = vector.broadcast %c32_i32_127 : i32 to vector<1x64xi32>
    %426 = arith.cmpi slt, %1, %425 : vector<1x64xi32>
    %c7_i32_128 = arith.constant 7 : i32
    %427 = arith.subi %c7_i32_128, %c2_i32_121 : i32
    %428 = vector.broadcast %c2_i32_121 : i32 to vector<1x64xi32>
    %429 = vector.broadcast %427 : i32 to vector<1x64xi32>
    %430 = arith.select %426, %428, %429 : vector<1x64xi1>, vector<1x64xi32>
    %431 = vector.broadcast %0 : i32 to vector<1x64xi32>
    %432 = arith.cmpi slt, %430, %431 : vector<1x64xi32>
    %433 = arith.select %432, %424, %396 : vector<1x64xi1>, vector<1x64xf32>
    %434 = arith.select %432, %422, %397 : vector<1x64xi1>, vector<1x64xf32>
    %435 = arith.index_cast %c2_i32_121 : i32 to index
    %c0_129 = arith.constant 0 : index
    %436 = vector.load %arg12[%435, %c0_129] : memref<8x64xf32, #tpu.memory_space<vmem>>, vector<1x64xf32>
    tpu.vector_store %arg12[%435, %c0_129], %433 {strides = array<i32>} : memref<8x64xf32, #tpu.memory_space<vmem>>, vector<1x64xf32>,
    %c3_i32_130 = arith.constant 3 : i32
    %437 = arith.index_cast %c3_i32_130 : i32 to index
    %c0_131 = arith.constant 0 : index
    %438 = vector.load %arg9[%437, %c0_131] : memref<8x256xf32, #tpu.memory_space<vmem>>, vector<1x256xf32>
    %c7_i32_132 = arith.constant 7 : i32
    %439 = arith.subi %c7_i32_132, %c3_i32_130 : i32
    %440 = arith.index_cast %439 : i32 to index
    %c0_133 = arith.constant 0 : index
    %441 = vector.load %arg10[%440, %c0_133] : memref<8x256xf32, #tpu.memory_space<vmem>>, vector<1x256xf32>
    %442 = arith.addf %438, %441 : vector<1x256xf32>
    %cst_134 = arith.constant dense<0.000000e+00> : vector<1x256xf32>
    %443 = tpu.matmul %433, %322, %cst_134 {dimension_numbers = #tpu.dot_dimension_numbers<[1], [0], [0], [1], [0, 0, 1, 1], [], []>} : vector<1x64xf32>, vector<64x256xf32>, vector<1x256xf32> -> vector<1x256xf32>
    %444 = arith.addf %442, %443 : vector<1x256xf32>
    %445 = arith.addf %444, %324 : vector<1x256xf32>
    %446 = vector.extract_strided_slice %445 {offsets = [0, 0], sizes = [1, 192], strides = [1, 1]} : vector<1x256xf32> to vector<1x192xf32>
    %447 = arith.negf %446 : vector<1x192xf32>
    %448 = math.exp %447 : vector<1x192xf32>
    %cst_135 = arith.constant 1.000000e+00 : f32
    %449 = vector.broadcast %cst_135 : f32 to vector<1x192xf32>
    %450 = arith.addf %449, %448 : vector<1x192xf32>
    %451 = arith.divf %449, %450 : vector<1x192xf32>
    %452 = vector.extract_strided_slice %445 {offsets = [0, 192], sizes = [1, 64], strides = [1, 1]} : vector<1x256xf32> to vector<1x64xf32>
    %453 = math.tanh %452 : vector<1x64xf32>
    %454 = vector.extract_strided_slice %451 {offsets = [0, 0], sizes = [1, 64], strides = [1, 1]} : vector<1x192xf32> to vector<1x64xf32>
    %455 = vector.extract_strided_slice %451 {offsets = [0, 64], sizes = [1, 64], strides = [1, 1]} : vector<1x192xf32> to vector<1x64xf32>
    %456 = vector.extract_strided_slice %451 {offsets = [0, 128], sizes = [1, 64], strides = [1, 1]} : vector<1x192xf32> to vector<1x64xf32>
    %457 = arith.mulf %455, %434 : vector<1x64xf32>
    %458 = arith.mulf %454, %453 : vector<1x64xf32>
    %459 = arith.addf %457, %458 : vector<1x64xf32>
    %460 = math.tanh %459 : vector<1x64xf32>
    %461 = arith.mulf %456, %460 : vector<1x64xf32>
    %c32_i32_136 = arith.constant 32 : i32
    %462 = vector.broadcast %c32_i32_136 : i32 to vector<1x64xi32>
    %463 = arith.cmpi slt, %1, %462 : vector<1x64xi32>
    %c7_i32_137 = arith.constant 7 : i32
    %464 = arith.subi %c7_i32_137, %c3_i32_130 : i32
    %465 = vector.broadcast %c3_i32_130 : i32 to vector<1x64xi32>
    %466 = vector.broadcast %464 : i32 to vector<1x64xi32>
    %467 = arith.select %463, %465, %466 : vector<1x64xi1>, vector<1x64xi32>
    %468 = vector.broadcast %0 : i32 to vector<1x64xi32>
    %469 = arith.cmpi slt, %467, %468 : vector<1x64xi32>
    %470 = arith.select %469, %461, %433 : vector<1x64xi1>, vector<1x64xf32>
    %471 = arith.select %469, %459, %434 : vector<1x64xi1>, vector<1x64xf32>
    %472 = arith.index_cast %c3_i32_130 : i32 to index
    %c0_138 = arith.constant 0 : index
    %473 = vector.load %arg12[%472, %c0_138] : memref<8x64xf32, #tpu.memory_space<vmem>>, vector<1x64xf32>
    tpu.vector_store %arg12[%472, %c0_138], %470 {strides = array<i32>} : memref<8x64xf32, #tpu.memory_space<vmem>>, vector<1x64xf32>,
    %c4_i32_139 = arith.constant 4 : i32
    %474 = arith.index_cast %c4_i32_139 : i32 to index
    %c0_140 = arith.constant 0 : index
    %475 = vector.load %arg9[%474, %c0_140] : memref<8x256xf32, #tpu.memory_space<vmem>>, vector<1x256xf32>
    %c7_i32_141 = arith.constant 7 : i32
    %476 = arith.subi %c7_i32_141, %c4_i32_139 : i32
    %477 = arith.index_cast %476 : i32 to index
    %c0_142 = arith.constant 0 : index
    %478 = vector.load %arg10[%477, %c0_142] : memref<8x256xf32, #tpu.memory_space<vmem>>, vector<1x256xf32>
    %479 = arith.addf %475, %478 : vector<1x256xf32>
    %cst_143 = arith.constant dense<0.000000e+00> : vector<1x256xf32>
    %480 = tpu.matmul %470, %322, %cst_143 {dimension_numbers = #tpu.dot_dimension_numbers<[1], [0], [0], [1], [0, 0, 1, 1], [], []>} : vector<1x64xf32>, vector<64x256xf32>, vector<1x256xf32> -> vector<1x256xf32>
    %481 = arith.addf %479, %480 : vector<1x256xf32>
    %482 = arith.addf %481, %324 : vector<1x256xf32>
    %483 = vector.extract_strided_slice %482 {offsets = [0, 0], sizes = [1, 192], strides = [1, 1]} : vector<1x256xf32> to vector<1x192xf32>
    %484 = arith.negf %483 : vector<1x192xf32>
    %485 = math.exp %484 : vector<1x192xf32>
    %cst_144 = arith.constant 1.000000e+00 : f32
    %486 = vector.broadcast %cst_144 : f32 to vector<1x192xf32>
    %487 = arith.addf %486, %485 : vector<1x192xf32>
    %488 = arith.divf %486, %487 : vector<1x192xf32>
    %489 = vector.extract_strided_slice %482 {offsets = [0, 192], sizes = [1, 64], strides = [1, 1]} : vector<1x256xf32> to vector<1x64xf32>
    %490 = math.tanh %489 : vector<1x64xf32>
    %491 = vector.extract_strided_slice %488 {offsets = [0, 0], sizes = [1, 64], strides = [1, 1]} : vector<1x192xf32> to vector<1x64xf32>
    %492 = vector.extract_strided_slice %488 {offsets = [0, 64], sizes = [1, 64], strides = [1, 1]} : vector<1x192xf32> to vector<1x64xf32>
    %493 = vector.extract_strided_slice %488 {offsets = [0, 128], sizes = [1, 64], strides = [1, 1]} : vector<1x192xf32> to vector<1x64xf32>
    %494 = arith.mulf %492, %471 : vector<1x64xf32>
    %495 = arith.mulf %491, %490 : vector<1x64xf32>
    %496 = arith.addf %494, %495 : vector<1x64xf32>
    %497 = math.tanh %496 : vector<1x64xf32>
    %498 = arith.mulf %493, %497 : vector<1x64xf32>
    %c32_i32_145 = arith.constant 32 : i32
    %499 = vector.broadcast %c32_i32_145 : i32 to vector<1x64xi32>
    %500 = arith.cmpi slt, %1, %499 : vector<1x64xi32>
    %c7_i32_146 = arith.constant 7 : i32
    %501 = arith.subi %c7_i32_146, %c4_i32_139 : i32
    %502 = vector.broadcast %c4_i32_139 : i32 to vector<1x64xi32>
    %503 = vector.broadcast %501 : i32 to vector<1x64xi32>
    %504 = arith.select %500, %502, %503 : vector<1x64xi1>, vector<1x64xi32>
    %505 = vector.broadcast %0 : i32 to vector<1x64xi32>
    %506 = arith.cmpi slt, %504, %505 : vector<1x64xi32>
    %507 = arith.select %506, %498, %470 : vector<1x64xi1>, vector<1x64xf32>
    %508 = arith.select %506, %496, %471 : vector<1x64xi1>, vector<1x64xf32>
    %509 = arith.index_cast %c4_i32_139 : i32 to index
    %c0_147 = arith.constant 0 : index
    %510 = vector.load %arg12[%509, %c0_147] : memref<8x64xf32, #tpu.memory_space<vmem>>, vector<1x64xf32>
    tpu.vector_store %arg12[%509, %c0_147], %507 {strides = array<i32>} : memref<8x64xf32, #tpu.memory_space<vmem>>, vector<1x64xf32>,
    %c5_i32_148 = arith.constant 5 : i32
    %511 = arith.index_cast %c5_i32_148 : i32 to index
    %c0_149 = arith.constant 0 : index
    %512 = vector.load %arg9[%511, %c0_149] : memref<8x256xf32, #tpu.memory_space<vmem>>, vector<1x256xf32>
    %c7_i32_150 = arith.constant 7 : i32
    %513 = arith.subi %c7_i32_150, %c5_i32_148 : i32
    %514 = arith.index_cast %513 : i32 to index
    %c0_151 = arith.constant 0 : index
    %515 = vector.load %arg10[%514, %c0_151] : memref<8x256xf32, #tpu.memory_space<vmem>>, vector<1x256xf32>
    %516 = arith.addf %512, %515 : vector<1x256xf32>
    %cst_152 = arith.constant dense<0.000000e+00> : vector<1x256xf32>
    %517 = tpu.matmul %507, %322, %cst_152 {dimension_numbers = #tpu.dot_dimension_numbers<[1], [0], [0], [1], [0, 0, 1, 1], [], []>} : vector<1x64xf32>, vector<64x256xf32>, vector<1x256xf32> -> vector<1x256xf32>
    %518 = arith.addf %516, %517 : vector<1x256xf32>
    %519 = arith.addf %518, %324 : vector<1x256xf32>
    %520 = vector.extract_strided_slice %519 {offsets = [0, 0], sizes = [1, 192], strides = [1, 1]} : vector<1x256xf32> to vector<1x192xf32>
    %521 = arith.negf %520 : vector<1x192xf32>
    %522 = math.exp %521 : vector<1x192xf32>
    %cst_153 = arith.constant 1.000000e+00 : f32
    %523 = vector.broadcast %cst_153 : f32 to vector<1x192xf32>
    %524 = arith.addf %523, %522 : vector<1x192xf32>
    %525 = arith.divf %523, %524 : vector<1x192xf32>
    %526 = vector.extract_strided_slice %519 {offsets = [0, 192], sizes = [1, 64], strides = [1, 1]} : vector<1x256xf32> to vector<1x64xf32>
    %527 = math.tanh %526 : vector<1x64xf32>
    %528 = vector.extract_strided_slice %525 {offsets = [0, 0], sizes = [1, 64], strides = [1, 1]} : vector<1x192xf32> to vector<1x64xf32>
    %529 = vector.extract_strided_slice %525 {offsets = [0, 64], sizes = [1, 64], strides = [1, 1]} : vector<1x192xf32> to vector<1x64xf32>
    %530 = vector.extract_strided_slice %525 {offsets = [0, 128], sizes = [1, 64], strides = [1, 1]} : vector<1x192xf32> to vector<1x64xf32>
    %531 = arith.mulf %529, %508 : vector<1x64xf32>
    %532 = arith.mulf %528, %527 : vector<1x64xf32>
    %533 = arith.addf %531, %532 : vector<1x64xf32>
    %534 = math.tanh %533 : vector<1x64xf32>
    %535 = arith.mulf %530, %534 : vector<1x64xf32>
    %c32_i32_154 = arith.constant 32 : i32
    %536 = vector.broadcast %c32_i32_154 : i32 to vector<1x64xi32>
    %537 = arith.cmpi slt, %1, %536 : vector<1x64xi32>
    %c7_i32_155 = arith.constant 7 : i32
    %538 = arith.subi %c7_i32_155, %c5_i32_148 : i32
    %539 = vector.broadcast %c5_i32_148 : i32 to vector<1x64xi32>
    %540 = vector.broadcast %538 : i32 to vector<1x64xi32>
    %541 = arith.select %537, %539, %540 : vector<1x64xi1>, vector<1x64xi32>
    %542 = vector.broadcast %0 : i32 to vector<1x64xi32>
    %543 = arith.cmpi slt, %541, %542 : vector<1x64xi32>
    %544 = arith.select %543, %535, %507 : vector<1x64xi1>, vector<1x64xf32>
    %545 = arith.select %543, %533, %508 : vector<1x64xi1>, vector<1x64xf32>
    %546 = arith.index_cast %c5_i32_148 : i32 to index
    %c0_156 = arith.constant 0 : index
    %547 = vector.load %arg12[%546, %c0_156] : memref<8x64xf32, #tpu.memory_space<vmem>>, vector<1x64xf32>
    tpu.vector_store %arg12[%546, %c0_156], %544 {strides = array<i32>} : memref<8x64xf32, #tpu.memory_space<vmem>>, vector<1x64xf32>,
    %c6_i32_157 = arith.constant 6 : i32
    %548 = arith.index_cast %c6_i32_157 : i32 to index
    %c0_158 = arith.constant 0 : index
    %549 = vector.load %arg9[%548, %c0_158] : memref<8x256xf32, #tpu.memory_space<vmem>>, vector<1x256xf32>
    %c7_i32_159 = arith.constant 7 : i32
    %550 = arith.subi %c7_i32_159, %c6_i32_157 : i32
    %551 = arith.index_cast %550 : i32 to index
    %c0_160 = arith.constant 0 : index
    %552 = vector.load %arg10[%551, %c0_160] : memref<8x256xf32, #tpu.memory_space<vmem>>, vector<1x256xf32>
    %553 = arith.addf %549, %552 : vector<1x256xf32>
    %cst_161 = arith.constant dense<0.000000e+00> : vector<1x256xf32>
    %554 = tpu.matmul %544, %322, %cst_161 {dimension_numbers = #tpu.dot_dimension_numbers<[1], [0], [0], [1], [0, 0, 1, 1], [], []>} : vector<1x64xf32>, vector<64x256xf32>, vector<1x256xf32> -> vector<1x256xf32>
    %555 = arith.addf %553, %554 : vector<1x256xf32>
    %556 = arith.addf %555, %324 : vector<1x256xf32>
    %557 = vector.extract_strided_slice %556 {offsets = [0, 0], sizes = [1, 192], strides = [1, 1]} : vector<1x256xf32> to vector<1x192xf32>
    %558 = arith.negf %557 : vector<1x192xf32>
    %559 = math.exp %558 : vector<1x192xf32>
    %cst_162 = arith.constant 1.000000e+00 : f32
    %560 = vector.broadcast %cst_162 : f32 to vector<1x192xf32>
    %561 = arith.addf %560, %559 : vector<1x192xf32>
    %562 = arith.divf %560, %561 : vector<1x192xf32>
    %563 = vector.extract_strided_slice %556 {offsets = [0, 192], sizes = [1, 64], strides = [1, 1]} : vector<1x256xf32> to vector<1x64xf32>
    %564 = math.tanh %563 : vector<1x64xf32>
    %565 = vector.extract_strided_slice %562 {offsets = [0, 0], sizes = [1, 64], strides = [1, 1]} : vector<1x192xf32> to vector<1x64xf32>
    %566 = vector.extract_strided_slice %562 {offsets = [0, 64], sizes = [1, 64], strides = [1, 1]} : vector<1x192xf32> to vector<1x64xf32>
    %567 = vector.extract_strided_slice %562 {offsets = [0, 128], sizes = [1, 64], strides = [1, 1]} : vector<1x192xf32> to vector<1x64xf32>
    %568 = arith.mulf %566, %545 : vector<1x64xf32>
    %569 = arith.mulf %565, %564 : vector<1x64xf32>
    %570 = arith.addf %568, %569 : vector<1x64xf32>
    %571 = math.tanh %570 : vector<1x64xf32>
    %572 = arith.mulf %567, %571 : vector<1x64xf32>
    %c32_i32_163 = arith.constant 32 : i32
    %573 = vector.broadcast %c32_i32_163 : i32 to vector<1x64xi32>
    %574 = arith.cmpi slt, %1, %573 : vector<1x64xi32>
    %c7_i32_164 = arith.constant 7 : i32
    %575 = arith.subi %c7_i32_164, %c6_i32_157 : i32
    %576 = vector.broadcast %c6_i32_157 : i32 to vector<1x64xi32>
    %577 = vector.broadcast %575 : i32 to vector<1x64xi32>
    %578 = arith.select %574, %576, %577 : vector<1x64xi1>, vector<1x64xi32>
    %579 = vector.broadcast %0 : i32 to vector<1x64xi32>
    %580 = arith.cmpi slt, %578, %579 : vector<1x64xi32>
    %581 = arith.select %580, %572, %544 : vector<1x64xi1>, vector<1x64xf32>
    %582 = arith.select %580, %570, %545 : vector<1x64xi1>, vector<1x64xf32>
    %583 = arith.index_cast %c6_i32_157 : i32 to index
    %c0_165 = arith.constant 0 : index
    %584 = vector.load %arg12[%583, %c0_165] : memref<8x64xf32, #tpu.memory_space<vmem>>, vector<1x64xf32>
    tpu.vector_store %arg12[%583, %c0_165], %581 {strides = array<i32>} : memref<8x64xf32, #tpu.memory_space<vmem>>, vector<1x64xf32>,
    %c7_i32_166 = arith.constant 7 : i32
    %585 = arith.index_cast %c7_i32_166 : i32 to index
    %c0_167 = arith.constant 0 : index
    %586 = vector.load %arg9[%585, %c0_167] : memref<8x256xf32, #tpu.memory_space<vmem>>, vector<1x256xf32>
    %c7_i32_168 = arith.constant 7 : i32
    %587 = arith.subi %c7_i32_168, %c7_i32_166 : i32
    %588 = arith.index_cast %587 : i32 to index
    %c0_169 = arith.constant 0 : index
    %589 = vector.load %arg10[%588, %c0_169] : memref<8x256xf32, #tpu.memory_space<vmem>>, vector<1x256xf32>
    %590 = arith.addf %586, %589 : vector<1x256xf32>
    %cst_170 = arith.constant dense<0.000000e+00> : vector<1x256xf32>
    %591 = tpu.matmul %581, %322, %cst_170 {dimension_numbers = #tpu.dot_dimension_numbers<[1], [0], [0], [1], [0, 0, 1, 1], [], []>} : vector<1x64xf32>, vector<64x256xf32>, vector<1x256xf32> -> vector<1x256xf32>
    %592 = arith.addf %590, %591 : vector<1x256xf32>
    %593 = arith.addf %592, %324 : vector<1x256xf32>
    %594 = vector.extract_strided_slice %593 {offsets = [0, 0], sizes = [1, 192], strides = [1, 1]} : vector<1x256xf32> to vector<1x192xf32>
    %595 = arith.negf %594 : vector<1x192xf32>
    %596 = math.exp %595 : vector<1x192xf32>
    %cst_171 = arith.constant 1.000000e+00 : f32
    %597 = vector.broadcast %cst_171 : f32 to vector<1x192xf32>
    %598 = arith.addf %597, %596 : vector<1x192xf32>
    %599 = arith.divf %597, %598 : vector<1x192xf32>
    %600 = vector.extract_strided_slice %593 {offsets = [0, 192], sizes = [1, 64], strides = [1, 1]} : vector<1x256xf32> to vector<1x64xf32>
    %601 = math.tanh %600 : vector<1x64xf32>
    %602 = vector.extract_strided_slice %599 {offsets = [0, 0], sizes = [1, 64], strides = [1, 1]} : vector<1x192xf32> to vector<1x64xf32>
    %603 = vector.extract_strided_slice %599 {offsets = [0, 64], sizes = [1, 64], strides = [1, 1]} : vector<1x192xf32> to vector<1x64xf32>
    %604 = vector.extract_strided_slice %599 {offsets = [0, 128], sizes = [1, 64], strides = [1, 1]} : vector<1x192xf32> to vector<1x64xf32>
    %605 = arith.mulf %603, %582 : vector<1x64xf32>
    %606 = arith.mulf %602, %601 : vector<1x64xf32>
    %607 = arith.addf %605, %606 : vector<1x64xf32>
    %608 = math.tanh %607 : vector<1x64xf32>
    %609 = arith.mulf %604, %608 : vector<1x64xf32>
    %c32_i32_172 = arith.constant 32 : i32
    %610 = vector.broadcast %c32_i32_172 : i32 to vector<1x64xi32>
    %611 = arith.cmpi slt, %1, %610 : vector<1x64xi32>
    %c7_i32_173 = arith.constant 7 : i32
    %612 = arith.subi %c7_i32_173, %c7_i32_166 : i32
    %613 = vector.broadcast %c7_i32_166 : i32 to vector<1x64xi32>
    %614 = vector.broadcast %612 : i32 to vector<1x64xi32>
    %615 = arith.select %611, %613, %614 : vector<1x64xi1>, vector<1x64xi32>
    %616 = vector.broadcast %0 : i32 to vector<1x64xi32>
    %617 = arith.cmpi slt, %615, %616 : vector<1x64xi32>
    %618 = arith.select %617, %609, %581 : vector<1x64xi1>, vector<1x64xf32>
    %619 = arith.select %617, %607, %582 : vector<1x64xi1>, vector<1x64xf32>
    %620 = arith.index_cast %c7_i32_166 : i32 to index
    %c0_174 = arith.constant 0 : index
    %621 = vector.load %arg12[%620, %c0_174] : memref<8x64xf32, #tpu.memory_space<vmem>>, vector<1x64xf32>
    tpu.vector_store %arg12[%620, %c0_174], %618 {strides = array<i32>} : memref<8x64xf32, #tpu.memory_space<vmem>>, vector<1x64xf32>,
    %c8_i32_175 = arith.constant 8 : i32
    %c0_176 = arith.constant 0 : index
    %c0_177 = arith.constant 0 : index
    %622 = vector.load %arg12[%c0_176, %c0_177] : memref<8x64xf32, #tpu.memory_space<vmem>>, vector<8x64xf32>
    %c2 = arith.constant 2 : index
    %c0_178 = arith.constant 0 : index
    %c0_179 = arith.constant 0 : index
    %623 = vector.load %arg2[%c2, %c0_178, %c0_179] : memref<4x64x256xf32, #tpu.memory_space<vmem>>, vector<1x64x256xf32>
    %624 = vector.shape_cast %623 : vector<1x64x256xf32> to vector<64x256xf32>
    %cst_180 = arith.constant dense<0.000000e+00> : vector<8x256xf32>
    %625 = tpu.matmul %622, %624, %cst_180 {dimension_numbers = #tpu.dot_dimension_numbers<[1], [0], [0], [1], [0, 0, 1, 1], [], []>} : vector<8x64xf32>, vector<64x256xf32>, vector<8x256xf32> -> vector<8x256xf32>
    %c0_181 = arith.constant 0 : index
    %c0_182 = arith.constant 0 : index
    %626 = vector.load %arg9[%c0_181, %c0_182] : memref<8x256xf32, #tpu.memory_space<vmem>>, vector<8x256xf32>
    tpu.vector_store %arg9[%c0_181, %c0_182], %625 {strides = array<i32>} : memref<8x256xf32, #tpu.memory_space<vmem>>, vector<8x256xf32>,
    %c2_183 = arith.constant 2 : index
    %c0_184 = arith.constant 0 : index
    %c0_185 = arith.constant 0 : index
    %627 = vector.load %arg3[%c2_183, %c0_184, %c0_185] : memref<4x64x256xf32, #tpu.memory_space<vmem>>, vector<1x64x256xf32>
    %628 = vector.shape_cast %627 : vector<1x64x256xf32> to vector<64x256xf32>
    %cst_186 = arith.constant dense<0.000000e+00> : vector<8x256xf32>
    %629 = tpu.matmul %622, %628, %cst_186 {dimension_numbers = #tpu.dot_dimension_numbers<[1], [0], [0], [1], [0, 0, 1, 1], [], []>} : vector<8x64xf32>, vector<64x256xf32>, vector<8x256xf32> -> vector<8x256xf32>
    %c0_187 = arith.constant 0 : index
    %c0_188 = arith.constant 0 : index
    %630 = vector.load %arg10[%c0_187, %c0_188] : memref<8x256xf32, #tpu.memory_space<vmem>>, vector<8x256xf32>
    tpu.vector_store %arg10[%c0_187, %c0_188], %629 {strides = array<i32>} : memref<8x256xf32, #tpu.memory_space<vmem>>, vector<8x256xf32>,
    %c2_189 = arith.constant 2 : index
    %c0_190 = arith.constant 0 : index
    %c0_191 = arith.constant 0 : index
    %631 = vector.load %arg4[%c2_189, %c0_190, %c0_191] : memref<4x64x256xf32, #tpu.memory_space<vmem>>, vector<1x64x256xf32>
    %632 = vector.shape_cast %631 : vector<1x64x256xf32> to vector<64x256xf32>
    %c2_192 = arith.constant 2 : index
    %c0_193 = arith.constant 0 : index
    %c0_194 = arith.constant 0 : index
    %633 = vector.load %arg5[%c2_192, %c0_193, %c0_194] : memref<4x1x256xf32, #tpu.memory_space<vmem>>, vector<1x1x256xf32>
    %634 = vector.shape_cast %633 : vector<1x1x256xf32> to vector<1x256xf32>
    %cst_195 = arith.constant 0.000000e+00 : f32
    %635 = vector.broadcast %cst_195 : f32 to vector<1x64xf32>
    %c0_i32_196 = arith.constant 0 : i32
    %636 = arith.index_cast %c0_i32_196 : i32 to index
    %c0_197 = arith.constant 0 : index
    %637 = vector.load %arg9[%636, %c0_197] : memref<8x256xf32, #tpu.memory_space<vmem>>, vector<1x256xf32>
    %c7_i32_198 = arith.constant 7 : i32
    %638 = arith.subi %c7_i32_198, %c0_i32_196 : i32
    %639 = arith.index_cast %638 : i32 to index
    %c0_199 = arith.constant 0 : index
    %640 = vector.load %arg10[%639, %c0_199] : memref<8x256xf32, #tpu.memory_space<vmem>>, vector<1x256xf32>
    %641 = arith.addf %637, %640 : vector<1x256xf32>
    %cst_200 = arith.constant dense<0.000000e+00> : vector<1x256xf32>
    %642 = tpu.matmul %635, %632, %cst_200 {dimension_numbers = #tpu.dot_dimension_numbers<[1], [0], [0], [1], [0, 0, 1, 1], [], []>} : vector<1x64xf32>, vector<64x256xf32>, vector<1x256xf32> -> vector<1x256xf32>
    %643 = arith.addf %641, %642 : vector<1x256xf32>
    %644 = arith.addf %643, %634 : vector<1x256xf32>
    %645 = vector.extract_strided_slice %644 {offsets = [0, 0], sizes = [1, 192], strides = [1, 1]} : vector<1x256xf32> to vector<1x192xf32>
    %646 = arith.negf %645 : vector<1x192xf32>
    %647 = math.exp %646 : vector<1x192xf32>
    %cst_201 = arith.constant 1.000000e+00 : f32
    %648 = vector.broadcast %cst_201 : f32 to vector<1x192xf32>
    %649 = arith.addf %648, %647 : vector<1x192xf32>
    %650 = arith.divf %648, %649 : vector<1x192xf32>
    %651 = vector.extract_strided_slice %644 {offsets = [0, 192], sizes = [1, 64], strides = [1, 1]} : vector<1x256xf32> to vector<1x64xf32>
    %652 = math.tanh %651 : vector<1x64xf32>
    %653 = vector.extract_strided_slice %650 {offsets = [0, 0], sizes = [1, 64], strides = [1, 1]} : vector<1x192xf32> to vector<1x64xf32>
    %654 = vector.extract_strided_slice %650 {offsets = [0, 64], sizes = [1, 64], strides = [1, 1]} : vector<1x192xf32> to vector<1x64xf32>
    %655 = vector.extract_strided_slice %650 {offsets = [0, 128], sizes = [1, 64], strides = [1, 1]} : vector<1x192xf32> to vector<1x64xf32>
    %656 = arith.mulf %654, %635 : vector<1x64xf32>
    %657 = arith.mulf %653, %652 : vector<1x64xf32>
    %658 = arith.addf %656, %657 : vector<1x64xf32>
    %659 = math.tanh %658 : vector<1x64xf32>
    %660 = arith.mulf %655, %659 : vector<1x64xf32>
    %c32_i32_202 = arith.constant 32 : i32
    %661 = vector.broadcast %c32_i32_202 : i32 to vector<1x64xi32>
    %662 = arith.cmpi slt, %1, %661 : vector<1x64xi32>
    %c7_i32_203 = arith.constant 7 : i32
    %663 = arith.subi %c7_i32_203, %c0_i32_196 : i32
    %664 = vector.broadcast %c0_i32_196 : i32 to vector<1x64xi32>
    %665 = vector.broadcast %663 : i32 to vector<1x64xi32>
    %666 = arith.select %662, %664, %665 : vector<1x64xi1>, vector<1x64xi32>
    %667 = vector.broadcast %0 : i32 to vector<1x64xi32>
    %668 = arith.cmpi slt, %666, %667 : vector<1x64xi32>
    %669 = arith.select %668, %660, %635 : vector<1x64xi1>, vector<1x64xf32>
    %670 = arith.select %668, %658, %635 : vector<1x64xi1>, vector<1x64xf32>
    %671 = arith.index_cast %c0_i32_196 : i32 to index
    %c0_204 = arith.constant 0 : index
    %672 = vector.load %arg11[%671, %c0_204] : memref<8x64xf32, #tpu.memory_space<vmem>>, vector<1x64xf32>
    tpu.vector_store %arg11[%671, %c0_204], %669 {strides = array<i32>} : memref<8x64xf32, #tpu.memory_space<vmem>>, vector<1x64xf32>,
    %c1_i32_205 = arith.constant 1 : i32
    %673 = arith.index_cast %c1_i32_205 : i32 to index
    %c0_206 = arith.constant 0 : index
    %674 = vector.load %arg9[%673, %c0_206] : memref<8x256xf32, #tpu.memory_space<vmem>>, vector<1x256xf32>
    %c7_i32_207 = arith.constant 7 : i32
    %675 = arith.subi %c7_i32_207, %c1_i32_205 : i32
    %676 = arith.index_cast %675 : i32 to index
    %c0_208 = arith.constant 0 : index
    %677 = vector.load %arg10[%676, %c0_208] : memref<8x256xf32, #tpu.memory_space<vmem>>, vector<1x256xf32>
    %678 = arith.addf %674, %677 : vector<1x256xf32>
    %cst_209 = arith.constant dense<0.000000e+00> : vector<1x256xf32>
    %679 = tpu.matmul %669, %632, %cst_209 {dimension_numbers = #tpu.dot_dimension_numbers<[1], [0], [0], [1], [0, 0, 1, 1], [], []>} : vector<1x64xf32>, vector<64x256xf32>, vector<1x256xf32> -> vector<1x256xf32>
    %680 = arith.addf %678, %679 : vector<1x256xf32>
    %681 = arith.addf %680, %634 : vector<1x256xf32>
    %682 = vector.extract_strided_slice %681 {offsets = [0, 0], sizes = [1, 192], strides = [1, 1]} : vector<1x256xf32> to vector<1x192xf32>
    %683 = arith.negf %682 : vector<1x192xf32>
    %684 = math.exp %683 : vector<1x192xf32>
    %cst_210 = arith.constant 1.000000e+00 : f32
    %685 = vector.broadcast %cst_210 : f32 to vector<1x192xf32>
    %686 = arith.addf %685, %684 : vector<1x192xf32>
    %687 = arith.divf %685, %686 : vector<1x192xf32>
    %688 = vector.extract_strided_slice %681 {offsets = [0, 192], sizes = [1, 64], strides = [1, 1]} : vector<1x256xf32> to vector<1x64xf32>
    %689 = math.tanh %688 : vector<1x64xf32>
    %690 = vector.extract_strided_slice %687 {offsets = [0, 0], sizes = [1, 64], strides = [1, 1]} : vector<1x192xf32> to vector<1x64xf32>
    %691 = vector.extract_strided_slice %687 {offsets = [0, 64], sizes = [1, 64], strides = [1, 1]} : vector<1x192xf32> to vector<1x64xf32>
    %692 = vector.extract_strided_slice %687 {offsets = [0, 128], sizes = [1, 64], strides = [1, 1]} : vector<1x192xf32> to vector<1x64xf32>
    %693 = arith.mulf %691, %670 : vector<1x64xf32>
    %694 = arith.mulf %690, %689 : vector<1x64xf32>
    %695 = arith.addf %693, %694 : vector<1x64xf32>
    %696 = math.tanh %695 : vector<1x64xf32>
    %697 = arith.mulf %692, %696 : vector<1x64xf32>
    %c32_i32_211 = arith.constant 32 : i32
    %698 = vector.broadcast %c32_i32_211 : i32 to vector<1x64xi32>
    %699 = arith.cmpi slt, %1, %698 : vector<1x64xi32>
    %c7_i32_212 = arith.constant 7 : i32
    %700 = arith.subi %c7_i32_212, %c1_i32_205 : i32
    %701 = vector.broadcast %c1_i32_205 : i32 to vector<1x64xi32>
    %702 = vector.broadcast %700 : i32 to vector<1x64xi32>
    %703 = arith.select %699, %701, %702 : vector<1x64xi1>, vector<1x64xi32>
    %704 = vector.broadcast %0 : i32 to vector<1x64xi32>
    %705 = arith.cmpi slt, %703, %704 : vector<1x64xi32>
    %706 = arith.select %705, %697, %669 : vector<1x64xi1>, vector<1x64xf32>
    %707 = arith.select %705, %695, %670 : vector<1x64xi1>, vector<1x64xf32>
    %708 = arith.index_cast %c1_i32_205 : i32 to index
    %c0_213 = arith.constant 0 : index
    %709 = vector.load %arg11[%708, %c0_213] : memref<8x64xf32, #tpu.memory_space<vmem>>, vector<1x64xf32>
    tpu.vector_store %arg11[%708, %c0_213], %706 {strides = array<i32>} : memref<8x64xf32, #tpu.memory_space<vmem>>, vector<1x64xf32>,
    %c2_i32_214 = arith.constant 2 : i32
    %710 = arith.index_cast %c2_i32_214 : i32 to index
    %c0_215 = arith.constant 0 : index
    %711 = vector.load %arg9[%710, %c0_215] : memref<8x256xf32, #tpu.memory_space<vmem>>, vector<1x256xf32>
    %c7_i32_216 = arith.constant 7 : i32
    %712 = arith.subi %c7_i32_216, %c2_i32_214 : i32
    %713 = arith.index_cast %712 : i32 to index
    %c0_217 = arith.constant 0 : index
    %714 = vector.load %arg10[%713, %c0_217] : memref<8x256xf32, #tpu.memory_space<vmem>>, vector<1x256xf32>
    %715 = arith.addf %711, %714 : vector<1x256xf32>
    %cst_218 = arith.constant dense<0.000000e+00> : vector<1x256xf32>
    %716 = tpu.matmul %706, %632, %cst_218 {dimension_numbers = #tpu.dot_dimension_numbers<[1], [0], [0], [1], [0, 0, 1, 1], [], []>} : vector<1x64xf32>, vector<64x256xf32>, vector<1x256xf32> -> vector<1x256xf32>
    %717 = arith.addf %715, %716 : vector<1x256xf32>
    %718 = arith.addf %717, %634 : vector<1x256xf32>
    %719 = vector.extract_strided_slice %718 {offsets = [0, 0], sizes = [1, 192], strides = [1, 1]} : vector<1x256xf32> to vector<1x192xf32>
    %720 = arith.negf %719 : vector<1x192xf32>
    %721 = math.exp %720 : vector<1x192xf32>
    %cst_219 = arith.constant 1.000000e+00 : f32
    %722 = vector.broadcast %cst_219 : f32 to vector<1x192xf32>
    %723 = arith.addf %722, %721 : vector<1x192xf32>
    %724 = arith.divf %722, %723 : vector<1x192xf32>
    %725 = vector.extract_strided_slice %718 {offsets = [0, 192], sizes = [1, 64], strides = [1, 1]} : vector<1x256xf32> to vector<1x64xf32>
    %726 = math.tanh %725 : vector<1x64xf32>
    %727 = vector.extract_strided_slice %724 {offsets = [0, 0], sizes = [1, 64], strides = [1, 1]} : vector<1x192xf32> to vector<1x64xf32>
    %728 = vector.extract_strided_slice %724 {offsets = [0, 64], sizes = [1, 64], strides = [1, 1]} : vector<1x192xf32> to vector<1x64xf32>
    %729 = vector.extract_strided_slice %724 {offsets = [0, 128], sizes = [1, 64], strides = [1, 1]} : vector<1x192xf32> to vector<1x64xf32>
    %730 = arith.mulf %728, %707 : vector<1x64xf32>
    %731 = arith.mulf %727, %726 : vector<1x64xf32>
    %732 = arith.addf %730, %731 : vector<1x64xf32>
    %733 = math.tanh %732 : vector<1x64xf32>
    %734 = arith.mulf %729, %733 : vector<1x64xf32>
    %c32_i32_220 = arith.constant 32 : i32
    %735 = vector.broadcast %c32_i32_220 : i32 to vector<1x64xi32>
    %736 = arith.cmpi slt, %1, %735 : vector<1x64xi32>
    %c7_i32_221 = arith.constant 7 : i32
    %737 = arith.subi %c7_i32_221, %c2_i32_214 : i32
    %738 = vector.broadcast %c2_i32_214 : i32 to vector<1x64xi32>
    %739 = vector.broadcast %737 : i32 to vector<1x64xi32>
    %740 = arith.select %736, %738, %739 : vector<1x64xi1>, vector<1x64xi32>
    %741 = vector.broadcast %0 : i32 to vector<1x64xi32>
    %742 = arith.cmpi slt, %740, %741 : vector<1x64xi32>
    %743 = arith.select %742, %734, %706 : vector<1x64xi1>, vector<1x64xf32>
    %744 = arith.select %742, %732, %707 : vector<1x64xi1>, vector<1x64xf32>
    %745 = arith.index_cast %c2_i32_214 : i32 to index
    %c0_222 = arith.constant 0 : index
    %746 = vector.load %arg11[%745, %c0_222] : memref<8x64xf32, #tpu.memory_space<vmem>>, vector<1x64xf32>
    tpu.vector_store %arg11[%745, %c0_222], %743 {strides = array<i32>} : memref<8x64xf32, #tpu.memory_space<vmem>>, vector<1x64xf32>,
    %c3_i32_223 = arith.constant 3 : i32
    %747 = arith.index_cast %c3_i32_223 : i32 to index
    %c0_224 = arith.constant 0 : index
    %748 = vector.load %arg9[%747, %c0_224] : memref<8x256xf32, #tpu.memory_space<vmem>>, vector<1x256xf32>
    %c7_i32_225 = arith.constant 7 : i32
    %749 = arith.subi %c7_i32_225, %c3_i32_223 : i32
    %750 = arith.index_cast %749 : i32 to index
    %c0_226 = arith.constant 0 : index
    %751 = vector.load %arg10[%750, %c0_226] : memref<8x256xf32, #tpu.memory_space<vmem>>, vector<1x256xf32>
    %752 = arith.addf %748, %751 : vector<1x256xf32>
    %cst_227 = arith.constant dense<0.000000e+00> : vector<1x256xf32>
    %753 = tpu.matmul %743, %632, %cst_227 {dimension_numbers = #tpu.dot_dimension_numbers<[1], [0], [0], [1], [0, 0, 1, 1], [], []>} : vector<1x64xf32>, vector<64x256xf32>, vector<1x256xf32> -> vector<1x256xf32>
    %754 = arith.addf %752, %753 : vector<1x256xf32>
    %755 = arith.addf %754, %634 : vector<1x256xf32>
    %756 = vector.extract_strided_slice %755 {offsets = [0, 0], sizes = [1, 192], strides = [1, 1]} : vector<1x256xf32> to vector<1x192xf32>
    %757 = arith.negf %756 : vector<1x192xf32>
    %758 = math.exp %757 : vector<1x192xf32>
    %cst_228 = arith.constant 1.000000e+00 : f32
    %759 = vector.broadcast %cst_228 : f32 to vector<1x192xf32>
    %760 = arith.addf %759, %758 : vector<1x192xf32>
    %761 = arith.divf %759, %760 : vector<1x192xf32>
    %762 = vector.extract_strided_slice %755 {offsets = [0, 192], sizes = [1, 64], strides = [1, 1]} : vector<1x256xf32> to vector<1x64xf32>
    %763 = math.tanh %762 : vector<1x64xf32>
    %764 = vector.extract_strided_slice %761 {offsets = [0, 0], sizes = [1, 64], strides = [1, 1]} : vector<1x192xf32> to vector<1x64xf32>
    %765 = vector.extract_strided_slice %761 {offsets = [0, 64], sizes = [1, 64], strides = [1, 1]} : vector<1x192xf32> to vector<1x64xf32>
    %766 = vector.extract_strided_slice %761 {offsets = [0, 128], sizes = [1, 64], strides = [1, 1]} : vector<1x192xf32> to vector<1x64xf32>
    %767 = arith.mulf %765, %744 : vector<1x64xf32>
    %768 = arith.mulf %764, %763 : vector<1x64xf32>
    %769 = arith.addf %767, %768 : vector<1x64xf32>
    %770 = math.tanh %769 : vector<1x64xf32>
    %771 = arith.mulf %766, %770 : vector<1x64xf32>
    %c32_i32_229 = arith.constant 32 : i32
    %772 = vector.broadcast %c32_i32_229 : i32 to vector<1x64xi32>
    %773 = arith.cmpi slt, %1, %772 : vector<1x64xi32>
    %c7_i32_230 = arith.constant 7 : i32
    %774 = arith.subi %c7_i32_230, %c3_i32_223 : i32
    %775 = vector.broadcast %c3_i32_223 : i32 to vector<1x64xi32>
    %776 = vector.broadcast %774 : i32 to vector<1x64xi32>
    %777 = arith.select %773, %775, %776 : vector<1x64xi1>, vector<1x64xi32>
    %778 = vector.broadcast %0 : i32 to vector<1x64xi32>
    %779 = arith.cmpi slt, %777, %778 : vector<1x64xi32>
    %780 = arith.select %779, %771, %743 : vector<1x64xi1>, vector<1x64xf32>
    %781 = arith.select %779, %769, %744 : vector<1x64xi1>, vector<1x64xf32>
    %782 = arith.index_cast %c3_i32_223 : i32 to index
    %c0_231 = arith.constant 0 : index
    %783 = vector.load %arg11[%782, %c0_231] : memref<8x64xf32, #tpu.memory_space<vmem>>, vector<1x64xf32>
    tpu.vector_store %arg11[%782, %c0_231], %780 {strides = array<i32>} : memref<8x64xf32, #tpu.memory_space<vmem>>, vector<1x64xf32>,
    %c4_i32_232 = arith.constant 4 : i32
    %784 = arith.index_cast %c4_i32_232 : i32 to index
    %c0_233 = arith.constant 0 : index
    %785 = vector.load %arg9[%784, %c0_233] : memref<8x256xf32, #tpu.memory_space<vmem>>, vector<1x256xf32>
    %c7_i32_234 = arith.constant 7 : i32
    %786 = arith.subi %c7_i32_234, %c4_i32_232 : i32
    %787 = arith.index_cast %786 : i32 to index
    %c0_235 = arith.constant 0 : index
    %788 = vector.load %arg10[%787, %c0_235] : memref<8x256xf32, #tpu.memory_space<vmem>>, vector<1x256xf32>
    %789 = arith.addf %785, %788 : vector<1x256xf32>
    %cst_236 = arith.constant dense<0.000000e+00> : vector<1x256xf32>
    %790 = tpu.matmul %780, %632, %cst_236 {dimension_numbers = #tpu.dot_dimension_numbers<[1], [0], [0], [1], [0, 0, 1, 1], [], []>} : vector<1x64xf32>, vector<64x256xf32>, vector<1x256xf32> -> vector<1x256xf32>
    %791 = arith.addf %789, %790 : vector<1x256xf32>
    %792 = arith.addf %791, %634 : vector<1x256xf32>
    %793 = vector.extract_strided_slice %792 {offsets = [0, 0], sizes = [1, 192], strides = [1, 1]} : vector<1x256xf32> to vector<1x192xf32>
    %794 = arith.negf %793 : vector<1x192xf32>
    %795 = math.exp %794 : vector<1x192xf32>
    %cst_237 = arith.constant 1.000000e+00 : f32
    %796 = vector.broadcast %cst_237 : f32 to vector<1x192xf32>
    %797 = arith.addf %796, %795 : vector<1x192xf32>
    %798 = arith.divf %796, %797 : vector<1x192xf32>
    %799 = vector.extract_strided_slice %792 {offsets = [0, 192], sizes = [1, 64], strides = [1, 1]} : vector<1x256xf32> to vector<1x64xf32>
    %800 = math.tanh %799 : vector<1x64xf32>
    %801 = vector.extract_strided_slice %798 {offsets = [0, 0], sizes = [1, 64], strides = [1, 1]} : vector<1x192xf32> to vector<1x64xf32>
    %802 = vector.extract_strided_slice %798 {offsets = [0, 64], sizes = [1, 64], strides = [1, 1]} : vector<1x192xf32> to vector<1x64xf32>
    %803 = vector.extract_strided_slice %798 {offsets = [0, 128], sizes = [1, 64], strides = [1, 1]} : vector<1x192xf32> to vector<1x64xf32>
    %804 = arith.mulf %802, %781 : vector<1x64xf32>
    %805 = arith.mulf %801, %800 : vector<1x64xf32>
    %806 = arith.addf %804, %805 : vector<1x64xf32>
    %807 = math.tanh %806 : vector<1x64xf32>
    %808 = arith.mulf %803, %807 : vector<1x64xf32>
    %c32_i32_238 = arith.constant 32 : i32
    %809 = vector.broadcast %c32_i32_238 : i32 to vector<1x64xi32>
    %810 = arith.cmpi slt, %1, %809 : vector<1x64xi32>
    %c7_i32_239 = arith.constant 7 : i32
    %811 = arith.subi %c7_i32_239, %c4_i32_232 : i32
    %812 = vector.broadcast %c4_i32_232 : i32 to vector<1x64xi32>
    %813 = vector.broadcast %811 : i32 to vector<1x64xi32>
    %814 = arith.select %810, %812, %813 : vector<1x64xi1>, vector<1x64xi32>
    %815 = vector.broadcast %0 : i32 to vector<1x64xi32>
    %816 = arith.cmpi slt, %814, %815 : vector<1x64xi32>
    %817 = arith.select %816, %808, %780 : vector<1x64xi1>, vector<1x64xf32>
    %818 = arith.select %816, %806, %781 : vector<1x64xi1>, vector<1x64xf32>
    %819 = arith.index_cast %c4_i32_232 : i32 to index
    %c0_240 = arith.constant 0 : index
    %820 = vector.load %arg11[%819, %c0_240] : memref<8x64xf32, #tpu.memory_space<vmem>>, vector<1x64xf32>
    tpu.vector_store %arg11[%819, %c0_240], %817 {strides = array<i32>} : memref<8x64xf32, #tpu.memory_space<vmem>>, vector<1x64xf32>,
    %c5_i32_241 = arith.constant 5 : i32
    %821 = arith.index_cast %c5_i32_241 : i32 to index
    %c0_242 = arith.constant 0 : index
    %822 = vector.load %arg9[%821, %c0_242] : memref<8x256xf32, #tpu.memory_space<vmem>>, vector<1x256xf32>
    %c7_i32_243 = arith.constant 7 : i32
    %823 = arith.subi %c7_i32_243, %c5_i32_241 : i32
    %824 = arith.index_cast %823 : i32 to index
    %c0_244 = arith.constant 0 : index
    %825 = vector.load %arg10[%824, %c0_244] : memref<8x256xf32, #tpu.memory_space<vmem>>, vector<1x256xf32>
    %826 = arith.addf %822, %825 : vector<1x256xf32>
    %cst_245 = arith.constant dense<0.000000e+00> : vector<1x256xf32>
    %827 = tpu.matmul %817, %632, %cst_245 {dimension_numbers = #tpu.dot_dimension_numbers<[1], [0], [0], [1], [0, 0, 1, 1], [], []>} : vector<1x64xf32>, vector<64x256xf32>, vector<1x256xf32> -> vector<1x256xf32>
    %828 = arith.addf %826, %827 : vector<1x256xf32>
    %829 = arith.addf %828, %634 : vector<1x256xf32>
    %830 = vector.extract_strided_slice %829 {offsets = [0, 0], sizes = [1, 192], strides = [1, 1]} : vector<1x256xf32> to vector<1x192xf32>
    %831 = arith.negf %830 : vector<1x192xf32>
    %832 = math.exp %831 : vector<1x192xf32>
    %cst_246 = arith.constant 1.000000e+00 : f32
    %833 = vector.broadcast %cst_246 : f32 to vector<1x192xf32>
    %834 = arith.addf %833, %832 : vector<1x192xf32>
    %835 = arith.divf %833, %834 : vector<1x192xf32>
    %836 = vector.extract_strided_slice %829 {offsets = [0, 192], sizes = [1, 64], strides = [1, 1]} : vector<1x256xf32> to vector<1x64xf32>
    %837 = math.tanh %836 : vector<1x64xf32>
    %838 = vector.extract_strided_slice %835 {offsets = [0, 0], sizes = [1, 64], strides = [1, 1]} : vector<1x192xf32> to vector<1x64xf32>
    %839 = vector.extract_strided_slice %835 {offsets = [0, 64], sizes = [1, 64], strides = [1, 1]} : vector<1x192xf32> to vector<1x64xf32>
    %840 = vector.extract_strided_slice %835 {offsets = [0, 128], sizes = [1, 64], strides = [1, 1]} : vector<1x192xf32> to vector<1x64xf32>
    %841 = arith.mulf %839, %818 : vector<1x64xf32>
    %842 = arith.mulf %838, %837 : vector<1x64xf32>
    %843 = arith.addf %841, %842 : vector<1x64xf32>
    %844 = math.tanh %843 : vector<1x64xf32>
    %845 = arith.mulf %840, %844 : vector<1x64xf32>
    %c32_i32_247 = arith.constant 32 : i32
    %846 = vector.broadcast %c32_i32_247 : i32 to vector<1x64xi32>
    %847 = arith.cmpi slt, %1, %846 : vector<1x64xi32>
    %c7_i32_248 = arith.constant 7 : i32
    %848 = arith.subi %c7_i32_248, %c5_i32_241 : i32
    %849 = vector.broadcast %c5_i32_241 : i32 to vector<1x64xi32>
    %850 = vector.broadcast %848 : i32 to vector<1x64xi32>
    %851 = arith.select %847, %849, %850 : vector<1x64xi1>, vector<1x64xi32>
    %852 = vector.broadcast %0 : i32 to vector<1x64xi32>
    %853 = arith.cmpi slt, %851, %852 : vector<1x64xi32>
    %854 = arith.select %853, %845, %817 : vector<1x64xi1>, vector<1x64xf32>
    %855 = arith.select %853, %843, %818 : vector<1x64xi1>, vector<1x64xf32>
    %856 = arith.index_cast %c5_i32_241 : i32 to index
    %c0_249 = arith.constant 0 : index
    %857 = vector.load %arg11[%856, %c0_249] : memref<8x64xf32, #tpu.memory_space<vmem>>, vector<1x64xf32>
    tpu.vector_store %arg11[%856, %c0_249], %854 {strides = array<i32>} : memref<8x64xf32, #tpu.memory_space<vmem>>, vector<1x64xf32>,
    %c6_i32_250 = arith.constant 6 : i32
    %858 = arith.index_cast %c6_i32_250 : i32 to index
    %c0_251 = arith.constant 0 : index
    %859 = vector.load %arg9[%858, %c0_251] : memref<8x256xf32, #tpu.memory_space<vmem>>, vector<1x256xf32>
    %c7_i32_252 = arith.constant 7 : i32
    %860 = arith.subi %c7_i32_252, %c6_i32_250 : i32
    %861 = arith.index_cast %860 : i32 to index
    %c0_253 = arith.constant 0 : index
    %862 = vector.load %arg10[%861, %c0_253] : memref<8x256xf32, #tpu.memory_space<vmem>>, vector<1x256xf32>
    %863 = arith.addf %859, %862 : vector<1x256xf32>
    %cst_254 = arith.constant dense<0.000000e+00> : vector<1x256xf32>
    %864 = tpu.matmul %854, %632, %cst_254 {dimension_numbers = #tpu.dot_dimension_numbers<[1], [0], [0], [1], [0, 0, 1, 1], [], []>} : vector<1x64xf32>, vector<64x256xf32>, vector<1x256xf32> -> vector<1x256xf32>
    %865 = arith.addf %863, %864 : vector<1x256xf32>
    %866 = arith.addf %865, %634 : vector<1x256xf32>
    %867 = vector.extract_strided_slice %866 {offsets = [0, 0], sizes = [1, 192], strides = [1, 1]} : vector<1x256xf32> to vector<1x192xf32>
    %868 = arith.negf %867 : vector<1x192xf32>
    %869 = math.exp %868 : vector<1x192xf32>
    %cst_255 = arith.constant 1.000000e+00 : f32
    %870 = vector.broadcast %cst_255 : f32 to vector<1x192xf32>
    %871 = arith.addf %870, %869 : vector<1x192xf32>
    %872 = arith.divf %870, %871 : vector<1x192xf32>
    %873 = vector.extract_strided_slice %866 {offsets = [0, 192], sizes = [1, 64], strides = [1, 1]} : vector<1x256xf32> to vector<1x64xf32>
    %874 = math.tanh %873 : vector<1x64xf32>
    %875 = vector.extract_strided_slice %872 {offsets = [0, 0], sizes = [1, 64], strides = [1, 1]} : vector<1x192xf32> to vector<1x64xf32>
    %876 = vector.extract_strided_slice %872 {offsets = [0, 64], sizes = [1, 64], strides = [1, 1]} : vector<1x192xf32> to vector<1x64xf32>
    %877 = vector.extract_strided_slice %872 {offsets = [0, 128], sizes = [1, 64], strides = [1, 1]} : vector<1x192xf32> to vector<1x64xf32>
    %878 = arith.mulf %876, %855 : vector<1x64xf32>
    %879 = arith.mulf %875, %874 : vector<1x64xf32>
    %880 = arith.addf %878, %879 : vector<1x64xf32>
    %881 = math.tanh %880 : vector<1x64xf32>
    %882 = arith.mulf %877, %881 : vector<1x64xf32>
    %c32_i32_256 = arith.constant 32 : i32
    %883 = vector.broadcast %c32_i32_256 : i32 to vector<1x64xi32>
    %884 = arith.cmpi slt, %1, %883 : vector<1x64xi32>
    %c7_i32_257 = arith.constant 7 : i32
    %885 = arith.subi %c7_i32_257, %c6_i32_250 : i32
    %886 = vector.broadcast %c6_i32_250 : i32 to vector<1x64xi32>
    %887 = vector.broadcast %885 : i32 to vector<1x64xi32>
    %888 = arith.select %884, %886, %887 : vector<1x64xi1>, vector<1x64xi32>
    %889 = vector.broadcast %0 : i32 to vector<1x64xi32>
    %890 = arith.cmpi slt, %888, %889 : vector<1x64xi32>
    %891 = arith.select %890, %882, %854 : vector<1x64xi1>, vector<1x64xf32>
    %892 = arith.select %890, %880, %855 : vector<1x64xi1>, vector<1x64xf32>
    %893 = arith.index_cast %c6_i32_250 : i32 to index
    %c0_258 = arith.constant 0 : index
    %894 = vector.load %arg11[%893, %c0_258] : memref<8x64xf32, #tpu.memory_space<vmem>>, vector<1x64xf32>
    tpu.vector_store %arg11[%893, %c0_258], %891 {strides = array<i32>} : memref<8x64xf32, #tpu.memory_space<vmem>>, vector<1x64xf32>,
    %c7_i32_259 = arith.constant 7 : i32
    %895 = arith.index_cast %c7_i32_259 : i32 to index
    %c0_260 = arith.constant 0 : index
    %896 = vector.load %arg9[%895, %c0_260] : memref<8x256xf32, #tpu.memory_space<vmem>>, vector<1x256xf32>
    %c7_i32_261 = arith.constant 7 : i32
    %897 = arith.subi %c7_i32_261, %c7_i32_259 : i32
    %898 = arith.index_cast %897 : i32 to index
    %c0_262 = arith.constant 0 : index
    %899 = vector.load %arg10[%898, %c0_262] : memref<8x256xf32, #tpu.memory_space<vmem>>, vector<1x256xf32>
    %900 = arith.addf %896, %899 : vector<1x256xf32>
    %cst_263 = arith.constant dense<0.000000e+00> : vector<1x256xf32>
    %901 = tpu.matmul %891, %632, %cst_263 {dimension_numbers = #tpu.dot_dimension_numbers<[1], [0], [0], [1], [0, 0, 1, 1], [], []>} : vector<1x64xf32>, vector<64x256xf32>, vector<1x256xf32> -> vector<1x256xf32>
    %902 = arith.addf %900, %901 : vector<1x256xf32>
    %903 = arith.addf %902, %634 : vector<1x256xf32>
    %904 = vector.extract_strided_slice %903 {offsets = [0, 0], sizes = [1, 192], strides = [1, 1]} : vector<1x256xf32> to vector<1x192xf32>
    %905 = arith.negf %904 : vector<1x192xf32>
    %906 = math.exp %905 : vector<1x192xf32>
    %cst_264 = arith.constant 1.000000e+00 : f32
    %907 = vector.broadcast %cst_264 : f32 to vector<1x192xf32>
    %908 = arith.addf %907, %906 : vector<1x192xf32>
    %909 = arith.divf %907, %908 : vector<1x192xf32>
    %910 = vector.extract_strided_slice %903 {offsets = [0, 192], sizes = [1, 64], strides = [1, 1]} : vector<1x256xf32> to vector<1x64xf32>
    %911 = math.tanh %910 : vector<1x64xf32>
    %912 = vector.extract_strided_slice %909 {offsets = [0, 0], sizes = [1, 64], strides = [1, 1]} : vector<1x192xf32> to vector<1x64xf32>
    %913 = vector.extract_strided_slice %909 {offsets = [0, 64], sizes = [1, 64], strides = [1, 1]} : vector<1x192xf32> to vector<1x64xf32>
    %914 = vector.extract_strided_slice %909 {offsets = [0, 128], sizes = [1, 64], strides = [1, 1]} : vector<1x192xf32> to vector<1x64xf32>
    %915 = arith.mulf %913, %892 : vector<1x64xf32>
    %916 = arith.mulf %912, %911 : vector<1x64xf32>
    %917 = arith.addf %915, %916 : vector<1x64xf32>
    %918 = math.tanh %917 : vector<1x64xf32>
    %919 = arith.mulf %914, %918 : vector<1x64xf32>
    %c32_i32_265 = arith.constant 32 : i32
    %920 = vector.broadcast %c32_i32_265 : i32 to vector<1x64xi32>
    %921 = arith.cmpi slt, %1, %920 : vector<1x64xi32>
    %c7_i32_266 = arith.constant 7 : i32
    %922 = arith.subi %c7_i32_266, %c7_i32_259 : i32
    %923 = vector.broadcast %c7_i32_259 : i32 to vector<1x64xi32>
    %924 = vector.broadcast %922 : i32 to vector<1x64xi32>
    %925 = arith.select %921, %923, %924 : vector<1x64xi1>, vector<1x64xi32>
    %926 = vector.broadcast %0 : i32 to vector<1x64xi32>
    %927 = arith.cmpi slt, %925, %926 : vector<1x64xi32>
    %928 = arith.select %927, %919, %891 : vector<1x64xi1>, vector<1x64xf32>
    %929 = arith.select %927, %917, %892 : vector<1x64xi1>, vector<1x64xf32>
    %930 = arith.index_cast %c7_i32_259 : i32 to index
    %c0_267 = arith.constant 0 : index
    %931 = vector.load %arg11[%930, %c0_267] : memref<8x64xf32, #tpu.memory_space<vmem>>, vector<1x64xf32>
    tpu.vector_store %arg11[%930, %c0_267], %928 {strides = array<i32>} : memref<8x64xf32, #tpu.memory_space<vmem>>, vector<1x64xf32>,
    %c8_i32_268 = arith.constant 8 : i32
    %c0_269 = arith.constant 0 : index
    %c0_270 = arith.constant 0 : index
    %932 = vector.load %arg11[%c0_269, %c0_270] : memref<8x64xf32, #tpu.memory_space<vmem>>, vector<8x64xf32>
    %c3 = arith.constant 3 : index
    %c0_271 = arith.constant 0 : index
    %c0_272 = arith.constant 0 : index
    %933 = vector.load %arg2[%c3, %c0_271, %c0_272] : memref<4x64x256xf32, #tpu.memory_space<vmem>>, vector<1x64x256xf32>
    %934 = vector.shape_cast %933 : vector<1x64x256xf32> to vector<64x256xf32>
    %cst_273 = arith.constant dense<0.000000e+00> : vector<8x256xf32>
    %935 = tpu.matmul %932, %934, %cst_273 {dimension_numbers = #tpu.dot_dimension_numbers<[1], [0], [0], [1], [0, 0, 1, 1], [], []>} : vector<8x64xf32>, vector<64x256xf32>, vector<8x256xf32> -> vector<8x256xf32>
    %c0_274 = arith.constant 0 : index
    %c0_275 = arith.constant 0 : index
    %936 = vector.load %arg9[%c0_274, %c0_275] : memref<8x256xf32, #tpu.memory_space<vmem>>, vector<8x256xf32>
    tpu.vector_store %arg9[%c0_274, %c0_275], %935 {strides = array<i32>} : memref<8x256xf32, #tpu.memory_space<vmem>>, vector<8x256xf32>,
    %c3_276 = arith.constant 3 : index
    %c0_277 = arith.constant 0 : index
    %c0_278 = arith.constant 0 : index
    %937 = vector.load %arg3[%c3_276, %c0_277, %c0_278] : memref<4x64x256xf32, #tpu.memory_space<vmem>>, vector<1x64x256xf32>
    %938 = vector.shape_cast %937 : vector<1x64x256xf32> to vector<64x256xf32>
    %cst_279 = arith.constant dense<0.000000e+00> : vector<8x256xf32>
    %939 = tpu.matmul %932, %938, %cst_279 {dimension_numbers = #tpu.dot_dimension_numbers<[1], [0], [0], [1], [0, 0, 1, 1], [], []>} : vector<8x64xf32>, vector<64x256xf32>, vector<8x256xf32> -> vector<8x256xf32>
    %c0_280 = arith.constant 0 : index
    %c0_281 = arith.constant 0 : index
    %940 = vector.load %arg10[%c0_280, %c0_281] : memref<8x256xf32, #tpu.memory_space<vmem>>, vector<8x256xf32>
    tpu.vector_store %arg10[%c0_280, %c0_281], %939 {strides = array<i32>} : memref<8x256xf32, #tpu.memory_space<vmem>>, vector<8x256xf32>,
    %c3_282 = arith.constant 3 : index
    %c0_283 = arith.constant 0 : index
    %c0_284 = arith.constant 0 : index
    %941 = vector.load %arg4[%c3_282, %c0_283, %c0_284] : memref<4x64x256xf32, #tpu.memory_space<vmem>>, vector<1x64x256xf32>
    %942 = vector.shape_cast %941 : vector<1x64x256xf32> to vector<64x256xf32>
    %c3_285 = arith.constant 3 : index
    %c0_286 = arith.constant 0 : index
    %c0_287 = arith.constant 0 : index
    %943 = vector.load %arg5[%c3_285, %c0_286, %c0_287] : memref<4x1x256xf32, #tpu.memory_space<vmem>>, vector<1x1x256xf32>
    %944 = vector.shape_cast %943 : vector<1x1x256xf32> to vector<1x256xf32>
    %cst_288 = arith.constant 0.000000e+00 : f32
    %945 = vector.broadcast %cst_288 : f32 to vector<1x64xf32>
    %c0_i32_289 = arith.constant 0 : i32
    %946 = arith.index_cast %c0_i32_289 : i32 to index
    %c0_290 = arith.constant 0 : index
    %947 = vector.load %arg9[%946, %c0_290] : memref<8x256xf32, #tpu.memory_space<vmem>>, vector<1x256xf32>
    %c7_i32_291 = arith.constant 7 : i32
    %948 = arith.subi %c7_i32_291, %c0_i32_289 : i32
    %949 = arith.index_cast %948 : i32 to index
    %c0_292 = arith.constant 0 : index
    %950 = vector.load %arg10[%949, %c0_292] : memref<8x256xf32, #tpu.memory_space<vmem>>, vector<1x256xf32>
    %951 = arith.addf %947, %950 : vector<1x256xf32>
    %cst_293 = arith.constant dense<0.000000e+00> : vector<1x256xf32>
    %952 = tpu.matmul %945, %942, %cst_293 {dimension_numbers = #tpu.dot_dimension_numbers<[1], [0], [0], [1], [0, 0, 1, 1], [], []>} : vector<1x64xf32>, vector<64x256xf32>, vector<1x256xf32> -> vector<1x256xf32>
    %953 = arith.addf %951, %952 : vector<1x256xf32>
    %954 = arith.addf %953, %944 : vector<1x256xf32>
    %955 = vector.extract_strided_slice %954 {offsets = [0, 0], sizes = [1, 192], strides = [1, 1]} : vector<1x256xf32> to vector<1x192xf32>
    %956 = arith.negf %955 : vector<1x192xf32>
    %957 = math.exp %956 : vector<1x192xf32>
    %cst_294 = arith.constant 1.000000e+00 : f32
    %958 = vector.broadcast %cst_294 : f32 to vector<1x192xf32>
    %959 = arith.addf %958, %957 : vector<1x192xf32>
    %960 = arith.divf %958, %959 : vector<1x192xf32>
    %961 = vector.extract_strided_slice %954 {offsets = [0, 192], sizes = [1, 64], strides = [1, 1]} : vector<1x256xf32> to vector<1x64xf32>
    %962 = math.tanh %961 : vector<1x64xf32>
    %963 = vector.extract_strided_slice %960 {offsets = [0, 0], sizes = [1, 64], strides = [1, 1]} : vector<1x192xf32> to vector<1x64xf32>
    %964 = vector.extract_strided_slice %960 {offsets = [0, 64], sizes = [1, 64], strides = [1, 1]} : vector<1x192xf32> to vector<1x64xf32>
    %965 = vector.extract_strided_slice %960 {offsets = [0, 128], sizes = [1, 64], strides = [1, 1]} : vector<1x192xf32> to vector<1x64xf32>
    %966 = arith.mulf %964, %945 : vector<1x64xf32>
    %967 = arith.mulf %963, %962 : vector<1x64xf32>
    %968 = arith.addf %966, %967 : vector<1x64xf32>
    %969 = math.tanh %968 : vector<1x64xf32>
    %970 = arith.mulf %965, %969 : vector<1x64xf32>
    %c32_i32_295 = arith.constant 32 : i32
    %971 = vector.broadcast %c32_i32_295 : i32 to vector<1x64xi32>
    %972 = arith.cmpi slt, %1, %971 : vector<1x64xi32>
    %c7_i32_296 = arith.constant 7 : i32
    %973 = arith.subi %c7_i32_296, %c0_i32_289 : i32
    %974 = vector.broadcast %c0_i32_289 : i32 to vector<1x64xi32>
    %975 = vector.broadcast %973 : i32 to vector<1x64xi32>
    %976 = arith.select %972, %974, %975 : vector<1x64xi1>, vector<1x64xi32>
    %977 = vector.broadcast %0 : i32 to vector<1x64xi32>
    %978 = arith.cmpi slt, %976, %977 : vector<1x64xi32>
    %979 = arith.select %978, %970, %945 : vector<1x64xi1>, vector<1x64xf32>
    %980 = arith.select %978, %968, %945 : vector<1x64xi1>, vector<1x64xf32>
    %c1_i32_297 = arith.constant 1 : i32
    %981 = arith.index_cast %c1_i32_297 : i32 to index
    %c0_298 = arith.constant 0 : index
    %982 = vector.load %arg9[%981, %c0_298] : memref<8x256xf32, #tpu.memory_space<vmem>>, vector<1x256xf32>
    %c7_i32_299 = arith.constant 7 : i32
    %983 = arith.subi %c7_i32_299, %c1_i32_297 : i32
    %984 = arith.index_cast %983 : i32 to index
    %c0_300 = arith.constant 0 : index
    %985 = vector.load %arg10[%984, %c0_300] : memref<8x256xf32, #tpu.memory_space<vmem>>, vector<1x256xf32>
    %986 = arith.addf %982, %985 : vector<1x256xf32>
    %cst_301 = arith.constant dense<0.000000e+00> : vector<1x256xf32>
    %987 = tpu.matmul %979, %942, %cst_301 {dimension_numbers = #tpu.dot_dimension_numbers<[1], [0], [0], [1], [0, 0, 1, 1], [], []>} : vector<1x64xf32>, vector<64x256xf32>, vector<1x256xf32> -> vector<1x256xf32>
    %988 = arith.addf %986, %987 : vector<1x256xf32>
    %989 = arith.addf %988, %944 : vector<1x256xf32>
    %990 = vector.extract_strided_slice %989 {offsets = [0, 0], sizes = [1, 192], strides = [1, 1]} : vector<1x256xf32> to vector<1x192xf32>
    %991 = arith.negf %990 : vector<1x192xf32>
    %992 = math.exp %991 : vector<1x192xf32>
    %cst_302 = arith.constant 1.000000e+00 : f32
    %993 = vector.broadcast %cst_302 : f32 to vector<1x192xf32>
    %994 = arith.addf %993, %992 : vector<1x192xf32>
    %995 = arith.divf %993, %994 : vector<1x192xf32>
    %996 = vector.extract_strided_slice %989 {offsets = [0, 192], sizes = [1, 64], strides = [1, 1]} : vector<1x256xf32> to vector<1x64xf32>
    %997 = math.tanh %996 : vector<1x64xf32>
    %998 = vector.extract_strided_slice %995 {offsets = [0, 0], sizes = [1, 64], strides = [1, 1]} : vector<1x192xf32> to vector<1x64xf32>
    %999 = vector.extract_strided_slice %995 {offsets = [0, 64], sizes = [1, 64], strides = [1, 1]} : vector<1x192xf32> to vector<1x64xf32>
    %1000 = vector.extract_strided_slice %995 {offsets = [0, 128], sizes = [1, 64], strides = [1, 1]} : vector<1x192xf32> to vector<1x64xf32>
    %1001 = arith.mulf %999, %980 : vector<1x64xf32>
    %1002 = arith.mulf %998, %997 : vector<1x64xf32>
    %1003 = arith.addf %1001, %1002 : vector<1x64xf32>
    %1004 = math.tanh %1003 : vector<1x64xf32>
    %1005 = arith.mulf %1000, %1004 : vector<1x64xf32>
    %c32_i32_303 = arith.constant 32 : i32
    %1006 = vector.broadcast %c32_i32_303 : i32 to vector<1x64xi32>
    %1007 = arith.cmpi slt, %1, %1006 : vector<1x64xi32>
    %c7_i32_304 = arith.constant 7 : i32
    %1008 = arith.subi %c7_i32_304, %c1_i32_297 : i32
    %1009 = vector.broadcast %c1_i32_297 : i32 to vector<1x64xi32>
    %1010 = vector.broadcast %1008 : i32 to vector<1x64xi32>
    %1011 = arith.select %1007, %1009, %1010 : vector<1x64xi1>, vector<1x64xi32>
    %1012 = vector.broadcast %0 : i32 to vector<1x64xi32>
    %1013 = arith.cmpi slt, %1011, %1012 : vector<1x64xi32>
    %1014 = arith.select %1013, %1005, %979 : vector<1x64xi1>, vector<1x64xf32>
    %1015 = arith.select %1013, %1003, %980 : vector<1x64xi1>, vector<1x64xf32>
    %c2_i32_305 = arith.constant 2 : i32
    %1016 = arith.index_cast %c2_i32_305 : i32 to index
    %c0_306 = arith.constant 0 : index
    %1017 = vector.load %arg9[%1016, %c0_306] : memref<8x256xf32, #tpu.memory_space<vmem>>, vector<1x256xf32>
    %c7_i32_307 = arith.constant 7 : i32
    %1018 = arith.subi %c7_i32_307, %c2_i32_305 : i32
    %1019 = arith.index_cast %1018 : i32 to index
    %c0_308 = arith.constant 0 : index
    %1020 = vector.load %arg10[%1019, %c0_308] : memref<8x256xf32, #tpu.memory_space<vmem>>, vector<1x256xf32>
    %1021 = arith.addf %1017, %1020 : vector<1x256xf32>
    %cst_309 = arith.constant dense<0.000000e+00> : vector<1x256xf32>
    %1022 = tpu.matmul %1014, %942, %cst_309 {dimension_numbers = #tpu.dot_dimension_numbers<[1], [0], [0], [1], [0, 0, 1, 1], [], []>} : vector<1x64xf32>, vector<64x256xf32>, vector<1x256xf32> -> vector<1x256xf32>
    %1023 = arith.addf %1021, %1022 : vector<1x256xf32>
    %1024 = arith.addf %1023, %944 : vector<1x256xf32>
    %1025 = vector.extract_strided_slice %1024 {offsets = [0, 0], sizes = [1, 192], strides = [1, 1]} : vector<1x256xf32> to vector<1x192xf32>
    %1026 = arith.negf %1025 : vector<1x192xf32>
    %1027 = math.exp %1026 : vector<1x192xf32>
    %cst_310 = arith.constant 1.000000e+00 : f32
    %1028 = vector.broadcast %cst_310 : f32 to vector<1x192xf32>
    %1029 = arith.addf %1028, %1027 : vector<1x192xf32>
    %1030 = arith.divf %1028, %1029 : vector<1x192xf32>
    %1031 = vector.extract_strided_slice %1024 {offsets = [0, 192], sizes = [1, 64], strides = [1, 1]} : vector<1x256xf32> to vector<1x64xf32>
    %1032 = math.tanh %1031 : vector<1x64xf32>
    %1033 = vector.extract_strided_slice %1030 {offsets = [0, 0], sizes = [1, 64], strides = [1, 1]} : vector<1x192xf32> to vector<1x64xf32>
    %1034 = vector.extract_strided_slice %1030 {offsets = [0, 64], sizes = [1, 64], strides = [1, 1]} : vector<1x192xf32> to vector<1x64xf32>
    %1035 = vector.extract_strided_slice %1030 {offsets = [0, 128], sizes = [1, 64], strides = [1, 1]} : vector<1x192xf32> to vector<1x64xf32>
    %1036 = arith.mulf %1034, %1015 : vector<1x64xf32>
    %1037 = arith.mulf %1033, %1032 : vector<1x64xf32>
    %1038 = arith.addf %1036, %1037 : vector<1x64xf32>
    %1039 = math.tanh %1038 : vector<1x64xf32>
    %1040 = arith.mulf %1035, %1039 : vector<1x64xf32>
    %c32_i32_311 = arith.constant 32 : i32
    %1041 = vector.broadcast %c32_i32_311 : i32 to vector<1x64xi32>
    %1042 = arith.cmpi slt, %1, %1041 : vector<1x64xi32>
    %c7_i32_312 = arith.constant 7 : i32
    %1043 = arith.subi %c7_i32_312, %c2_i32_305 : i32
    %1044 = vector.broadcast %c2_i32_305 : i32 to vector<1x64xi32>
    %1045 = vector.broadcast %1043 : i32 to vector<1x64xi32>
    %1046 = arith.select %1042, %1044, %1045 : vector<1x64xi1>, vector<1x64xi32>
    %1047 = vector.broadcast %0 : i32 to vector<1x64xi32>
    %1048 = arith.cmpi slt, %1046, %1047 : vector<1x64xi32>
    %1049 = arith.select %1048, %1040, %1014 : vector<1x64xi1>, vector<1x64xf32>
    %1050 = arith.select %1048, %1038, %1015 : vector<1x64xi1>, vector<1x64xf32>
    %c3_i32_313 = arith.constant 3 : i32
    %1051 = arith.index_cast %c3_i32_313 : i32 to index
    %c0_314 = arith.constant 0 : index
    %1052 = vector.load %arg9[%1051, %c0_314] : memref<8x256xf32, #tpu.memory_space<vmem>>, vector<1x256xf32>
    %c7_i32_315 = arith.constant 7 : i32
    %1053 = arith.subi %c7_i32_315, %c3_i32_313 : i32
    %1054 = arith.index_cast %1053 : i32 to index
    %c0_316 = arith.constant 0 : index
    %1055 = vector.load %arg10[%1054, %c0_316] : memref<8x256xf32, #tpu.memory_space<vmem>>, vector<1x256xf32>
    %1056 = arith.addf %1052, %1055 : vector<1x256xf32>
    %cst_317 = arith.constant dense<0.000000e+00> : vector<1x256xf32>
    %1057 = tpu.matmul %1049, %942, %cst_317 {dimension_numbers = #tpu.dot_dimension_numbers<[1], [0], [0], [1], [0, 0, 1, 1], [], []>} : vector<1x64xf32>, vector<64x256xf32>, vector<1x256xf32> -> vector<1x256xf32>
    %1058 = arith.addf %1056, %1057 : vector<1x256xf32>
    %1059 = arith.addf %1058, %944 : vector<1x256xf32>
    %1060 = vector.extract_strided_slice %1059 {offsets = [0, 0], sizes = [1, 192], strides = [1, 1]} : vector<1x256xf32> to vector<1x192xf32>
    %1061 = arith.negf %1060 : vector<1x192xf32>
    %1062 = math.exp %1061 : vector<1x192xf32>
    %cst_318 = arith.constant 1.000000e+00 : f32
    %1063 = vector.broadcast %cst_318 : f32 to vector<1x192xf32>
    %1064 = arith.addf %1063, %1062 : vector<1x192xf32>
    %1065 = arith.divf %1063, %1064 : vector<1x192xf32>
    %1066 = vector.extract_strided_slice %1059 {offsets = [0, 192], sizes = [1, 64], strides = [1, 1]} : vector<1x256xf32> to vector<1x64xf32>
    %1067 = math.tanh %1066 : vector<1x64xf32>
    %1068 = vector.extract_strided_slice %1065 {offsets = [0, 0], sizes = [1, 64], strides = [1, 1]} : vector<1x192xf32> to vector<1x64xf32>
    %1069 = vector.extract_strided_slice %1065 {offsets = [0, 64], sizes = [1, 64], strides = [1, 1]} : vector<1x192xf32> to vector<1x64xf32>
    %1070 = vector.extract_strided_slice %1065 {offsets = [0, 128], sizes = [1, 64], strides = [1, 1]} : vector<1x192xf32> to vector<1x64xf32>
    %1071 = arith.mulf %1069, %1050 : vector<1x64xf32>
    %1072 = arith.mulf %1068, %1067 : vector<1x64xf32>
    %1073 = arith.addf %1071, %1072 : vector<1x64xf32>
    %1074 = math.tanh %1073 : vector<1x64xf32>
    %1075 = arith.mulf %1070, %1074 : vector<1x64xf32>
    %c32_i32_319 = arith.constant 32 : i32
    %1076 = vector.broadcast %c32_i32_319 : i32 to vector<1x64xi32>
    %1077 = arith.cmpi slt, %1, %1076 : vector<1x64xi32>
    %c7_i32_320 = arith.constant 7 : i32
    %1078 = arith.subi %c7_i32_320, %c3_i32_313 : i32
    %1079 = vector.broadcast %c3_i32_313 : i32 to vector<1x64xi32>
    %1080 = vector.broadcast %1078 : i32 to vector<1x64xi32>
    %1081 = arith.select %1077, %1079, %1080 : vector<1x64xi1>, vector<1x64xi32>
    %1082 = vector.broadcast %0 : i32 to vector<1x64xi32>
    %1083 = arith.cmpi slt, %1081, %1082 : vector<1x64xi32>
    %1084 = arith.select %1083, %1075, %1049 : vector<1x64xi1>, vector<1x64xf32>
    %1085 = arith.select %1083, %1073, %1050 : vector<1x64xi1>, vector<1x64xf32>
    %c4_i32_321 = arith.constant 4 : i32
    %1086 = arith.index_cast %c4_i32_321 : i32 to index
    %c0_322 = arith.constant 0 : index
    %1087 = vector.load %arg9[%1086, %c0_322] : memref<8x256xf32, #tpu.memory_space<vmem>>, vector<1x256xf32>
    %c7_i32_323 = arith.constant 7 : i32
    %1088 = arith.subi %c7_i32_323, %c4_i32_321 : i32
    %1089 = arith.index_cast %1088 : i32 to index
    %c0_324 = arith.constant 0 : index
    %1090 = vector.load %arg10[%1089, %c0_324] : memref<8x256xf32, #tpu.memory_space<vmem>>, vector<1x256xf32>
    %1091 = arith.addf %1087, %1090 : vector<1x256xf32>
    %cst_325 = arith.constant dense<0.000000e+00> : vector<1x256xf32>
    %1092 = tpu.matmul %1084, %942, %cst_325 {dimension_numbers = #tpu.dot_dimension_numbers<[1], [0], [0], [1], [0, 0, 1, 1], [], []>} : vector<1x64xf32>, vector<64x256xf32>, vector<1x256xf32> -> vector<1x256xf32>
    %1093 = arith.addf %1091, %1092 : vector<1x256xf32>
    %1094 = arith.addf %1093, %944 : vector<1x256xf32>
    %1095 = vector.extract_strided_slice %1094 {offsets = [0, 0], sizes = [1, 192], strides = [1, 1]} : vector<1x256xf32> to vector<1x192xf32>
    %1096 = arith.negf %1095 : vector<1x192xf32>
    %1097 = math.exp %1096 : vector<1x192xf32>
    %cst_326 = arith.constant 1.000000e+00 : f32
    %1098 = vector.broadcast %cst_326 : f32 to vector<1x192xf32>
    %1099 = arith.addf %1098, %1097 : vector<1x192xf32>
    %1100 = arith.divf %1098, %1099 : vector<1x192xf32>
    %1101 = vector.extract_strided_slice %1094 {offsets = [0, 192], sizes = [1, 64], strides = [1, 1]} : vector<1x256xf32> to vector<1x64xf32>
    %1102 = math.tanh %1101 : vector<1x64xf32>
    %1103 = vector.extract_strided_slice %1100 {offsets = [0, 0], sizes = [1, 64], strides = [1, 1]} : vector<1x192xf32> to vector<1x64xf32>
    %1104 = vector.extract_strided_slice %1100 {offsets = [0, 64], sizes = [1, 64], strides = [1, 1]} : vector<1x192xf32> to vector<1x64xf32>
    %1105 = vector.extract_strided_slice %1100 {offsets = [0, 128], sizes = [1, 64], strides = [1, 1]} : vector<1x192xf32> to vector<1x64xf32>
    %1106 = arith.mulf %1104, %1085 : vector<1x64xf32>
    %1107 = arith.mulf %1103, %1102 : vector<1x64xf32>
    %1108 = arith.addf %1106, %1107 : vector<1x64xf32>
    %1109 = math.tanh %1108 : vector<1x64xf32>
    %1110 = arith.mulf %1105, %1109 : vector<1x64xf32>
    %c32_i32_327 = arith.constant 32 : i32
    %1111 = vector.broadcast %c32_i32_327 : i32 to vector<1x64xi32>
    %1112 = arith.cmpi slt, %1, %1111 : vector<1x64xi32>
    %c7_i32_328 = arith.constant 7 : i32
    %1113 = arith.subi %c7_i32_328, %c4_i32_321 : i32
    %1114 = vector.broadcast %c4_i32_321 : i32 to vector<1x64xi32>
    %1115 = vector.broadcast %1113 : i32 to vector<1x64xi32>
    %1116 = arith.select %1112, %1114, %1115 : vector<1x64xi1>, vector<1x64xi32>
    %1117 = vector.broadcast %0 : i32 to vector<1x64xi32>
    %1118 = arith.cmpi slt, %1116, %1117 : vector<1x64xi32>
    %1119 = arith.select %1118, %1110, %1084 : vector<1x64xi1>, vector<1x64xf32>
    %1120 = arith.select %1118, %1108, %1085 : vector<1x64xi1>, vector<1x64xf32>
    %c5_i32_329 = arith.constant 5 : i32
    %1121 = arith.index_cast %c5_i32_329 : i32 to index
    %c0_330 = arith.constant 0 : index
    %1122 = vector.load %arg9[%1121, %c0_330] : memref<8x256xf32, #tpu.memory_space<vmem>>, vector<1x256xf32>
    %c7_i32_331 = arith.constant 7 : i32
    %1123 = arith.subi %c7_i32_331, %c5_i32_329 : i32
    %1124 = arith.index_cast %1123 : i32 to index
    %c0_332 = arith.constant 0 : index
    %1125 = vector.load %arg10[%1124, %c0_332] : memref<8x256xf32, #tpu.memory_space<vmem>>, vector<1x256xf32>
    %1126 = arith.addf %1122, %1125 : vector<1x256xf32>
    %cst_333 = arith.constant dense<0.000000e+00> : vector<1x256xf32>
    %1127 = tpu.matmul %1119, %942, %cst_333 {dimension_numbers = #tpu.dot_dimension_numbers<[1], [0], [0], [1], [0, 0, 1, 1], [], []>} : vector<1x64xf32>, vector<64x256xf32>, vector<1x256xf32> -> vector<1x256xf32>
    %1128 = arith.addf %1126, %1127 : vector<1x256xf32>
    %1129 = arith.addf %1128, %944 : vector<1x256xf32>
    %1130 = vector.extract_strided_slice %1129 {offsets = [0, 0], sizes = [1, 192], strides = [1, 1]} : vector<1x256xf32> to vector<1x192xf32>
    %1131 = arith.negf %1130 : vector<1x192xf32>
    %1132 = math.exp %1131 : vector<1x192xf32>
    %cst_334 = arith.constant 1.000000e+00 : f32
    %1133 = vector.broadcast %cst_334 : f32 to vector<1x192xf32>
    %1134 = arith.addf %1133, %1132 : vector<1x192xf32>
    %1135 = arith.divf %1133, %1134 : vector<1x192xf32>
    %1136 = vector.extract_strided_slice %1129 {offsets = [0, 192], sizes = [1, 64], strides = [1, 1]} : vector<1x256xf32> to vector<1x64xf32>
    %1137 = math.tanh %1136 : vector<1x64xf32>
    %1138 = vector.extract_strided_slice %1135 {offsets = [0, 0], sizes = [1, 64], strides = [1, 1]} : vector<1x192xf32> to vector<1x64xf32>
    %1139 = vector.extract_strided_slice %1135 {offsets = [0, 64], sizes = [1, 64], strides = [1, 1]} : vector<1x192xf32> to vector<1x64xf32>
    %1140 = vector.extract_strided_slice %1135 {offsets = [0, 128], sizes = [1, 64], strides = [1, 1]} : vector<1x192xf32> to vector<1x64xf32>
    %1141 = arith.mulf %1139, %1120 : vector<1x64xf32>
    %1142 = arith.mulf %1138, %1137 : vector<1x64xf32>
    %1143 = arith.addf %1141, %1142 : vector<1x64xf32>
    %1144 = math.tanh %1143 : vector<1x64xf32>
    %1145 = arith.mulf %1140, %1144 : vector<1x64xf32>
    %c32_i32_335 = arith.constant 32 : i32
    %1146 = vector.broadcast %c32_i32_335 : i32 to vector<1x64xi32>
    %1147 = arith.cmpi slt, %1, %1146 : vector<1x64xi32>
    %c7_i32_336 = arith.constant 7 : i32
    %1148 = arith.subi %c7_i32_336, %c5_i32_329 : i32
    %1149 = vector.broadcast %c5_i32_329 : i32 to vector<1x64xi32>
    %1150 = vector.broadcast %1148 : i32 to vector<1x64xi32>
    %1151 = arith.select %1147, %1149, %1150 : vector<1x64xi1>, vector<1x64xi32>
    %1152 = vector.broadcast %0 : i32 to vector<1x64xi32>
    %1153 = arith.cmpi slt, %1151, %1152 : vector<1x64xi32>
    %1154 = arith.select %1153, %1145, %1119 : vector<1x64xi1>, vector<1x64xf32>
    %1155 = arith.select %1153, %1143, %1120 : vector<1x64xi1>, vector<1x64xf32>
    %c6_i32_337 = arith.constant 6 : i32
    %1156 = arith.index_cast %c6_i32_337 : i32 to index
    %c0_338 = arith.constant 0 : index
    %1157 = vector.load %arg9[%1156, %c0_338] : memref<8x256xf32, #tpu.memory_space<vmem>>, vector<1x256xf32>
    %c7_i32_339 = arith.constant 7 : i32
    %1158 = arith.subi %c7_i32_339, %c6_i32_337 : i32
    %1159 = arith.index_cast %1158 : i32 to index
    %c0_340 = arith.constant 0 : index
    %1160 = vector.load %arg10[%1159, %c0_340] : memref<8x256xf32, #tpu.memory_space<vmem>>, vector<1x256xf32>
    %1161 = arith.addf %1157, %1160 : vector<1x256xf32>
    %cst_341 = arith.constant dense<0.000000e+00> : vector<1x256xf32>
    %1162 = tpu.matmul %1154, %942, %cst_341 {dimension_numbers = #tpu.dot_dimension_numbers<[1], [0], [0], [1], [0, 0, 1, 1], [], []>} : vector<1x64xf32>, vector<64x256xf32>, vector<1x256xf32> -> vector<1x256xf32>
    %1163 = arith.addf %1161, %1162 : vector<1x256xf32>
    %1164 = arith.addf %1163, %944 : vector<1x256xf32>
    %1165 = vector.extract_strided_slice %1164 {offsets = [0, 0], sizes = [1, 192], strides = [1, 1]} : vector<1x256xf32> to vector<1x192xf32>
    %1166 = arith.negf %1165 : vector<1x192xf32>
    %1167 = math.exp %1166 : vector<1x192xf32>
    %cst_342 = arith.constant 1.000000e+00 : f32
    %1168 = vector.broadcast %cst_342 : f32 to vector<1x192xf32>
    %1169 = arith.addf %1168, %1167 : vector<1x192xf32>
    %1170 = arith.divf %1168, %1169 : vector<1x192xf32>
    %1171 = vector.extract_strided_slice %1164 {offsets = [0, 192], sizes = [1, 64], strides = [1, 1]} : vector<1x256xf32> to vector<1x64xf32>
    %1172 = math.tanh %1171 : vector<1x64xf32>
    %1173 = vector.extract_strided_slice %1170 {offsets = [0, 0], sizes = [1, 64], strides = [1, 1]} : vector<1x192xf32> to vector<1x64xf32>
    %1174 = vector.extract_strided_slice %1170 {offsets = [0, 64], sizes = [1, 64], strides = [1, 1]} : vector<1x192xf32> to vector<1x64xf32>
    %1175 = vector.extract_strided_slice %1170 {offsets = [0, 128], sizes = [1, 64], strides = [1, 1]} : vector<1x192xf32> to vector<1x64xf32>
    %1176 = arith.mulf %1174, %1155 : vector<1x64xf32>
    %1177 = arith.mulf %1173, %1172 : vector<1x64xf32>
    %1178 = arith.addf %1176, %1177 : vector<1x64xf32>
    %1179 = math.tanh %1178 : vector<1x64xf32>
    %1180 = arith.mulf %1175, %1179 : vector<1x64xf32>
    %c32_i32_343 = arith.constant 32 : i32
    %1181 = vector.broadcast %c32_i32_343 : i32 to vector<1x64xi32>
    %1182 = arith.cmpi slt, %1, %1181 : vector<1x64xi32>
    %c7_i32_344 = arith.constant 7 : i32
    %1183 = arith.subi %c7_i32_344, %c6_i32_337 : i32
    %1184 = vector.broadcast %c6_i32_337 : i32 to vector<1x64xi32>
    %1185 = vector.broadcast %1183 : i32 to vector<1x64xi32>
    %1186 = arith.select %1182, %1184, %1185 : vector<1x64xi1>, vector<1x64xi32>
    %1187 = vector.broadcast %0 : i32 to vector<1x64xi32>
    %1188 = arith.cmpi slt, %1186, %1187 : vector<1x64xi32>
    %1189 = arith.select %1188, %1180, %1154 : vector<1x64xi1>, vector<1x64xf32>
    %1190 = arith.select %1188, %1178, %1155 : vector<1x64xi1>, vector<1x64xf32>
    %c7_i32_345 = arith.constant 7 : i32
    %1191 = arith.index_cast %c7_i32_345 : i32 to index
    %c0_346 = arith.constant 0 : index
    %1192 = vector.load %arg9[%1191, %c0_346] : memref<8x256xf32, #tpu.memory_space<vmem>>, vector<1x256xf32>
    %c7_i32_347 = arith.constant 7 : i32
    %1193 = arith.subi %c7_i32_347, %c7_i32_345 : i32
    %1194 = arith.index_cast %1193 : i32 to index
    %c0_348 = arith.constant 0 : index
    %1195 = vector.load %arg10[%1194, %c0_348] : memref<8x256xf32, #tpu.memory_space<vmem>>, vector<1x256xf32>
    %1196 = arith.addf %1192, %1195 : vector<1x256xf32>
    %cst_349 = arith.constant dense<0.000000e+00> : vector<1x256xf32>
    %1197 = tpu.matmul %1189, %942, %cst_349 {dimension_numbers = #tpu.dot_dimension_numbers<[1], [0], [0], [1], [0, 0, 1, 1], [], []>} : vector<1x64xf32>, vector<64x256xf32>, vector<1x256xf32> -> vector<1x256xf32>
    %1198 = arith.addf %1196, %1197 : vector<1x256xf32>
    %1199 = arith.addf %1198, %944 : vector<1x256xf32>
    %1200 = vector.extract_strided_slice %1199 {offsets = [0, 0], sizes = [1, 192], strides = [1, 1]} : vector<1x256xf32> to vector<1x192xf32>
    %1201 = arith.negf %1200 : vector<1x192xf32>
    %1202 = math.exp %1201 : vector<1x192xf32>
    %cst_350 = arith.constant 1.000000e+00 : f32
    %1203 = vector.broadcast %cst_350 : f32 to vector<1x192xf32>
    %1204 = arith.addf %1203, %1202 : vector<1x192xf32>
    %1205 = arith.divf %1203, %1204 : vector<1x192xf32>
    %1206 = vector.extract_strided_slice %1199 {offsets = [0, 192], sizes = [1, 64], strides = [1, 1]} : vector<1x256xf32> to vector<1x64xf32>
    %1207 = math.tanh %1206 : vector<1x64xf32>
    %1208 = vector.extract_strided_slice %1205 {offsets = [0, 0], sizes = [1, 64], strides = [1, 1]} : vector<1x192xf32> to vector<1x64xf32>
    %1209 = vector.extract_strided_slice %1205 {offsets = [0, 64], sizes = [1, 64], strides = [1, 1]} : vector<1x192xf32> to vector<1x64xf32>
    %1210 = vector.extract_strided_slice %1205 {offsets = [0, 128], sizes = [1, 64], strides = [1, 1]} : vector<1x192xf32> to vector<1x64xf32>
    %1211 = arith.mulf %1209, %1190 : vector<1x64xf32>
    %1212 = arith.mulf %1208, %1207 : vector<1x64xf32>
    %1213 = arith.addf %1211, %1212 : vector<1x64xf32>
    %1214 = math.tanh %1213 : vector<1x64xf32>
    %1215 = arith.mulf %1210, %1214 : vector<1x64xf32>
    %c32_i32_351 = arith.constant 32 : i32
    %1216 = vector.broadcast %c32_i32_351 : i32 to vector<1x64xi32>
    %1217 = arith.cmpi slt, %1, %1216 : vector<1x64xi32>
    %c7_i32_352 = arith.constant 7 : i32
    %1218 = arith.subi %c7_i32_352, %c7_i32_345 : i32
    %1219 = vector.broadcast %c7_i32_345 : i32 to vector<1x64xi32>
    %1220 = vector.broadcast %1218 : i32 to vector<1x64xi32>
    %1221 = arith.select %1217, %1219, %1220 : vector<1x64xi1>, vector<1x64xi32>
    %1222 = vector.broadcast %0 : i32 to vector<1x64xi32>
    %1223 = arith.cmpi slt, %1221, %1222 : vector<1x64xi32>
    %1224 = arith.select %1223, %1215, %1189 : vector<1x64xi1>, vector<1x64xf32>
    %1225 = arith.select %1223, %1213, %1190 : vector<1x64xi1>, vector<1x64xf32>
    %c8_i32_353 = arith.constant 8 : i32
    %1226 = tpu.concatenate %308, %309, %618, %619, %928, %929, %1224, %1225 in 1 : vector<1x64xf32>, vector<1x64xf32>, vector<1x64xf32>, vector<1x64xf32>, vector<1x64xf32>, vector<1x64xf32>, vector<1x64xf32>, vector<1x64xf32> -> vector<1x512xf32>
    %c0_354 = arith.constant 0 : index
    %c0_355 = arith.constant 0 : index
    %1227 = vector.load %arg6[%c0_354, %c0_355] : memref<512x8xf32, #tpu.memory_space<vmem>>, vector<512x8xf32>
    %cst_356 = arith.constant dense<0.000000e+00> : vector<1x8xf32>
    %1228 = tpu.matmul %1226, %1227, %cst_356 {dimension_numbers = #tpu.dot_dimension_numbers<[1], [0], [0], [1], [0, 0, 1, 1], [], []>} : vector<1x512xf32>, vector<512x8xf32>, vector<1x8xf32> -> vector<1x8xf32>
    %c0_357 = arith.constant 0 : index
    %c0_358 = arith.constant 0 : index
    %1229 = vector.load %arg7[%c0_357, %c0_358] : memref<1x8xf32, #tpu.memory_space<vmem>>, vector<1x8xf32>
    %1230 = arith.addf %1228, %1229 : vector<1x8xf32>
    %cst_359 = arith.constant dense<0xFF800000> : vector<1xf32>
    %1231 = vector.multi_reduction <maximumf>, %1230, %cst_359 [1] : vector<1x8xf32> to vector<1xf32>
    %1232 = vector.shape_cast %1231 : vector<1xf32> to vector<1x1xf32>
    %1233 = vector.broadcast %1232 : vector<1x1xf32> to vector<1x8xf32>
    %1234 = arith.subf %1230, %1233 : vector<1x8xf32>
    %1235 = math.exp %1234 : vector<1x8xf32>
    %cst_360 = arith.constant dense<0.000000e+00> : vector<1xf32>
    %1236 = vector.multi_reduction <add>, %1235, %cst_360 [1] : vector<1x8xf32> to vector<1xf32>
    %1237 = vector.shape_cast %1236 : vector<1xf32> to vector<1x1xf32>
    %1238 = vector.broadcast %1237 : vector<1x1xf32> to vector<1x8xf32>
    %1239 = arith.divf %1235, %1238 : vector<1x8xf32>
    %c0_361 = arith.constant 0 : index
    %c0_362 = arith.constant 0 : index
    %1240 = vector.load %arg8[%c0_361, %c0_362] : memref<1x8xf32, #tpu.memory_space<vmem>>, vector<1x8xf32>
    tpu.vector_store %arg8[%c0_361, %c0_362], %1239 {strides = array<i32>} : memref<1x8xf32, #tpu.memory_space<vmem>>, vector<1x8xf32>,
    return
  }
}

</mosaic_0001>

<llo_original>
// kernel: name_format_forward.1
$region0: #{name_format_forward.1}
  #allocation0 [shape = 'u32[]', space=smem, size = 0x4, offset = 0x4, fixed_abs, tag = 'smem constant byte address 0x4 - core index']
  #allocation1 [shape = 'u32[72,128]{1,0:T(1,128)}', space=vmem, size = 0x9000, scoped, tag = 'internal scratch']
  #allocation2 [shape = 'f32[8,256]{1,0:T(8,128)}', space=vmem, size = 0x2000, scoped, tag = 'scratch operand']
  #allocation3 [shape = 'f32[8,256]{1,0:T(8,128)}', space=vmem, size = 0x2000, scoped, tag = 'scratch operand']
  #allocation4 [shape = 'f32[8,64]{1,0:T(8,128)}', space=vmem, size = 0x1000, scoped, tag = 'scratch operand']
  #allocation5 [shape = 'f32[8,64]{1,0:T(8,128)}', space=vmem, size = 0x1000, scoped, tag = 'scratch operand']
  #allocation6 [shape = 's32[1]{0:T(128)S(6)}', space=smem, size = 0x200, scoped, tag = 'scoped memory for name_format_forward.1']
  %s0 = inlined_call_operand.<no memory space> [shape: s32[1], index: 0, kind: input, shape index: {}]
  %s1 = inlined_call_operand.vmem [shape: f32[8,64], index: 1, kind: input, shape index: {}]
  %s2 = inlined_call_operand.vmem [shape: f32[4,64,256], index: 2, kind: input, shape index: {}]
  %s3 = inlined_call_operand.hbm [shape: f32[4,64,256], index: 3, kind: input, shape index: {}]
  %s4 = inlined_call_operand.hbm [shape: f32[4,64,256], index: 4, kind: input, shape index: {}]
  %s5 = inlined_call_operand.vmem [shape: f32[4,1,256], index: 5, kind: input, shape index: {}]
  %s6 = inlined_call_operand.vmem [shape: f32[512,8], index: 6, kind: input, shape index: {}]
  %s7 = inlined_call_operand.vmem [shape: f32[1,8], index: 7, kind: input, shape index: {}]
  %s8 = inlined_call_operand.hbm [shape: f32[1,8], index: 8, kind: output, shape index: {}]
  %s9 = sld [smem:[#allocation0]]
  $region50: #{name_format_forward.1} parent=0
    _
  %s11 = ssub.s32 1, %s9
  %s12 = scalar_select 0, %s11, %s9
  %13 = sst [smem:[#allocation6]] %s0
  $region1: #{name_format_forward.1} parent=0
    #allocation7 [shape = 'u8[262144]{0}', space=vmem, size = 0x40000, scoped, tag = 'input window, operand 3, single buffered']
    #allocation8 [shape = 's32[1]{0}', space=sflag, size = 0x4, scoped, tag = 'scoped memory for name_format_forward.1']
    #allocation9 [shape = 's32[1]{0}', space=sflag, size = 0x4, scoped, tag = 'scoped memory for name_format_forward.1']
    #allocation10 [shape = 'u8[262144]{0}', space=vmem, size = 0x40000, scoped, tag = 'input window, operand 4, single buffered']
    #allocation11 [shape = 's32[1]{0}', space=sflag, size = 0x4, scoped, tag = 'scoped memory for name_format_forward.1']
    #allocation12 [shape = 'u8[512]{0}', space=vmem, size = 0x400, scoped, tag = 'output window, operand 0, single buffered']
    %14 = vsyncpa [#allocation8], 0
    %15 = vsyncpa [#allocation11], 0
    %16 = vsyncpa [#allocation9], 0
    // Predicated region
    $region2: #{name_format_forward.1} parent=1 // pred_check
      _
    $region3: #{name_format_forward.1} parent=1 // pred_check_branch
      %18 = sbr.rel (0) target = $region5
    $region4: #{name_format_forward.1} parent=1 // pred_region
      _
    $region5: #{name_format_forward.1} parent=1 // pred_fallthru
      _
    // Predicated region
    $region6: #{name_format_forward.1} parent=1 // pred_check
      _
    $region7: #{name_format_forward.1} parent=1 // pred_check_branch
      %20 = sbr.rel (0) target = $region9
    $region8: #{name_format_forward.1} parent=1 // pred_region
      _
    $region9: #{name_format_forward.1} parent=1 // pred_fallthru
      _
    // Predicated region
    $region10: #{name_format_forward.1} parent=1 // pred_check
      _
    $region11: #{name_format_forward.1} parent=1 // pred_check_branch
      %22 = sbr.rel (0) target = $region13
    $region12: #{name_format_forward.1} parent=1 // pred_region
      _
    $region13: #{name_format_forward.1} parent=1 // pred_fallthru
      _
    // Predicated region
    $region14: #{name_format_forward.1} parent=1 // pred_check
      _
    $region15: #{name_format_forward.1} parent=1 // pred_check_branch
      %24 = sbr.rel (0) target = $region17
    $region16: #{name_format_forward.1} parent=1 // pred_region
      %26 = vsyncadd [#allocation8], 0
      %s27 = sshll.u32 %s3, 4
      %s28 = int_to_ptr.hbm [resolvable:$true] %s27
      %s29 = sshll.u32 [#allocation7], 4
      %s30 = int_to_ptr.vmem [resolvable:$true] %s29
      %35 = dma.hbm_to_vmem [thread:$0]  %s28, 8192, %s30, [#allocation8], 256, 256, 16
    $region17: #{name_format_forward.1} parent=1 // pred_fallthru
      _
    // Predicated region
    $region18: #{name_format_forward.1} parent=1 // pred_check
      _
    $region19: #{name_format_forward.1} parent=1 // pred_check_branch
      %37 = sbr.rel (0) target = $region21
    $region20: #{name_format_forward.1} parent=1 // pred_region
      %39 = vsyncadd [#allocation11], 0
      %s40 = sshll.u32 %s4, 4
      %s41 = int_to_ptr.hbm [resolvable:$true] %s40
      %s42 = sshll.u32 [#allocation10], 4
      %s43 = int_to_ptr.vmem [resolvable:$true] %s42
      %48 = dma.hbm_to_vmem [thread:$0]  %s41, 8192, %s43, [#allocation11], 256, 256, 16
    $region21: #{name_format_forward.1} parent=1 // pred_fallthru
      _
    // Predicated region
    $region22: #{name_format_forward.1} parent=1 // pred_check
      _
    $region23: #{name_format_forward.1} parent=1 // pred_check_branch
      %50 = sbr.rel (0) target = $region25
    $region24: #{name_format_forward.1} parent=1 // pred_region
      _
    $region25: #{name_format_forward.1} parent=1 // pred_fallthru
      _
    // Predicated region
    $region26: #{name_format_forward.1} parent=1 // pred_check
      _
    $region27: #{name_format_forward.1} parent=1 // pred_check_branch
      %52 = sbr.rel (0) target = $region29
    $region28: #{name_format_forward.1} parent=1 // pred_region
      _
    $region29: #{name_format_forward.1} parent=1 // pred_fallthru
      _
    // Predicated region
    $region30: #{name_format_forward.1} parent=1 // pred_check
      _
    $region31: #{name_format_forward.1} parent=1 // pred_check_branch
      %54 = sbr.rel (0) target = $region33
    $region32: #{name_format_forward.1} parent=1 // pred_region
      _
    $region33: #{name_format_forward.1} parent=1 // pred_fallthru
      _
    // Predicated region
    $region34: #{name_format_forward.1} parent=1 // pred_check
      _
    $region35: #{name_format_forward.1} parent=1 // pred_check_branch
      %56 = sbr.rel (0) target = $region37
    $region36: #{name_format_forward.1} parent=1 // pred_region
      %58 = dma.done [#allocation8], 8192
    $region37: #{name_format_forward.1} parent=1 // pred_fallthru
      _
    // Predicated region
    $region38: #{name_format_forward.1} parent=1 // pred_check
      _
    $region39: #{name_format_forward.1} parent=1 // pred_check_branch
      %60 = sbr.rel (0) target = $region41
    $region40: #{name_format_forward.1} parent=1 // pred_region
      %62 = dma.done [#allocation11], 8192
    $region41: #{name_format_forward.1} parent=1 // pred_fallthru
      _
    %s63 = sld [smem:[#allocation6]]
    %v64 = vlaneseq
    %v65 = vand.u32 %v64, 127
    %v66 = vld [vmem:[%s1] sm:$0xff]
    %v67 = vld [vmem:[%s2] sm:$0xff]
    %v68 = vld [vmem:[%s2 + $0x8] sm:$0xff]
    %v69 = vld [vmem:[%s2 + $0x10] sm:$0xff]
    %v70 = vld [vmem:[%s2 + $0x18] sm:$0xff]
    %v71 = vld [vmem:[%s2 + $0x20] sm:$0xff]
    %v72 = vld [vmem:[%s2 + $0x28] sm:$0xff]
    %v73 = vld [vmem:[%s2 + $0x30] sm:$0xff]
    %v74 = vld [vmem:[%s2 + $0x38] sm:$0xff]
    %v75 = vld [vmem:[%s2 + $0x40] sm:$0xff]
    %v76 = vld [vmem:[%s2 + $0x48] sm:$0xff]
    %v77 = vld [vmem:[%s2 + $0x50] sm:$0xff]
    %v78 = vld [vmem:[%s2 + $0x58] sm:$0xff]
    %v79 = vld [vmem:[%s2 + $0x60] sm:$0xff]
    %v80 = vld [vmem:[%s2 + $0x68] sm:$0xff]
    %v81 = vld [vmem:[%s2 + $0x70] sm:$0xff]
    %v82 = vld [vmem:[%s2 + $0x78] sm:$0xff]
    %vm83 = vcmask 523264
    %v85 = vsel %vm83, %v66, 0
    %87 = vmatpush.msra.mxu0 0.0
    %88 = vmatpush.msra.mxu0 0.0
    %89 = vmatpush.msra.mxu0 0.0
    %90 = vmatpush.msra.mxu0 0.0
    %91 = vmatpush.msra.mxu0 0.0
    %92 = vmatpush.msra.mxu0 0.0
    %93 = vmatpush.msra.mxu0 0.0
    %94 = vmatpush.msra.mxu0 0.0
    %95 = vmatpush.msra.mxu0 %v81
    %96 = vmatpush.msra.mxu0 %v79
    %97 = vmatpush.msra.mxu0 %v77
    %98 = vmatpush.msra.mxu0 %v75
    %99 = vmatpush.msra.mxu0 %v73
    %100 = vmatpush.msra.mxu0 %v71
    %101 = vmatpush.msra.mxu0 %v69
    %102 = vmatpush.msra.mxu0 %v67
    %103 = vmatmul.f32.gmra.mxu0 %v85
    %v104 = vpop.f32.mrf.mxu0
    %v105 = vadd.f32 0.0, %v104
    %106 = vdwg.mxu0
    %107 = vmatpush.msra.mxu0 0.0
    %108 = vmatpush.msra.mxu0 0.0
    %109 = vmatpush.msra.mxu0 0.0
    %110 = vmatpush.msra.mxu0 0.0
    %111 = vmatpush.msra.mxu0 0.0
    %112 = vmatpush.msra.mxu0 0.0
    %113 = vmatpush.msra.mxu0 0.0
    %114 = vmatpush.msra.mxu0 0.0
    %115 = vmatpush.msra.mxu0 %v82
    %116 = vmatpush.msra.mxu0 %v80
    %117 = vmatpush.msra.mxu0 %v78
    %118 = vmatpush.msra.mxu0 %v76
    %119 = vmatpush.msra.mxu0 %v74
    %120 = vmatpush.msra.mxu0 %v72
    %121 = vmatpush.msra.mxu0 %v70
    %122 = vmatpush.msra.mxu0 %v68
    %123 = vmatmul.f32.gmra.mxu0 %v85
    %v124 = vpop.f32.mrf.mxu0
    %v125 = vadd.f32 0.0, %v124
    %126 = vdwg.mxu0
    %127 = vst [vmem:[#allocation2] sm:$0xff] %v105
    %128 = vst [vmem:[#allocation2 + $0x8] sm:$0xff] %v125
    %v129 = vld [vmem:[#allocation7] sm:$0xff]
    %v130 = vld [vmem:[#allocation7 + $0x8] sm:$0xff]
    %v131 = vld [vmem:[#allocation7 + $0x10] sm:$0xff]
    %v132 = vld [vmem:[#allocation7 + $0x18] sm:$0xff]
    %v133 = vld [vmem:[#allocation7 + $0x20] sm:$0xff]
    %v134 = vld [vmem:[#allocation7 + $0x28] sm:$0xff]
    %v135 = vld [vmem:[#allocation7 + $0x30] sm:$0xff]
    %v136 = vld [vmem:[#allocation7 + $0x38] sm:$0xff]
    %v137 = vld [vmem:[#allocation7 + $0x40] sm:$0xff]
    %v138 = vld [vmem:[#allocation7 + $0x48] sm:$0xff]
    %v139 = vld [vmem:[#allocation7 + $0x50] sm:$0xff]
    %v140 = vld [vmem:[#allocation7 + $0x58] sm:$0xff]
    %v141 = vld [vmem:[#allocation7 + $0x60] sm:$0xff]
    %v142 = vld [vmem:[#allocation7 + $0x68] sm:$0xff]
    %v143 = vld [vmem:[#allocation7 + $0x70] sm:$0xff]
    %v144 = vld [vmem:[#allocation7 + $0x78] sm:$0xff]
    %145 = vmatpush.msra.mxu0 0.0
    %146 = vmatpush.msra.mxu0 0.0
    %147 = vmatpush.msra.mxu0 0.0
    %148 = vmatpush.msra.mxu0 0.0
    %149 = vmatpush.msra.mxu0 0.0
    %150 = vmatpush.msra.mxu0 0.0
    %151 = vmatpush.msra.mxu0 0.0
    %152 = vmatpush.msra.mxu0 0.0
    %153 = vmatpush.msra.mxu0 %v143
    %154 = vmatpush.msra.mxu0 %v141
    %155 = vmatpush.msra.mxu0 %v139
    %156 = vmatpush.msra.mxu0 %v137
    %157 = vmatpush.msra.mxu0 %v135
    %158 = vmatpush.msra.mxu0 %v133
    %159 = vmatpush.msra.mxu0 %v131
    %160 = vmatpush.msra.mxu0 %v129
    %161 = vmatmul.f32.gmra.mxu0 %v85
    %v162 = vpop.f32.mrf.mxu0
    %v163 = vadd.f32 0.0, %v162
    %164 = vdwg.mxu0
    %165 = vmatpush.msra.mxu0 0.0
    %166 = vmatpush.msra.mxu0 0.0
    %167 = vmatpush.msra.mxu0 0.0
    %168 = vmatpush.msra.mxu0 0.0
    %169 = vmatpush.msra.mxu0 0.0
    %170 = vmatpush.msra.mxu0 0.0
    %171 = vmatpush.msra.mxu0 0.0
    %172 = vmatpush.msra.mxu0 0.0
    %173 = vmatpush.msra.mxu0 %v144
    %174 = vmatpush.msra.mxu0 %v142
    %175 = vmatpush.msra.mxu0 %v140
    %176 = vmatpush.msra.mxu0 %v138
    %177 = vmatpush.msra.mxu0 %v136
    %178 = vmatpush.msra.mxu0 %v134
    %179 = vmatpush.msra.mxu0 %v132
    %180 = vmatpush.msra.mxu0 %v130
    %181 = vmatmul.f32.gmra.mxu0 %v85
    %v182 = vpop.f32.mrf.mxu0
    %v183 = vadd.f32 0.0, %v182
    %184 = vdwg.mxu0
    %185 = vst [vmem:[#allocation3] sm:$0xff] %v163
    %186 = vst [vmem:[#allocation3 + $0x8] sm:$0xff] %v183
    %v187 = vld [vmem:[#allocation10] sm:$0xff]
    %v188 = vld [vmem:[#allocation10 + $0x8] sm:$0xff]
    %v189 = vld [vmem:[#allocation10 + $0x10] sm:$0xff]
    %v190 = vld [vmem:[#allocation10 + $0x18] sm:$0xff]
    %v191 = vld [vmem:[#allocation10 + $0x20] sm:$0xff]
    %v192 = vld [vmem:[#allocation10 + $0x28] sm:$0xff]
    %v193 = vld [vmem:[#allocation10 + $0x30] sm:$0xff]
    %v194 = vld [vmem:[#allocation10 + $0x38] sm:$0xff]
    %v195 = vld [vmem:[#allocation10 + $0x40] sm:$0xff]
    %v196 = vld [vmem:[#allocation10 + $0x48] sm:$0xff]
    %v197 = vld [vmem:[#allocation10 + $0x50] sm:$0xff]
    %v198 = vld [vmem:[#allocation10 + $0x58] sm:$0xff]
    %v199 = vld [vmem:[#allocation10 + $0x60] sm:$0xff]
    %v200 = vld [vmem:[#allocation10 + $0x68] sm:$0xff]
    %v201 = vld [vmem:[#allocation10 + $0x70] sm:$0xff]
    %v202 = vld [vmem:[#allocation10 + $0x78] sm:$0xff]
    %v203 = vld [vmem:[%s5] sm:$0x3]
    %v204 = vld [vmem:[#allocation2] ss:$8 sm:$0x3]
    %s205 = scalar_lea.vmem [#allocation3], 7
    %v206 = vld [vmem:[%s205] ss:$8 sm:$0x3]
    %v207 = vadd.f32 %v204, %v206
    %v209 = vsel %vm83, 0.0, 0
    %211 = vmatpush.msra.mxu0 0.0
    %212 = vmatpush.msra.mxu0 0.0
    %213 = vmatpush.msra.mxu0 0.0
    %214 = vmatpush.msra.mxu0 0.0
    %215 = vmatpush.msra.mxu0 0.0
    %216 = vmatpush.msra.mxu0 0.0
    %217 = vmatpush.msra.mxu0 0.0
    %218 = vmatpush.msra.mxu0 0.0
    %219 = vmatpush.msra.mxu0 %v201
    %220 = vmatpush.msra.mxu0 %v199
    %221 = vmatpush.msra.mxu0 %v197
    %222 = vmatpush.msra.mxu0 %v195
    %223 = vmatpush.msra.mxu0 %v193
    %224 = vmatpush.msra.mxu0 %v191
    %225 = vmatpush.msra.mxu0 %v189
    %226 = vmatpush.msra.mxu0 %v187
    %227 = vmatmul.f32.gmra.mxu0 %v209
    %v228 = vpop.f32.mrf.mxu0
    %v229 = vadd.f32 0.0, %v228
    %230 = vdwg.mxu0
    %231 = vmatpush.msra.mxu0 0.0
    %232 = vmatpush.msra.mxu0 0.0
    %233 = vmatpush.msra.mxu0 0.0
    %234 = vmatpush.msra.mxu0 0.0
    %235 = vmatpush.msra.mxu0 0.0
    %236 = vmatpush.msra.mxu0 0.0
    %237 = vmatpush.msra.mxu0 0.0
    %238 = vmatpush.msra.mxu0 0.0
    %239 = vmatpush.msra.mxu0 %v202
    %240 = vmatpush.msra.mxu0 %v200
    %241 = vmatpush.msra.mxu0 %v198
    %242 = vmatpush.msra.mxu0 %v196
    %243 = vmatpush.msra.mxu0 %v194
    %244 = vmatpush.msra.mxu0 %v192
    %245 = vmatpush.msra.mxu0 %v190
    %246 = vmatpush.msra.mxu0 %v188
    %247 = vmatmul.f32.gmra.mxu0 %v209
    %v248 = vpop.f32.mrf.mxu0
    %v249 = vadd.f32 0.0, %v248
    %250 = vdwg.mxu0
    %v253 = vrot.slane %v249, 7
    %vm254 = vcmask 1040384
    %v255 = vsel %vm254, %v229, %v253
    %v257 = vadd.f32 %v207, %v255
    %v258 = vadd.f32 %v257, %v203
    %v259 = vxor.u32 %v258, 2147483648
    %v260 = vmul.f32 %v259, 1.442695
    %v261 = vpow.pop %v260
    %v262 = vadd.f32 %v261, 1.0
    %v263 = vrcp.pop %v262
    %v264 = vmul.f32 %v262, %v263
    %v265 = vsub.f32 1.0, %v264
    %v266 = vmul.f32 %v263, %v265
    %v267 = vadd.f32 %v263, %v266
    %vm268 = vweird.f32 %v262
    %vm269 = vweird.f32 %v263
    %vm270 = vmor %vm268, %vm269
    %v271 = vsel %vm270, %v263, %v267
    %v272 = vand.u32 2147483647, %v262
    %vm273 = vcmp.eq.f32.partialorder %v272, 8.507059e+37
    %v274 = vand.u32 %v262, 2147483648
    %v275 = vor.u32 1.1754944e-38, %v274
    %v276 = vsel %vm273, %v275, %v271
    %v277 = vmul.f32 1.0, %v276
    %279 = vrot.lane.b32.xlu0 %v258, 64
    %v280 = vpop.permute.xlu0 %279
    %v281 = vrot.slane %v280, 1
    %v283 = vtanh.pop %v281
    %v284 = vmul.f32 %v277, 0.0
    %v285 = vmul.f32 %v277, %v283
    %287 = vrot.lane.b32.xlu0 %v285, 64
    %v288 = vpop.permute.xlu0 %287
    %v290 = vadd.f32 %v284, %v288
    %v291 = vtanh.pop %v290
    %v293 = vrot.slane %v277, 1
    %296 = vrot.lane.b32.xlu0 %v291, 64
    %v297 = vpop.permute.xlu0 %296
    %v299 = vmul.f32 %v293, %v297
    %vm300 = vcmp.lt.s32.totalorder %v65, 32
    %v301 = vsel %vm300, 0, 7
    %v302 = vstv %s63
    %vm303 = vcmp.lt.s32.totalorder %v301, %v302
    %v304 = vsel %vm303, %v299, 0.0
    %v306 = vperm.slane %v290, 0
    %307 = vrot.lane.b32.xlu0 %v306, 64
    %v308 = vpop.permute.xlu0 %307
    %v310 = vsel %vm303, %v308, 0.0
    %vm311 = vcmask 516096
    %312 = vst.msk [vmem:[#allocation4] sm:$0x1] %vm311, %v304
    %s313 = scalar_lea.vmem [#allocation2], 1
    %v314 = vld [vmem:[%s313] ss:$8 sm:$0x3]
    %s315 = scalar_lea.vmem [#allocation3], 6
    %v316 = vld [vmem:[%s315] ss:$8 sm:$0x3]
    %v317 = vadd.f32 %v314, %v316
    %v319 = vsel %vm83, %v304, 0
    %321 = vmatpush.msra.mxu0 0.0
    %322 = vmatpush.msra.mxu0 0.0
    %323 = vmatpush.msra.mxu0 0.0
    %324 = vmatpush.msra.mxu0 0.0
    %325 = vmatpush.msra.mxu0 0.0
    %326 = vmatpush.msra.mxu0 0.0
    %327 = vmatpush.msra.mxu0 0.0
    %328 = vmatpush.msra.mxu0 0.0
    %329 = vmatpush.msra.mxu0 %v201
    %330 = vmatpush.msra.mxu0 %v199
    %331 = vmatpush.msra.mxu0 %v197
    %332 = vmatpush.msra.mxu0 %v195
    %333 = vmatpush.msra.mxu0 %v193
    %334 = vmatpush.msra.mxu0 %v191
    %335 = vmatpush.msra.mxu0 %v189
    %336 = vmatpush.msra.mxu0 %v187
    %337 = vmatmul.f32.gmra.mxu0 %v319
    %v338 = vpop.f32.mrf.mxu0
    %v339 = vadd.f32 0.0, %v338
    %340 = vdwg.mxu0
    %341 = vmatpush.msra.mxu0 0.0
    %342 = vmatpush.msra.mxu0 0.0
    %343 = vmatpush.msra.mxu0 0.0
    %344 = vmatpush.msra.mxu0 0.0
    %345 = vmatpush.msra.mxu0 0.0
    %346 = vmatpush.msra.mxu0 0.0
    %347 = vmatpush.msra.mxu0 0.0
    %348 = vmatpush.msra.mxu0 0.0
    %349 = vmatpush.msra.mxu0 %v202
    %350 = vmatpush.msra.mxu0 %v200
    %351 = vmatpush.msra.mxu0 %v198
    %352 = vmatpush.msra.mxu0 %v196
    %353 = vmatpush.msra.mxu0 %v194
    %354 = vmatpush.msra.mxu0 %v192
    %355 = vmatpush.msra.mxu0 %v190
    %356 = vmatpush.msra.mxu0 %v188
    %357 = vmatmul.f32.gmra.mxu0 %v319
    %v358 = vpop.f32.mrf.mxu0
    %v359 = vadd.f32 0.0, %v358
    %360 = vdwg.mxu0
    %v363 = vrot.slane %v359, 7
    %v364 = vsel %vm254, %v339, %v363
    %v366 = vadd.f32 %v317, %v364
    %v367 = vadd.f32 %v366, %v203
    %v368 = vxor.u32 %v367, 2147483648
    %v369 = vmul.f32 %v368, 1.442695
    %v370 = vpow.pop %v369
    %v371 = vadd.f32 %v370, 1.0
    %v372 = vrcp.pop %v371
    %v373 = vmul.f32 %v371, %v372
    %v374 = vsub.f32 1.0, %v373
    %v375 = vmul.f32 %v372, %v374
    %v376 = vadd.f32 %v372, %v375
    %vm377 = vweird.f32 %v371
    %vm378 = vweird.f32 %v372
    %vm379 = vmor %vm377, %vm378
    %v380 = vsel %vm379, %v372, %v376
    %v381 = vand.u32 2147483647, %v371
    %vm382 = vcmp.eq.f32.partialorder %v381, 8.507059e+37
    %v383 = vand.u32 %v371, 2147483648
    %v384 = vor.u32 1.1754944e-38, %v383
    %v385 = vsel %vm382, %v384, %v380
    %v386 = vmul.f32 1.0, %v385
    %388 = vrot.lane.b32.xlu0 %v367, 64
    %v389 = vpop.permute.xlu0 %388
    %v390 = vrot.slane %v389, 1
    %v392 = vtanh.pop %v390
    %394 = vrot.lane.b32.xlu0 %v310, 64
    %v395 = vpop.permute.xlu0 %394
    %v397 = vmul.f32 %v386, %v395
    %v398 = vmul.f32 %v386, %v392
    %400 = vrot.lane.b32.xlu0 %v398, 64
    %v401 = vpop.permute.xlu0 %400
    %v403 = vadd.f32 %v397, %v401
    %v404 = vtanh.pop %v403
    %v406 = vrot.slane %v386, 1
    %409 = vrot.lane.b32.xlu0 %v404, 64
    %v410 = vpop.permute.xlu0 %409
    %v412 = vmul.f32 %v406, %v410
    %v413 = vsel %vm300, 1, 6
    %vm414 = vcmp.lt.s32.totalorder %v413, %v302
    %v415 = vsel %vm414, %v412, %v304
    %v417 = vperm.slane %v403, 0
    %418 = vrot.lane.b32.xlu0 %v417, 64
    %v419 = vpop.permute.xlu0 %418
    %v421 = vsel %vm414, %v419, %v310
    %422 = vst.msk [vmem:[#allocation4 + $0x1] sm:$0x1] %vm311, %v415
    %s423 = scalar_lea.vmem [#allocation2], 2
    %v424 = vld [vmem:[%s423] ss:$8 sm:$0x3]
    %s425 = scalar_lea.vmem [#allocation3], 5
    %v426 = vld [vmem:[%s425] ss:$8 sm:$0x3]
    %v427 = vadd.f32 %v424, %v426
    %v429 = vsel %vm83, %v415, 0
    %431 = vmatpush.msra.mxu0 0.0
    %432 = vmatpush.msra.mxu0 0.0
    %433 = vmatpush.msra.mxu0 0.0
    %434 = vmatpush.msra.mxu0 0.0
    %435 = vmatpush.msra.mxu0 0.0
    %436 = vmatpush.msra.mxu0 0.0
    %437 = vmatpush.msra.mxu0 0.0
    %438 = vmatpush.msra.mxu0 0.0
    %439 = vmatpush.msra.mxu0 %v201
    %440 = vmatpush.msra.mxu0 %v199
    %441 = vmatpush.msra.mxu0 %v197
    %442 = vmatpush.msra.mxu0 %v195
    %443 = vmatpush.msra.mxu0 %v193
    %444 = vmatpush.msra.mxu0 %v191
    %445 = vmatpush.msra.mxu0 %v189
    %446 = vmatpush.msra.mxu0 %v187
    %447 = vmatmul.f32.gmra.mxu0 %v429
    %v448 = vpop.f32.mrf.mxu0
    %v449 = vadd.f32 0.0, %v448
    %450 = vdwg.mxu0
    %451 = vmatpush.msra.mxu0 0.0
    %452 = vmatpush.msra.mxu0 0.0
    %453 = vmatpush.msra.mxu0 0.0
    %454 = vmatpush.msra.mxu0 0.0
    %455 = vmatpush.msra.mxu0 0.0
    %456 = vmatpush.msra.mxu0 0.0
    %457 = vmatpush.msra.mxu0 0.0
    %458 = vmatpush.msra.mxu0 0.0
    %459 = vmatpush.msra.mxu0 %v202
    %460 = vmatpush.msra.mxu0 %v200
    %461 = vmatpush.msra.mxu0 %v198
    %462 = vmatpush.msra.mxu0 %v196
    %463 = vmatpush.msra.mxu0 %v194
    %464 = vmatpush.msra.mxu0 %v192
    %465 = vmatpush.msra.mxu0 %v190
    %466 = vmatpush.msra.mxu0 %v188
    %467 = vmatmul.f32.gmra.mxu0 %v429
    %v468 = vpop.f32.mrf.mxu0
    %v469 = vadd.f32 0.0, %v468
    %470 = vdwg.mxu0
    %v473 = vrot.slane %v469, 7
    %v474 = vsel %vm254, %v449, %v473
    %v476 = vadd.f32 %v427, %v474
    %v477 = vadd.f32 %v476, %v203
    %v478 = vxor.u32 %v477, 2147483648
    %v479 = vmul.f32 %v478, 1.442695
    %v480 = vpow.pop %v479
    %v481 = vadd.f32 %v480, 1.0
    %v482 = vrcp.pop %v481
    %v483 = vmul.f32 %v481, %v482
    %v484 = vsub.f32 1.0, %v483
    %v485 = vmul.f32 %v482, %v484
    %v486 = vadd.f32 %v482, %v485
    %vm487 = vweird.f32 %v481
    %vm488 = vweird.f32 %v482
    %vm489 = vmor %vm487, %vm488
    %v490 = vsel %vm489, %v482, %v486
    %v491 = vand.u32 2147483647, %v481
    %vm492 = vcmp.eq.f32.partialorder %v491, 8.507059e+37
    %v493 = vand.u32 %v481, 2147483648
    %v494 = vor.u32 1.1754944e-38, %v493
    %v495 = vsel %vm492, %v494, %v490
    %v496 = vmul.f32 1.0, %v495
    %498 = vrot.lane.b32.xlu0 %v477, 64
    %v499 = vpop.permute.xlu0 %498
    %v500 = vrot.slane %v499, 1
    %v502 = vtanh.pop %v500
    %504 = vrot.lane.b32.xlu0 %v421, 64
    %v505 = vpop.permute.xlu0 %504
    %v507 = vmul.f32 %v496, %v505
    %v508 = vmul.f32 %v496, %v502
    %510 = vrot.lane.b32.xlu0 %v508, 64
    %v511 = vpop.permute.xlu0 %510
    %v513 = vadd.f32 %v507, %v511
    %v514 = vtanh.pop %v513
    %v516 = vrot.slane %v496, 1
    %519 = vrot.lane.b32.xlu0 %v514, 64
    %v520 = vpop.permute.xlu0 %519
    %v522 = vmul.f32 %v516, %v520
    %v523 = vsel %vm300, 2, 5
    %vm524 = vcmp.lt.s32.totalorder %v523, %v302
    %v525 = vsel %vm524, %v522, %v415
    %v527 = vperm.slane %v513, 0
    %528 = vrot.lane.b32.xlu0 %v527, 64
    %v529 = vpop.permute.xlu0 %528
    %v531 = vsel %vm524, %v529, %v421
    %532 = vst.msk [vmem:[#allocation4 + $0x2] sm:$0x1] %vm311, %v525
    %s533 = scalar_lea.vmem [#allocation2], 3
    %v534 = vld [vmem:[%s533] ss:$8 sm:$0x3]
    %s535 = scalar_lea.vmem [#allocation3], 4
    %v536 = vld [vmem:[%s535] ss:$8 sm:$0x3]
    %v537 = vadd.f32 %v534, %v536
    %v539 = vsel %vm83, %v525, 0
    %541 = vmatpush.msra.mxu0 0.0
    %542 = vmatpush.msra.mxu0 0.0
    %543 = vmatpush.msra.mxu0 0.0
    %544 = vmatpush.msra.mxu0 0.0
    %545 = vmatpush.msra.mxu0 0.0
    %546 = vmatpush.msra.mxu0 0.0
    %547 = vmatpush.msra.mxu0 0.0
    %548 = vmatpush.msra.mxu0 0.0
    %549 = vmatpush.msra.mxu0 %v201
    %550 = vmatpush.msra.mxu0 %v199
    %551 = vmatpush.msra.mxu0 %v197
    %552 = vmatpush.msra.mxu0 %v195
    %553 = vmatpush.msra.mxu0 %v193
    %554 = vmatpush.msra.mxu0 %v191
    %555 = vmatpush.msra.mxu0 %v189
    %556 = vmatpush.msra.mxu0 %v187
    %557 = vmatmul.f32.gmra.mxu0 %v539
    %v558 = vpop.f32.mrf.mxu0
    %v559 = vadd.f32 0.0, %v558
    %560 = vdwg.mxu0
    %561 = vmatpush.msra.mxu0 0.0
    %562 = vmatpush.msra.mxu0 0.0
    %563 = vmatpush.msra.mxu0 0.0
    %564 = vmatpush.msra.mxu0 0.0
    %565 = vmatpush.msra.mxu0 0.0
    %566 = vmatpush.msra.mxu0 0.0
    %567 = vmatpush.msra.mxu0 0.0
    %568 = vmatpush.msra.mxu0 0.0
    %569 = vmatpush.msra.mxu0 %v202
    %570 = vmatpush.msra.mxu0 %v200
    %571 = vmatpush.msra.mxu0 %v198
    %572 = vmatpush.msra.mxu0 %v196
    %573 = vmatpush.msra.mxu0 %v194
    %574 = vmatpush.msra.mxu0 %v192
    %575 = vmatpush.msra.mxu0 %v190
    %576 = vmatpush.msra.mxu0 %v188
    %577 = vmatmul.f32.gmra.mxu0 %v539
    %v578 = vpop.f32.mrf.mxu0
    %v579 = vadd.f32 0.0, %v578
    %580 = vdwg.mxu0
    %v583 = vrot.slane %v579, 7
    %v584 = vsel %vm254, %v559, %v583
    %v586 = vadd.f32 %v537, %v584
    %v587 = vadd.f32 %v586, %v203
    %v588 = vxor.u32 %v587, 2147483648
    %v589 = vmul.f32 %v588, 1.442695
    %v590 = vpow.pop %v589
    %v591 = vadd.f32 %v590, 1.0
    %v592 = vrcp.pop %v591
    %v593 = vmul.f32 %v591, %v592
    %v594 = vsub.f32 1.0, %v593
    %v595 = vmul.f32 %v592, %v594
    %v596 = vadd.f32 %v592, %v595
    %vm597 = vweird.f32 %v591
    %vm598 = vweird.f32 %v592
    %vm599 = vmor %vm597, %vm598
    %v600 = vsel %vm599, %v592, %v596
    %v601 = vand.u32 2147483647, %v591
    %vm602 = vcmp.eq.f32.partialorder %v601, 8.507059e+37
    %v603 = vand.u32 %v591, 2147483648
    %v604 = vor.u32 1.1754944e-38, %v603
    %v605 = vsel %vm602, %v604, %v600
    %v606 = vmul.f32 1.0, %v605
    %608 = vrot.lane.b32.xlu0 %v587, 64
    %v609 = vpop.permute.xlu0 %608
    %v610 = vrot.slane %v609, 1
    %v612 = vtanh.pop %v610
    %614 = vrot.lane.b32.xlu0 %v531, 64
    %v615 = vpop.permute.xlu0 %614
    %v617 = vmul.f32 %v606, %v615
    %v618 = vmul.f32 %v606, %v612
    %620 = vrot.lane.b32.xlu0 %v618, 64
    %v621 = vpop.permute.xlu0 %620
    %v623 = vadd.f32 %v617, %v621
    %v624 = vtanh.pop %v623
    %v626 = vrot.slane %v606, 1
    %629 = vrot.lane.b32.xlu0 %v624, 64
    %v630 = vpop.permute.xlu0 %629
    %v632 = vmul.f32 %v626, %v630
    %v633 = vsel %vm300, 3, 4
    %vm634 = vcmp.lt.s32.totalorder %v633, %v302
    %v635 = vsel %vm634, %v632, %v525
    %v637 = vperm.slane %v623, 0
    %638 = vrot.lane.b32.xlu0 %v637, 64
    %v639 = vpop.permute.xlu0 %638
    %v641 = vsel %vm634, %v639, %v531
    %642 = vst.msk [vmem:[#allocation4 + $0x3] sm:$0x1] %vm311, %v635
    %s643 = scalar_lea.vmem [#allocation2], 4
    %v644 = vld [vmem:[%s643] ss:$8 sm:$0x3]
    %s645 = scalar_lea.vmem [#allocation3], 3
    %v646 = vld [vmem:[%s645] ss:$8 sm:$0x3]
    %v647 = vadd.f32 %v644, %v646
    %v649 = vsel %vm83, %v635, 0
    %651 = vmatpush.msra.mxu0 0.0
    %652 = vmatpush.msra.mxu0 0.0
    %653 = vmatpush.msra.mxu0 0.0
    %654 = vmatpush.msra.mxu0 0.0
    %655 = vmatpush.msra.mxu0 0.0
    %656 = vmatpush.msra.mxu0 0.0
    %657 = vmatpush.msra.mxu0 0.0
    %658 = vmatpush.msra.mxu0 0.0
    %659 = vmatpush.msra.mxu0 %v201
    %660 = vmatpush.msra.mxu0 %v199
    %661 = vmatpush.msra.mxu0 %v197
    %662 = vmatpush.msra.mxu0 %v195
    %663 = vmatpush.msra.mxu0 %v193
    %664 = vmatpush.msra.mxu0 %v191
    %665 = vmatpush.msra.mxu0 %v189
    %666 = vmatpush.msra.mxu0 %v187
    %667 = vmatmul.f32.gmra.mxu0 %v649
    %v668 = vpop.f32.mrf.mxu0
    %v669 = vadd.f32 0.0, %v668
    %670 = vdwg.mxu0
    %671 = vmatpush.msra.mxu0 0.0
    %672 = vmatpush.msra.mxu0 0.0
    %673 = vmatpush.msra.mxu0 0.0
    %674 = vmatpush.msra.mxu0 0.0
    %675 = vmatpush.msra.mxu0 0.0
    %676 = vmatpush.msra.mxu0 0.0
    %677 = vmatpush.msra.mxu0 0.0
    %678 = vmatpush.msra.mxu0 0.0
    %679 = vmatpush.msra.mxu0 %v202
    %680 = vmatpush.msra.mxu0 %v200
    %681 = vmatpush.msra.mxu0 %v198
    %682 = vmatpush.msra.mxu0 %v196
    %683 = vmatpush.msra.mxu0 %v194
    %684 = vmatpush.msra.mxu0 %v192
    %685 = vmatpush.msra.mxu0 %v190
    %686 = vmatpush.msra.mxu0 %v188
    %687 = vmatmul.f32.gmra.mxu0 %v649
    %v688 = vpop.f32.mrf.mxu0
    %v689 = vadd.f32 0.0, %v688
    %690 = vdwg.mxu0
    %v693 = vrot.slane %v689, 7
    %v694 = vsel %vm254, %v669, %v693
    %v696 = vadd.f32 %v647, %v694
    %v697 = vadd.f32 %v696, %v203
    %v698 = vxor.u32 %v697, 2147483648
    %v699 = vmul.f32 %v698, 1.442695
    %v700 = vpow.pop %v699
    %v701 = vadd.f32 %v700, 1.0
    %v702 = vrcp.pop %v701
    %v703 = vmul.f32 %v701, %v702
    %v704 = vsub.f32 1.0, %v703
    %v705 = vmul.f32 %v702, %v704
    %v706 = vadd.f32 %v702, %v705
    %vm707 = vweird.f32 %v701
    %vm708 = vweird.f32 %v702
    %vm709 = vmor %vm707, %vm708
    %v710 = vsel %vm709, %v702, %v706
    %v711 = vand.u32 2147483647, %v701
    %vm712 = vcmp.eq.f32.partialorder %v711, 8.507059e+37
    %v713 = vand.u32 %v701, 2147483648
    %v714 = vor.u32 1.1754944e-38, %v713
    %v715 = vsel %vm712, %v714, %v710
    %v716 = vmul.f32 1.0, %v715
    %718 = vrot.lane.b32.xlu0 %v697, 64
    %v719 = vpop.permute.xlu0 %718
    %v720 = vrot.slane %v719, 1
    %v722 = vtanh.pop %v720
    %724 = vrot.lane.b32.xlu0 %v641, 64
    %v725 = vpop.permute.xlu0 %724
    %v727 = vmul.f32 %v716, %v725
    %v728 = vmul.f32 %v716, %v722
    %730 = vrot.lane.b32.xlu0 %v728, 64
    %v731 = vpop.permute.xlu0 %730
    %v733 = vadd.f32 %v727, %v731
    %v734 = vtanh.pop %v733
    %v736 = vrot.slane %v716, 1
    %739 = vrot.lane.b32.xlu0 %v734, 64
    %v740 = vpop.permute.xlu0 %739
    %v742 = vmul.f32 %v736, %v740
    %v743 = vsel %vm300, 4, 3
    %vm744 = vcmp.lt.s32.totalorder %v743, %v302
    %v745 = vsel %vm744, %v742, %v635
    %v747 = vperm.slane %v733, 0
    %748 = vrot.lane.b32.xlu0 %v747, 64
    %v749 = vpop.permute.xlu0 %748
    %v751 = vsel %vm744, %v749, %v641
    %752 = vst.msk [vmem:[#allocation4 + $0x4] sm:$0x1] %vm311, %v745
    %s753 = scalar_lea.vmem [#allocation2], 5
    %v754 = vld [vmem:[%s753] ss:$8 sm:$0x3]
    %s755 = scalar_lea.vmem [#allocation3], 2
    %v756 = vld [vmem:[%s755] ss:$8 sm:$0x3]
    %v757 = vadd.f32 %v754, %v756
    %v759 = vsel %vm83, %v745, 0
    %761 = vmatpush.msra.mxu0 0.0
    %762 = vmatpush.msra.mxu0 0.0
    %763 = vmatpush.msra.mxu0 0.0
    %764 = vmatpush.msra.mxu0 0.0
    %765 = vmatpush.msra.mxu0 0.0
    %766 = vmatpush.msra.mxu0 0.0
    %767 = vmatpush.msra.mxu0 0.0
    %768 = vmatpush.msra.mxu0 0.0
    %769 = vmatpush.msra.mxu0 %v201
    %770 = vmatpush.msra.mxu0 %v199
    %771 = vmatpush.msra.mxu0 %v197
    %772 = vmatpush.msra.mxu0 %v195
    %773 = vmatpush.msra.mxu0 %v193
    %774 = vmatpush.msra.mxu0 %v191
    %775 = vmatpush.msra.mxu0 %v189
    %776 = vmatpush.msra.mxu0 %v187
    %777 = vmatmul.f32.gmra.mxu0 %v759
    %v778 = vpop.f32.mrf.mxu0
    %v779 = vadd.f32 0.0, %v778
    %780 = vdwg.mxu0
    %781 = vmatpush.msra.mxu0 0.0
    %782 = vmatpush.msra.mxu0 0.0
    %783 = vmatpush.msra.mxu0 0.0
    %784 = vmatpush.msra.mxu0 0.0
    %785 = vmatpush.msra.mxu0 0.0
    %786 = vmatpush.msra.mxu0 0.0
    %787 = vmatpush.msra.mxu0 0.0
    %788 = vmatpush.msra.mxu0 0.0
    %789 = vmatpush.msra.mxu0 %v202
    %790 = vmatpush.msra.mxu0 %v200
    %791 = vmatpush.msra.mxu0 %v198
    %792 = vmatpush.msra.mxu0 %v196
    %793 = vmatpush.msra.mxu0 %v194
    %794 = vmatpush.msra.mxu0 %v192
    %795 = vmatpush.msra.mxu0 %v190
    %796 = vmatpush.msra.mxu0 %v188
    %797 = vmatmul.f32.gmra.mxu0 %v759
    %v798 = vpop.f32.mrf.mxu0
    %v799 = vadd.f32 0.0, %v798
    %800 = vdwg.mxu0
    %v803 = vrot.slane %v799, 7
    %v804 = vsel %vm254, %v779, %v803
    %v806 = vadd.f32 %v757, %v804
    %v807 = vadd.f32 %v806, %v203
    %v808 = vxor.u32 %v807, 2147483648
    %v809 = vmul.f32 %v808, 1.442695
    %v810 = vpow.pop %v809
    %v811 = vadd.f32 %v810, 1.0
    %v812 = vrcp.pop %v811
    %v813 = vmul.f32 %v811, %v812
    %v814 = vsub.f32 1.0, %v813
    %v815 = vmul.f32 %v812, %v814
    %v816 = vadd.f32 %v812, %v815
    %vm817 = vweird.f32 %v811
    %vm818 = vweird.f32 %v812
    %vm819 = vmor %vm817, %vm818
    %v820 = vsel %vm819, %v812, %v816
    %v821 = vand.u32 2147483647, %v811
    %vm822 = vcmp.eq.f32.partialorder %v821, 8.507059e+37
    %v823 = vand.u32 %v811, 2147483648
    %v824 = vor.u32 1.1754944e-38, %v823
    %v825 = vsel %vm822, %v824, %v820
    %v826 = vmul.f32 1.0, %v825
    %828 = vrot.lane.b32.xlu0 %v807, 64
    %v829 = vpop.permute.xlu0 %828
    %v830 = vrot.slane %v829, 1
    %v832 = vtanh.pop %v830
    %834 = vrot.lane.b32.xlu0 %v751, 64
    %v835 = vpop.permute.xlu0 %834
    %v837 = vmul.f32 %v826, %v835
    %v838 = vmul.f32 %v826, %v832
    %840 = vrot.lane.b32.xlu0 %v838, 64
    %v841 = vpop.permute.xlu0 %840
    %v843 = vadd.f32 %v837, %v841
    %v844 = vtanh.pop %v843
    %v846 = vrot.slane %v826, 1
    %849 = vrot.lane.b32.xlu0 %v844, 64
    %v850 = vpop.permute.xlu0 %849
    %v852 = vmul.f32 %v846, %v850
    %v853 = vsel %vm300, 5, 2
    %vm854 = vcmp.lt.s32.totalorder %v853, %v302
    %v855 = vsel %vm854, %v852, %v745
    %v857 = vperm.slane %v843, 0
    %858 = vrot.lane.b32.xlu0 %v857, 64
    %v859 = vpop.permute.xlu0 %858
    %v861 = vsel %vm854, %v859, %v751
    %862 = vst.msk [vmem:[#allocation4 + $0x5] sm:$0x1] %vm311, %v855
    %s863 = scalar_lea.vmem [#allocation2], 6
    %v864 = vld [vmem:[%s863] ss:$8 sm:$0x3]
    %s865 = scalar_lea.vmem [#allocation3], 1
    %v866 = vld [vmem:[%s865] ss:$8 sm:$0x3]
    %v867 = vadd.f32 %v864, %v866
    %v869 = vsel %vm83, %v855, 0
    %871 = vmatpush.msra.mxu0 0.0
    %872 = vmatpush.msra.mxu0 0.0
    %873 = vmatpush.msra.mxu0 0.0
    %874 = vmatpush.msra.mxu0 0.0
    %875 = vmatpush.msra.mxu0 0.0
    %876 = vmatpush.msra.mxu0 0.0
    %877 = vmatpush.msra.mxu0 0.0
    %878 = vmatpush.msra.mxu0 0.0
    %879 = vmatpush.msra.mxu0 %v201
    %880 = vmatpush.msra.mxu0 %v199
    %881 = vmatpush.msra.mxu0 %v197
    %882 = vmatpush.msra.mxu0 %v195
    %883 = vmatpush.msra.mxu0 %v193
    %884 = vmatpush.msra.mxu0 %v191
    %885 = vmatpush.msra.mxu0 %v189
    %886 = vmatpush.msra.mxu0 %v187
    %887 = vmatmul.f32.gmra.mxu0 %v869
    %v888 = vpop.f32.mrf.mxu0
    %v889 = vadd.f32 0.0, %v888
    %890 = vdwg.mxu0
    %891 = vmatpush.msra.mxu0 0.0
    %892 = vmatpush.msra.mxu0 0.0
    %893 = vmatpush.msra.mxu0 0.0
    %894 = vmatpush.msra.mxu0 0.0
    %895 = vmatpush.msra.mxu0 0.0
    %896 = vmatpush.msra.mxu0 0.0
    %897 = vmatpush.msra.mxu0 0.0
    %898 = vmatpush.msra.mxu0 0.0
    %899 = vmatpush.msra.mxu0 %v202
    %900 = vmatpush.msra.mxu0 %v200
    %901 = vmatpush.msra.mxu0 %v198
    %902 = vmatpush.msra.mxu0 %v196
    %903 = vmatpush.msra.mxu0 %v194
    %904 = vmatpush.msra.mxu0 %v192
    %905 = vmatpush.msra.mxu0 %v190
    %906 = vmatpush.msra.mxu0 %v188
    %907 = vmatmul.f32.gmra.mxu0 %v869
    %v908 = vpop.f32.mrf.mxu0
    %v909 = vadd.f32 0.0, %v908
    %910 = vdwg.mxu0
    %v913 = vrot.slane %v909, 7
    %v914 = vsel %vm254, %v889, %v913
    %v916 = vadd.f32 %v867, %v914
    %v917 = vadd.f32 %v916, %v203
    %v918 = vxor.u32 %v917, 2147483648
    %v919 = vmul.f32 %v918, 1.442695
    %v920 = vpow.pop %v919
    %v921 = vadd.f32 %v920, 1.0
    %v922 = vrcp.pop %v921
    %v923 = vmul.f32 %v921, %v922
    %v924 = vsub.f32 1.0, %v923
    %v925 = vmul.f32 %v922, %v924
    %v926 = vadd.f32 %v922, %v925
    %vm927 = vweird.f32 %v921
    %vm928 = vweird.f32 %v922
    %vm929 = vmor %vm927, %vm928
    %v930 = vsel %vm929, %v922, %v926
    %v931 = vand.u32 2147483647, %v921
    %vm932 = vcmp.eq.f32.partialorder %v931, 8.507059e+37
    %v933 = vand.u32 %v921, 2147483648
    %v934 = vor.u32 1.1754944e-38, %v933
    %v935 = vsel %vm932, %v934, %v930
    %v936 = vmul.f32 1.0, %v935
    %938 = vrot.lane.b32.xlu0 %v917, 64
    %v939 = vpop.permute.xlu0 %938
    %v940 = vrot.slane %v939, 1
    %v942 = vtanh.pop %v940
    %944 = vrot.lane.b32.xlu0 %v861, 64
    %v945 = vpop.permute.xlu0 %944
    %v947 = vmul.f32 %v936, %v945
    %v948 = vmul.f32 %v936, %v942
    %950 = vrot.lane.b32.xlu0 %v948, 64
    %v951 = vpop.permute.xlu0 %950
    %v953 = vadd.f32 %v947, %v951
    %v954 = vtanh.pop %v953
    %v956 = vrot.slane %v936, 1
    %959 = vrot.lane.b32.xlu0 %v954, 64
    %v960 = vpop.permute.xlu0 %959
    %v962 = vmul.f32 %v956, %v960
    %v963 = vsel %vm300, 6, 1
    %vm964 = vcmp.lt.s32.totalorder %v963, %v302
    %v965 = vsel %vm964, %v962, %v855
    %v967 = vperm.slane %v953, 0
    %968 = vrot.lane.b32.xlu0 %v967, 64
    %v969 = vpop.permute.xlu0 %968
    %v971 = vsel %vm964, %v969, %v861
    %972 = vst.msk [vmem:[#allocation4 + $0x6] sm:$0x1] %vm311, %v965
    %s973 = scalar_lea.vmem [#allocation2], 7
    %v974 = vld [vmem:[%s973] ss:$8 sm:$0x3]
    %v975 = vld [vmem:[#allocation3] ss:$8 sm:$0x3]
    %v976 = vadd.f32 %v974, %v975
    %v978 = vsel %vm83, %v965, 0
    %980 = vmatpush.msra.mxu0 0.0
    %981 = vmatpush.msra.mxu0 0.0
    %982 = vmatpush.msra.mxu0 0.0
    %983 = vmatpush.msra.mxu0 0.0
    %984 = vmatpush.msra.mxu0 0.0
    %985 = vmatpush.msra.mxu0 0.0
    %986 = vmatpush.msra.mxu0 0.0
    %987 = vmatpush.msra.mxu0 0.0
    %988 = vmatpush.msra.mxu0 %v201
    %989 = vmatpush.msra.mxu0 %v199
    %990 = vmatpush.msra.mxu0 %v197
    %991 = vmatpush.msra.mxu0 %v195
    %992 = vmatpush.msra.mxu0 %v193
    %993 = vmatpush.msra.mxu0 %v191
    %994 = vmatpush.msra.mxu0 %v189
    %995 = vmatpush.msra.mxu0 %v187
    %996 = vmatmul.f32.gmra.mxu0 %v978
    %v997 = vpop.f32.mrf.mxu0
    %v998 = vadd.f32 0.0, %v997
    %999 = vdwg.mxu0
    %1000 = vmatpush.msra.mxu0 0.0
    %1001 = vmatpush.msra.mxu0 0.0
    %1002 = vmatpush.msra.mxu0 0.0
    %1003 = vmatpush.msra.mxu0 0.0
    %1004 = vmatpush.msra.mxu0 0.0
    %1005 = vmatpush.msra.mxu0 0.0
    %1006 = vmatpush.msra.mxu0 0.0
    %1007 = vmatpush.msra.mxu0 0.0
    %1008 = vmatpush.msra.mxu0 %v202
    %1009 = vmatpush.msra.mxu0 %v200
    %1010 = vmatpush.msra.mxu0 %v198
    %1011 = vmatpush.msra.mxu0 %v196
    %1012 = vmatpush.msra.mxu0 %v194
    %1013 = vmatpush.msra.mxu0 %v192
    %1014 = vmatpush.msra.mxu0 %v190
    %1015 = vmatpush.msra.mxu0 %v188
    %1016 = vmatmul.f32.gmra.mxu0 %v978
    %v1017 = vpop.f32.mrf.mxu0
    %v1018 = vadd.f32 0.0, %v1017
    %1019 = vdwg.mxu0
    %v1022 = vrot.slane %v1018, 7
    %v1023 = vsel %vm254, %v998, %v1022
    %v1025 = vadd.f32 %v976, %v1023
    %v1026 = vadd.f32 %v1025, %v203
    %v1027 = vxor.u32 %v1026, 2147483648
    %v1028 = vmul.f32 %v1027, 1.442695
    %v1029 = vpow.pop %v1028
    %v1030 = vadd.f32 %v1029, 1.0
    %v1031 = vrcp.pop %v1030
    %v1032 = vmul.f32 %v1030, %v1031
    %v1033 = vsub.f32 1.0, %v1032
    %v1034 = vmul.f32 %v1031, %v1033
    %v1035 = vadd.f32 %v1031, %v1034
    %vm1036 = vweird.f32 %v1030
    %vm1037 = vweird.f32 %v1031
    %vm1038 = vmor %vm1036, %vm1037
    %v1039 = vsel %vm1038, %v1031, %v1035
    %v1040 = vand.u32 2147483647, %v1030
    %vm1041 = vcmp.eq.f32.partialorder %v1040, 8.507059e+37
    %v1042 = vand.u32 %v1030, 2147483648
    %v1043 = vor.u32 1.1754944e-38, %v1042
    %v1044 = vsel %vm1041, %v1043, %v1039
    %v1045 = vmul.f32 1.0, %v1044
    %1047 = vrot.lane.b32.xlu0 %v1026, 64
    %v1048 = vpop.permute.xlu0 %1047
    %v1049 = vrot.slane %v1048, 1
    %v1051 = vtanh.pop %v1049
    %1053 = vrot.lane.b32.xlu0 %v971, 64
    %v1054 = vpop.permute.xlu0 %1053
    %v1056 = vmul.f32 %v1045, %v1054
    %v1057 = vmul.f32 %v1045, %v1051
    %1059 = vrot.lane.b32.xlu0 %v1057, 64
    %v1060 = vpop.permute.xlu0 %1059
    %v1062 = vadd.f32 %v1056, %v1060
    %v1063 = vtanh.pop %v1062
    %v1065 = vrot.slane %v1045, 1
    %1068 = vrot.lane.b32.xlu0 %v1063, 64
    %v1069 = vpop.permute.xlu0 %1068
    %v1071 = vmul.f32 %v1065, %v1069
    %v1072 = vsel %vm300, 7, 0
    %vm1073 = vcmp.lt.s32.totalorder %v1072, %v302
    %v1074 = vsel %vm1073, %v1071, %v965
    %v1076 = vperm.slane %v1062, 0
    %1077 = vrot.lane.b32.xlu0 %v1076, 64
    %v1078 = vpop.permute.xlu0 %1077
    %v1080 = vsel %vm1073, %v1078, %v971
    %1081 = vst.msk [vmem:[#allocation4 + $0x7] sm:$0x1] %vm311, %v1074
    %v1082 = vld [vmem:[#allocation4] sm:$0xff]
    %s1083 = scalar_lea.vmem %s2, 128
    %v1084 = vld [vmem:[%s1083] sm:$0xff]
    %v1085 = vld [vmem:[%s1083 + $0x8] sm:$0xff]
    %v1086 = vld [vmem:[%s1083 + $0x10] sm:$0xff]
    %v1087 = vld [vmem:[%s1083 + $0x18] sm:$0xff]
    %v1088 = vld [vmem:[%s1083 + $0x20] sm:$0xff]
    %v1089 = vld [vmem:[%s1083 + $0x28] sm:$0xff]
    %v1090 = vld [vmem:[%s1083 + $0x30] sm:$0xff]
    %v1091 = vld [vmem:[%s1083 + $0x38] sm:$0xff]
    %v1092 = vld [vmem:[%s1083 + $0x40] sm:$0xff]
    %v1093 = vld [vmem:[%s1083 + $0x48] sm:$0xff]
    %v1094 = vld [vmem:[%s1083 + $0x50] sm:$0xff]
    %v1095 = vld [vmem:[%s1083 + $0x58] sm:$0xff]
    %v1096 = vld [vmem:[%s1083 + $0x60] sm:$0xff]
    %v1097 = vld [vmem:[%s1083 + $0x68] sm:$0xff]
    %v1098 = vld [vmem:[%s1083 + $0x70] sm:$0xff]
    %v1099 = vld [vmem:[%s1083 + $0x78] sm:$0xff]
    %v1101 = vsel %vm83, %v1082, 0
    %1103 = vmatpush.msra.mxu0 0.0
    %1104 = vmatpush.msra.mxu0 0.0
    %1105 = vmatpush.msra.mxu0 0.0
    %1106 = vmatpush.msra.mxu0 0.0
    %1107 = vmatpush.msra.mxu0 0.0
    %1108 = vmatpush.msra.mxu0 0.0
    %1109 = vmatpush.msra.mxu0 0.0
    %1110 = vmatpush.msra.mxu0 0.0
    %1111 = vmatpush.msra.mxu0 %v1098
    %1112 = vmatpush.msra.mxu0 %v1096
    %1113 = vmatpush.msra.mxu0 %v1094
    %1114 = vmatpush.msra.mxu0 %v1092
    %1115 = vmatpush.msra.mxu0 %v1090
    %1116 = vmatpush.msra.mxu0 %v1088
    %1117 = vmatpush.msra.mxu0 %v1086
    %1118 = vmatpush.msra.mxu0 %v1084
    %1119 = vmatmul.f32.gmra.mxu0 %v1101
    %v1120 = vpop.f32.mrf.mxu0
    %v1121 = vadd.f32 0.0, %v1120
    %1122 = vdwg.mxu0
    %1123 = vmatpush.msra.mxu0 0.0
    %1124 = vmatpush.msra.mxu0 0.0
    %1125 = vmatpush.msra.mxu0 0.0
    %1126 = vmatpush.msra.mxu0 0.0
    %1127 = vmatpush.msra.mxu0 0.0
    %1128 = vmatpush.msra.mxu0 0.0
    %1129 = vmatpush.msra.mxu0 0.0
    %1130 = vmatpush.msra.mxu0 0.0
    %1131 = vmatpush.msra.mxu0 %v1099
    %1132 = vmatpush.msra.mxu0 %v1097
    %1133 = vmatpush.msra.mxu0 %v1095
    %1134 = vmatpush.msra.mxu0 %v1093
    %1135 = vmatpush.msra.mxu0 %v1091
    %1136 = vmatpush.msra.mxu0 %v1089
    %1137 = vmatpush.msra.mxu0 %v1087
    %1138 = vmatpush.msra.mxu0 %v1085
    %1139 = vmatmul.f32.gmra.mxu0 %v1101
    %v1140 = vpop.f32.mrf.mxu0
    %v1141 = vadd.f32 0.0, %v1140
    %1142 = vdwg.mxu0
    %1143 = vst [vmem:[#allocation2] sm:$0xff] %v1121
    %1144 = vst [vmem:[#allocation2 + $0x8] sm:$0xff] %v1141
    %s1145 = scalar_lea.vmem [#allocation7], 128
    %v1146 = vld [vmem:[%s1145] sm:$0xff]
    %v1147 = vld [vmem:[%s1145 + $0x8] sm:$0xff]
    %v1148 = vld [vmem:[%s1145 + $0x10] sm:$0xff]
    %v1149 = vld [vmem:[%s1145 + $0x18] sm:$0xff]
    %v1150 = vld [vmem:[%s1145 + $0x20] sm:$0xff]
    %v1151 = vld [vmem:[%s1145 + $0x28] sm:$0xff]
    %v1152 = vld [vmem:[%s1145 + $0x30] sm:$0xff]
    %v1153 = vld [vmem:[%s1145 + $0x38] sm:$0xff]
    %v1154 = vld [vmem:[%s1145 + $0x40] sm:$0xff]
    %v1155 = vld [vmem:[%s1145 + $0x48] sm:$0xff]
    %v1156 = vld [vmem:[%s1145 + $0x50] sm:$0xff]
    %v1157 = vld [vmem:[%s1145 + $0x58] sm:$0xff]
    %v1158 = vld [vmem:[%s1145 + $0x60] sm:$0xff]
    %v1159 = vld [vmem:[%s1145 + $0x68] sm:$0xff]
    %v1160 = vld [vmem:[%s1145 + $0x70] sm:$0xff]
    %v1161 = vld [vmem:[%s1145 + $0x78] sm:$0xff]
    %1162 = vmatpush.msra.mxu0 0.0
    %1163 = vmatpush.msra.mxu0 0.0
    %1164 = vmatpush.msra.mxu0 0.0
    %1165 = vmatpush.msra.mxu0 0.0
    %1166 = vmatpush.msra.mxu0 0.0
    %1167 = vmatpush.msra.mxu0 0.0
    %1168 = vmatpush.msra.mxu0 0.0
    %1169 = vmatpush.msra.mxu0 0.0
    %1170 = vmatpush.msra.mxu0 %v1160
    %1171 = vmatpush.msra.mxu0 %v1158
    %1172 = vmatpush.msra.mxu0 %v1156
    %1173 = vmatpush.msra.mxu0 %v1154
    %1174 = vmatpush.msra.mxu0 %v1152
    %1175 = vmatpush.msra.mxu0 %v1150
    %1176 = vmatpush.msra.mxu0 %v1148
    %1177 = vmatpush.msra.mxu0 %v1146
    %1178 = vmatmul.f32.gmra.mxu0 %v1101
    %v1179 = vpop.f32.mrf.mxu0
    %v1180 = vadd.f32 0.0, %v1179
    %1181 = vdwg.mxu0
    %1182 = vmatpush.msra.mxu0 0.0
    %1183 = vmatpush.msra.mxu0 0.0
    %1184 = vmatpush.msra.mxu0 0.0
    %1185 = vmatpush.msra.mxu0 0.0
    %1186 = vmatpush.msra.mxu0 0.0
    %1187 = vmatpush.msra.mxu0 0.0
    %1188 = vmatpush.msra.mxu0 0.0
    %1189 = vmatpush.msra.mxu0 0.0
    %1190 = vmatpush.msra.mxu0 %v1161
    %1191 = vmatpush.msra.mxu0 %v1159
    %1192 = vmatpush.msra.mxu0 %v1157
    %1193 = vmatpush.msra.mxu0 %v1155
    %1194 = vmatpush.msra.mxu0 %v1153
    %1195 = vmatpush.msra.mxu0 %v1151
    %1196 = vmatpush.msra.mxu0 %v1149
    %1197 = vmatpush.msra.mxu0 %v1147
    %1198 = vmatmul.f32.gmra.mxu0 %v1101
    %v1199 = vpop.f32.mrf.mxu0
    %v1200 = vadd.f32 0.0, %v1199
    %1201 = vdwg.mxu0
    %1202 = vst [vmem:[#allocation3] sm:$0xff] %v1180
    %1203 = vst [vmem:[#allocation3 + $0x8] sm:$0xff] %v1200
    %s1204 = scalar_lea.vmem [#allocation10], 128
    %v1205 = vld [vmem:[%s1204] sm:$0xff]
    %v1206 = vld [vmem:[%s1204 + $0x8] sm:$0xff]
    %v1207 = vld [vmem:[%s1204 + $0x10] sm:$0xff]
    %v1208 = vld [vmem:[%s1204 + $0x18] sm:$0xff]
    %v1209 = vld [vmem:[%s1204 + $0x20] sm:$0xff]
    %v1210 = vld [vmem:[%s1204 + $0x28] sm:$0xff]
    %v1211 = vld [vmem:[%s1204 + $0x30] sm:$0xff]
    %v1212 = vld [vmem:[%s1204 + $0x38] sm:$0xff]
    %v1213 = vld [vmem:[%s1204 + $0x40] sm:$0xff]
    %v1214 = vld [vmem:[%s1204 + $0x48] sm:$0xff]
    %v1215 = vld [vmem:[%s1204 + $0x50] sm:$0xff]
    %v1216 = vld [vmem:[%s1204 + $0x58] sm:$0xff]
    %v1217 = vld [vmem:[%s1204 + $0x60] sm:$0xff]
    %v1218 = vld [vmem:[%s1204 + $0x68] sm:$0xff]
    %v1219 = vld [vmem:[%s1204 + $0x70] sm:$0xff]
    %v1220 = vld [vmem:[%s1204 + $0x78] sm:$0xff]
    %s1221 = scalar_lea.vmem %s5, 2
    %v1222 = vld [vmem:[%s1221] sm:$0x3]
    %v1223 = vld [vmem:[#allocation2] ss:$8 sm:$0x3]
    %v1224 = vld [vmem:[%s205] ss:$8 sm:$0x3]
    %v1225 = vadd.f32 %v1223, %v1224
    %1226 = vmatpush.msra.mxu0 0.0
    %1227 = vmatpush.msra.mxu0 0.0
    %1228 = vmatpush.msra.mxu0 0.0
    %1229 = vmatpush.msra.mxu0 0.0
    %1230 = vmatpush.msra.mxu0 0.0
    %1231 = vmatpush.msra.mxu0 0.0
    %1232 = vmatpush.msra.mxu0 0.0
    %1233 = vmatpush.msra.mxu0 0.0
    %1234 = vmatpush.msra.mxu0 %v1219
    %1235 = vmatpush.msra.mxu0 %v1217
    %1236 = vmatpush.msra.mxu0 %v1215
    %1237 = vmatpush.msra.mxu0 %v1213
    %1238 = vmatpush.msra.mxu0 %v1211
    %1239 = vmatpush.msra.mxu0 %v1209
    %1240 = vmatpush.msra.mxu0 %v1207
    %1241 = vmatpush.msra.mxu0 %v1205
    %1242 = vmatmul.f32.gmra.mxu0 %v209
    %v1243 = vpop.f32.mrf.mxu0
    %v1244 = vadd.f32 0.0, %v1243
    %1245 = vdwg.mxu0
    %1246 = vmatpush.msra.mxu0 0.0
    %1247 = vmatpush.msra.mxu0 0.0
    %1248 = vmatpush.msra.mxu0 0.0
    %1249 = vmatpush.msra.mxu0 0.0
    %1250 = vmatpush.msra.mxu0 0.0
    %1251 = vmatpush.msra.mxu0 0.0
    %1252 = vmatpush.msra.mxu0 0.0
    %1253 = vmatpush.msra.mxu0 0.0
    %1254 = vmatpush.msra.mxu0 %v1220
    %1255 = vmatpush.msra.mxu0 %v1218
    %1256 = vmatpush.msra.mxu0 %v1216
    %1257 = vmatpush.msra.mxu0 %v1214
    %1258 = vmatpush.msra.mxu0 %v1212
    %1259 = vmatpush.msra.mxu0 %v1210
    %1260 = vmatpush.msra.mxu0 %v1208
    %1261 = vmatpush.msra.mxu0 %v1206
    %1262 = vmatmul.f32.gmra.mxu0 %v209
    %v1263 = vpop.f32.mrf.mxu0
    %v1264 = vadd.f32 0.0, %v1263
    %1265 = vdwg.mxu0
    %v1268 = vrot.slane %v1264, 7
    %v1269 = vsel %vm254, %v1244, %v1268
    %v1271 = vadd.f32 %v1225, %v1269
    %v1272 = vadd.f32 %v1271, %v1222
    %v1273 = vxor.u32 %v1272, 2147483648
    %v1274 = vmul.f32 %v1273, 1.442695
    %v1275 = vpow.pop %v1274
    %v1276 = vadd.f32 %v1275, 1.0
    %v1277 = vrcp.pop %v1276
    %v1278 = vmul.f32 %v1276, %v1277
    %v1279 = vsub.f32 1.0, %v1278
    %v1280 = vmul.f32 %v1277, %v1279
    %v1281 = vadd.f32 %v1277, %v1280
    %vm1282 = vweird.f32 %v1276
    %vm1283 = vweird.f32 %v1277
    %vm1284 = vmor %vm1282, %vm1283
    %v1285 = vsel %vm1284, %v1277, %v1281
    %v1286 = vand.u32 2147483647, %v1276
    %vm1287 = vcmp.eq.f32.partialorder %v1286, 8.507059e+37
    %v1288 = vand.u32 %v1276, 2147483648
    %v1289 = vor.u32 1.1754944e-38, %v1288
    %v1290 = vsel %vm1287, %v1289, %v1285
    %v1291 = vmul.f32 1.0, %v1290
    %1293 = vrot.lane.b32.xlu0 %v1272, 64
    %v1294 = vpop.permute.xlu0 %1293
    %v1295 = vrot.slane %v1294, 1
    %v1297 = vtanh.pop %v1295
    %v1298 = vmul.f32 %v1291, 0.0
    %v1299 = vmul.f32 %v1291, %v1297
    %1301 = vrot.lane.b32.xlu0 %v1299, 64
    %v1302 = vpop.permute.xlu0 %1301
    %v1304 = vadd.f32 %v1298, %v1302
    %v1305 = vtanh.pop %v1304
    %v1307 = vrot.slane %v1291, 1
    %1310 = vrot.lane.b32.xlu0 %v1305, 64
    %v1311 = vpop.permute.xlu0 %1310
    %v1313 = vmul.f32 %v1307, %v1311
    %v1314 = vsel %vm303, %v1313, 0.0
    %v1316 = vperm.slane %v1304, 0
    %1317 = vrot.lane.b32.xlu0 %v1316, 64
    %v1318 = vpop.permute.xlu0 %1317
    %v1320 = vsel %vm303, %v1318, 0.0
    %1321 = vst.msk [vmem:[#allocation5] sm:$0x1] %vm311, %v1314
    %v1322 = vld [vmem:[%s313] ss:$8 sm:$0x3]
    %v1323 = vld [vmem:[%s315] ss:$8 sm:$0x3]
    %v1324 = vadd.f32 %v1322, %v1323
    %v1326 = vsel %vm83, %v1314, 0
    %1328 = vmatpush.msra.mxu0 0.0
    %1329 = vmatpush.msra.mxu0 0.0
    %1330 = vmatpush.msra.mxu0 0.0
    %1331 = vmatpush.msra.mxu0 0.0
    %1332 = vmatpush.msra.mxu0 0.0
    %1333 = vmatpush.msra.mxu0 0.0
    %1334 = vmatpush.msra.mxu0 0.0
    %1335 = vmatpush.msra.mxu0 0.0
    %1336 = vmatpush.msra.mxu0 %v1219
    %1337 = vmatpush.msra.mxu0 %v1217
    %1338 = vmatpush.msra.mxu0 %v1215
    %1339 = vmatpush.msra.mxu0 %v1213
    %1340 = vmatpush.msra.mxu0 %v1211
    %1341 = vmatpush.msra.mxu0 %v1209
    %1342 = vmatpush.msra.mxu0 %v1207
    %1343 = vmatpush.msra.mxu0 %v1205
    %1344 = vmatmul.f32.gmra.mxu0 %v1326
    %v1345 = vpop.f32.mrf.mxu0
    %v1346 = vadd.f32 0.0, %v1345
    %1347 = vdwg.mxu0
    %1348 = vmatpush.msra.mxu0 0.0
    %1349 = vmatpush.msra.mxu0 0.0
    %1350 = vmatpush.msra.mxu0 0.0
    %1351 = vmatpush.msra.mxu0 0.0
    %1352 = vmatpush.msra.mxu0 0.0
    %1353 = vmatpush.msra.mxu0 0.0
    %1354 = vmatpush.msra.mxu0 0.0
    %1355 = vmatpush.msra.mxu0 0.0
    %1356 = vmatpush.msra.mxu0 %v1220
    %1357 = vmatpush.msra.mxu0 %v1218
    %1358 = vmatpush.msra.mxu0 %v1216
    %1359 = vmatpush.msra.mxu0 %v1214
    %1360 = vmatpush.msra.mxu0 %v1212
    %1361 = vmatpush.msra.mxu0 %v1210
    %1362 = vmatpush.msra.mxu0 %v1208
    %1363 = vmatpush.msra.mxu0 %v1206
    %1364 = vmatmul.f32.gmra.mxu0 %v1326
    %v1365 = vpop.f32.mrf.mxu0
    %v1366 = vadd.f32 0.0, %v1365
    %1367 = vdwg.mxu0
    %v1370 = vrot.slane %v1366, 7
    %v1371 = vsel %vm254, %v1346, %v1370
    %v1373 = vadd.f32 %v1324, %v1371
    %v1374 = vadd.f32 %v1373, %v1222
    %v1375 = vxor.u32 %v1374, 2147483648
    %v1376 = vmul.f32 %v1375, 1.442695
    %v1377 = vpow.pop %v1376
    %v1378 = vadd.f32 %v1377, 1.0
    %v1379 = vrcp.pop %v1378
    %v1380 = vmul.f32 %v1378, %v1379
    %v1381 = vsub.f32 1.0, %v1380
    %v1382 = vmul.f32 %v1379, %v1381
    %v1383 = vadd.f32 %v1379, %v1382
    %vm1384 = vweird.f32 %v1378
    %vm1385 = vweird.f32 %v1379
    %vm1386 = vmor %vm1384, %vm1385
    %v1387 = vsel %vm1386, %v1379, %v1383
    %v1388 = vand.u32 2147483647, %v1378
    %vm1389 = vcmp.eq.f32.partialorder %v1388, 8.507059e+37
    %v1390 = vand.u32 %v1378, 2147483648
    %v1391 = vor.u32 1.1754944e-38, %v1390
    %v1392 = vsel %vm1389, %v1391, %v1387
    %v1393 = vmul.f32 1.0, %v1392
    %1395 = vrot.lane.b32.xlu0 %v1374, 64
    %v1396 = vpop.permute.xlu0 %1395
    %v1397 = vrot.slane %v1396, 1
    %v1399 = vtanh.pop %v1397
    %1401 = vrot.lane.b32.xlu0 %v1320, 64
    %v1402 = vpop.permute.xlu0 %1401
    %v1404 = vmul.f32 %v1393, %v1402
    %v1405 = vmul.f32 %v1393, %v1399
    %1407 = vrot.lane.b32.xlu0 %v1405, 64
    %v1408 = vpop.permute.xlu0 %1407
    %v1410 = vadd.f32 %v1404, %v1408
    %v1411 = vtanh.pop %v1410
    %v1413 = vrot.slane %v1393, 1
    %1416 = vrot.lane.b32.xlu0 %v1411, 64
    %v1417 = vpop.permute.xlu0 %1416
    %v1419 = vmul.f32 %v1413, %v1417
    %v1420 = vsel %vm414, %v1419, %v1314
    %v1422 = vperm.slane %v1410, 0
    %1423 = vrot.lane.b32.xlu0 %v1422, 64
    %v1424 = vpop.permute.xlu0 %1423
    %v1426 = vsel %vm414, %v1424, %v1320
    %1427 = vst.msk [vmem:[#allocation5 + $0x1] sm:$0x1] %vm311, %v1420
    %v1428 = vld [vmem:[%s423] ss:$8 sm:$0x3]
    %v1429 = vld [vmem:[%s425] ss:$8 sm:$0x3]
    %v1430 = vadd.f32 %v1428, %v1429
    %v1432 = vsel %vm83, %v1420, 0
    %1434 = vmatpush.msra.mxu0 0.0
    %1435 = vmatpush.msra.mxu0 0.0
    %1436 = vmatpush.msra.mxu0 0.0
    %1437 = vmatpush.msra.mxu0 0.0
    %1438 = vmatpush.msra.mxu0 0.0
    %1439 = vmatpush.msra.mxu0 0.0
    %1440 = vmatpush.msra.mxu0 0.0
    %1441 = vmatpush.msra.mxu0 0.0
    %1442 = vmatpush.msra.mxu0 %v1219
    %1443 = vmatpush.msra.mxu0 %v1217
    %1444 = vmatpush.msra.mxu0 %v1215
    %1445 = vmatpush.msra.mxu0 %v1213
    %1446 = vmatpush.msra.mxu0 %v1211
    %1447 = vmatpush.msra.mxu0 %v1209
    %1448 = vmatpush.msra.mxu0 %v1207
    %1449 = vmatpush.msra.mxu0 %v1205
    %1450 = vmatmul.f32.gmra.mxu0 %v1432
    %v1451 = vpop.f32.mrf.mxu0
    %v1452 = vadd.f32 0.0, %v1451
    %1453 = vdwg.mxu0
    %1454 = vmatpush.msra.mxu0 0.0
    %1455 = vmatpush.msra.mxu0 0.0
    %1456 = vmatpush.msra.mxu0 0.0
    %1457 = vmatpush.msra.mxu0 0.0
    %1458 = vmatpush.msra.mxu0 0.0
    %1459 = vmatpush.msra.mxu0 0.0
    %1460 = vmatpush.msra.mxu0 0.0
    %1461 = vmatpush.msra.mxu0 0.0
    %1462 = vmatpush.msra.mxu0 %v1220
    %1463 = vmatpush.msra.mxu0 %v1218
    %1464 = vmatpush.msra.mxu0 %v1216
    %1465 = vmatpush.msra.mxu0 %v1214
    %1466 = vmatpush.msra.mxu0 %v1212
    %1467 = vmatpush.msra.mxu0 %v1210
    %1468 = vmatpush.msra.mxu0 %v1208
    %1469 = vmatpush.msra.mxu0 %v1206
    %1470 = vmatmul.f32.gmra.mxu0 %v1432
    %v1471 = vpop.f32.mrf.mxu0
    %v1472 = vadd.f32 0.0, %v1471
    %1473 = vdwg.mxu0
    %v1476 = vrot.slane %v1472, 7
    %v1477 = vsel %vm254, %v1452, %v1476
    %v1479 = vadd.f32 %v1430, %v1477
    %v1480 = vadd.f32 %v1479, %v1222
    %v1481 = vxor.u32 %v1480, 2147483648
    %v1482 = vmul.f32 %v1481, 1.442695
    %v1483 = vpow.pop %v1482
    %v1484 = vadd.f32 %v1483, 1.0
    %v1485 = vrcp.pop %v1484
    %v1486 = vmul.f32 %v1484, %v1485
    %v1487 = vsub.f32 1.0, %v1486
    %v1488 = vmul.f32 %v1485, %v1487
    %v1489 = vadd.f32 %v1485, %v1488
    %vm1490 = vweird.f32 %v1484
    %vm1491 = vweird.f32 %v1485
    %vm1492 = vmor %vm1490, %vm1491
    %v1493 = vsel %vm1492, %v1485, %v1489
    %v1494 = vand.u32 2147483647, %v1484
    %vm1495 = vcmp.eq.f32.partialorder %v1494, 8.507059e+37
    %v1496 = vand.u32 %v1484, 2147483648
    %v1497 = vor.u32 1.1754944e-38, %v1496
    %v1498 = vsel %vm1495, %v1497, %v1493
    %v1499 = vmul.f32 1.0, %v1498
    %1501 = vrot.lane.b32.xlu0 %v1480, 64
    %v1502 = vpop.permute.xlu0 %1501
    %v1503 = vrot.slane %v1502, 1
    %v1505 = vtanh.pop %v1503
    %1507 = vrot.lane.b32.xlu0 %v1426, 64
    %v1508 = vpop.permute.xlu0 %1507
    %v1510 = vmul.f32 %v1499, %v1508
    %v1511 = vmul.f32 %v1499, %v1505
    %1513 = vrot.lane.b32.xlu0 %v1511, 64
    %v1514 = vpop.permute.xlu0 %1513
    %v1516 = vadd.f32 %v1510, %v1514
    %v1517 = vtanh.pop %v1516
    %v1519 = vrot.slane %v1499, 1
    %1522 = vrot.lane.b32.xlu0 %v1517, 64
    %v1523 = vpop.permute.xlu0 %1522
    %v1525 = vmul.f32 %v1519, %v1523
    %v1526 = vsel %vm524, %v1525, %v1420
    %v1528 = vperm.slane %v1516, 0
    %1529 = vrot.lane.b32.xlu0 %v1528, 64
    %v1530 = vpop.permute.xlu0 %1529
    %v1532 = vsel %vm524, %v1530, %v1426
    %1533 = vst.msk [vmem:[#allocation5 + $0x2] sm:$0x1] %vm311, %v1526
    %v1534 = vld [vmem:[%s533] ss:$8 sm:$0x3]
    %v1535 = vld [vmem:[%s535] ss:$8 sm:$0x3]
    %v1536 = vadd.f32 %v1534, %v1535
    %v1538 = vsel %vm83, %v1526, 0
    %1540 = vmatpush.msra.mxu0 0.0
    %1541 = vmatpush.msra.mxu0 0.0
    %1542 = vmatpush.msra.mxu0 0.0
    %1543 = vmatpush.msra.mxu0 0.0
    %1544 = vmatpush.msra.mxu0 0.0
    %1545 = vmatpush.msra.mxu0 0.0
    %1546 = vmatpush.msra.mxu0 0.0
    %1547 = vmatpush.msra.mxu0 0.0
    %1548 = vmatpush.msra.mxu0 %v1219
    %1549 = vmatpush.msra.mxu0 %v1217
    %1550 = vmatpush.msra.mxu0 %v1215
    %1551 = vmatpush.msra.mxu0 %v1213
    %1552 = vmatpush.msra.mxu0 %v1211
    %1553 = vmatpush.msra.mxu0 %v1209
    %1554 = vmatpush.msra.mxu0 %v1207
    %1555 = vmatpush.msra.mxu0 %v1205
    %1556 = vmatmul.f32.gmra.mxu0 %v1538
    %v1557 = vpop.f32.mrf.mxu0
    %v1558 = vadd.f32 0.0, %v1557
    %1559 = vdwg.mxu0
    %1560 = vmatpush.msra.mxu0 0.0
    %1561 = vmatpush.msra.mxu0 0.0
    %1562 = vmatpush.msra.mxu0 0.0
    %1563 = vmatpush.msra.mxu0 0.0
    %1564 = vmatpush.msra.mxu0 0.0
    %1565 = vmatpush.msra.mxu0 0.0
    %1566 = vmatpush.msra.mxu0 0.0
    %1567 = vmatpush.msra.mxu0 0.0
    %1568 = vmatpush.msra.mxu0 %v1220
    %1569 = vmatpush.msra.mxu0 %v1218
    %1570 = vmatpush.msra.mxu0 %v1216
    %1571 = vmatpush.msra.mxu0 %v1214
    %1572 = vmatpush.msra.mxu0 %v1212
    %1573 = vmatpush.msra.mxu0 %v1210
    %1574 = vmatpush.msra.mxu0 %v1208
    %1575 = vmatpush.msra.mxu0 %v1206
    %1576 = vmatmul.f32.gmra.mxu0 %v1538
    %v1577 = vpop.f32.mrf.mxu0
    %v1578 = vadd.f32 0.0, %v1577
    %1579 = vdwg.mxu0
    %v1582 = vrot.slane %v1578, 7
    %v1583 = vsel %vm254, %v1558, %v1582
    %v1585 = vadd.f32 %v1536, %v1583
    %v1586 = vadd.f32 %v1585, %v1222
    %v1587 = vxor.u32 %v1586, 2147483648
    %v1588 = vmul.f32 %v1587, 1.442695
    %v1589 = vpow.pop %v1588
    %v1590 = vadd.f32 %v1589, 1.0
    %v1591 = vrcp.pop %v1590
    %v1592 = vmul.f32 %v1590, %v1591
    %v1593 = vsub.f32 1.0, %v1592
    %v1594 = vmul.f32 %v1591, %v1593
    %v1595 = vadd.f32 %v1591, %v1594
    %vm1596 = vweird.f32 %v1590
    %vm1597 = vweird.f32 %v1591
    %vm1598 = vmor %vm1596, %vm1597
    %v1599 = vsel %vm1598, %v1591, %v1595
    %v1600 = vand.u32 2147483647, %v1590
    %vm1601 = vcmp.eq.f32.partialorder %v1600, 8.507059e+37
    %v1602 = vand.u32 %v1590, 2147483648
    %v1603 = vor.u32 1.1754944e-38, %v1602
    %v1604 = vsel %vm1601, %v1603, %v1599
    %v1605 = vmul.f32 1.0, %v1604
    %1607 = vrot.lane.b32.xlu0 %v1586, 64
    %v1608 = vpop.permute.xlu0 %1607
    %v1609 = vrot.slane %v1608, 1
    %v1611 = vtanh.pop %v1609
    %1613 = vrot.lane.b32.xlu0 %v1532, 64
    %v1614 = vpop.permute.xlu0 %1613
    %v1616 = vmul.f32 %v1605, %v1614
    %v1617 = vmul.f32 %v1605, %v1611
    %1619 = vrot.lane.b32.xlu0 %v1617, 64
    %v1620 = vpop.permute.xlu0 %1619
    %v1622 = vadd.f32 %v1616, %v1620
    %v1623 = vtanh.pop %v1622
    %v1625 = vrot.slane %v1605, 1
    %1628 = vrot.lane.b32.xlu0 %v1623, 64
    %v1629 = vpop.permute.xlu0 %1628
    %v1631 = vmul.f32 %v1625, %v1629
    %v1632 = vsel %vm634, %v1631, %v1526
    %v1634 = vperm.slane %v1622, 0
    %1635 = vrot.lane.b32.xlu0 %v1634, 64
    %v1636 = vpop.permute.xlu0 %1635
    %v1638 = vsel %vm634, %v1636, %v1532
    %1639 = vst.msk [vmem:[#allocation5 + $0x3] sm:$0x1] %vm311, %v1632
    %v1640 = vld [vmem:[%s643] ss:$8 sm:$0x3]
    %v1641 = vld [vmem:[%s645] ss:$8 sm:$0x3]
    %v1642 = vadd.f32 %v1640, %v1641
    %v1644 = vsel %vm83, %v1632, 0
    %1646 = vmatpush.msra.mxu0 0.0
    %1647 = vmatpush.msra.mxu0 0.0
    %1648 = vmatpush.msra.mxu0 0.0
    %1649 = vmatpush.msra.mxu0 0.0
    %1650 = vmatpush.msra.mxu0 0.0
    %1651 = vmatpush.msra.mxu0 0.0
    %1652 = vmatpush.msra.mxu0 0.0
    %1653 = vmatpush.msra.mxu0 0.0
    %1654 = vmatpush.msra.mxu0 %v1219
    %1655 = vmatpush.msra.mxu0 %v1217
    %1656 = vmatpush.msra.mxu0 %v1215
    %1657 = vmatpush.msra.mxu0 %v1213
    %1658 = vmatpush.msra.mxu0 %v1211
    %1659 = vmatpush.msra.mxu0 %v1209
    %1660 = vmatpush.msra.mxu0 %v1207
    %1661 = vmatpush.msra.mxu0 %v1205
    %1662 = vmatmul.f32.gmra.mxu0 %v1644
    %v1663 = vpop.f32.mrf.mxu0
    %v1664 = vadd.f32 0.0, %v1663
    %1665 = vdwg.mxu0
    %1666 = vmatpush.msra.mxu0 0.0
    %1667 = vmatpush.msra.mxu0 0.0
    %1668 = vmatpush.msra.mxu0 0.0
    %1669 = vmatpush.msra.mxu0 0.0
    %1670 = vmatpush.msra.mxu0 0.0
    %1671 = vmatpush.msra.mxu0 0.0
    %1672 = vmatpush.msra.mxu0 0.0
    %1673 = vmatpush.msra.mxu0 0.0
    %1674 = vmatpush.msra.mxu0 %v1220
    %1675 = vmatpush.msra.mxu0 %v1218
    %1676 = vmatpush.msra.mxu0 %v1216
    %1677 = vmatpush.msra.mxu0 %v1214
    %1678 = vmatpush.msra.mxu0 %v1212
    %1679 = vmatpush.msra.mxu0 %v1210
    %1680 = vmatpush.msra.mxu0 %v1208
    %1681 = vmatpush.msra.mxu0 %v1206
    %1682 = vmatmul.f32.gmra.mxu0 %v1644
    %v1683 = vpop.f32.mrf.mxu0
    %v1684 = vadd.f32 0.0, %v1683
    %1685 = vdwg.mxu0
    %v1688 = vrot.slane %v1684, 7
    %v1689 = vsel %vm254, %v1664, %v1688
    %v1691 = vadd.f32 %v1642, %v1689
    %v1692 = vadd.f32 %v1691, %v1222
    %v1693 = vxor.u32 %v1692, 2147483648
    %v1694 = vmul.f32 %v1693, 1.442695
    %v1695 = vpow.pop %v1694
    %v1696 = vadd.f32 %v1695, 1.0
    %v1697 = vrcp.pop %v1696
    %v1698 = vmul.f32 %v1696, %v1697
    %v1699 = vsub.f32 1.0, %v1698
    %v1700 = vmul.f32 %v1697, %v1699
    %v1701 = vadd.f32 %v1697, %v1700
    %vm1702 = vweird.f32 %v1696
    %vm1703 = vweird.f32 %v1697
    %vm1704 = vmor %vm1702, %vm1703
    %v1705 = vsel %vm1704, %v1697, %v1701
    %v1706 = vand.u32 2147483647, %v1696
    %vm1707 = vcmp.eq.f32.partialorder %v1706, 8.507059e+37
    %v1708 = vand.u32 %v1696, 2147483648
    %v1709 = vor.u32 1.1754944e-38, %v1708
    %v1710 = vsel %vm1707, %v1709, %v1705
    %v1711 = vmul.f32 1.0, %v1710
    %1713 = vrot.lane.b32.xlu0 %v1692, 64
    %v1714 = vpop.permute.xlu0 %1713
    %v1715 = vrot.slane %v1714, 1
    %v1717 = vtanh.pop %v1715
    %1719 = vrot.lane.b32.xlu0 %v1638, 64
    %v1720 = vpop.permute.xlu0 %1719
    %v1722 = vmul.f32 %v1711, %v1720
    %v1723 = vmul.f32 %v1711, %v1717
    %1725 = vrot.lane.b32.xlu0 %v1723, 64
    %v1726 = vpop.permute.xlu0 %1725
    %v1728 = vadd.f32 %v1722, %v1726
    %v1729 = vtanh.pop %v1728
    %v1731 = vrot.slane %v1711, 1
    %1734 = vrot.lane.b32.xlu0 %v1729, 64
    %v1735 = vpop.permute.xlu0 %1734
    %v1737 = vmul.f32 %v1731, %v1735
    %v1738 = vsel %vm744, %v1737, %v1632
    %v1740 = vperm.slane %v1728, 0
    %1741 = vrot.lane.b32.xlu0 %v1740, 64
    %v1742 = vpop.permute.xlu0 %1741
    %v1744 = vsel %vm744, %v1742, %v1638
    %1745 = vst.msk [vmem:[#allocation5 + $0x4] sm:$0x1] %vm311, %v1738
    %v1746 = vld [vmem:[%s753] ss:$8 sm:$0x3]
    %v1747 = vld [vmem:[%s755] ss:$8 sm:$0x3]
    %v1748 = vadd.f32 %v1746, %v1747
    %v1750 = vsel %vm83, %v1738, 0
    %1752 = vmatpush.msra.mxu0 0.0
    %1753 = vmatpush.msra.mxu0 0.0
    %1754 = vmatpush.msra.mxu0 0.0
    %1755 = vmatpush.msra.mxu0 0.0
    %1756 = vmatpush.msra.mxu0 0.0
    %1757 = vmatpush.msra.mxu0 0.0
    %1758 = vmatpush.msra.mxu0 0.0
    %1759 = vmatpush.msra.mxu0 0.0
    %1760 = vmatpush.msra.mxu0 %v1219
    %1761 = vmatpush.msra.mxu0 %v1217
    %1762 = vmatpush.msra.mxu0 %v1215
    %1763 = vmatpush.msra.mxu0 %v1213
    %1764 = vmatpush.msra.mxu0 %v1211
    %1765 = vmatpush.msra.mxu0 %v1209
    %1766 = vmatpush.msra.mxu0 %v1207
    %1767 = vmatpush.msra.mxu0 %v1205
    %1768 = vmatmul.f32.gmra.mxu0 %v1750
    %v1769 = vpop.f32.mrf.mxu0
    %v1770 = vadd.f32 0.0, %v1769
    %1771 = vdwg.mxu0
    %1772 = vmatpush.msra.mxu0 0.0
    %1773 = vmatpush.msra.mxu0 0.0
    %1774 = vmatpush.msra.mxu0 0.0
    %1775 = vmatpush.msra.mxu0 0.0
    %1776 = vmatpush.msra.mxu0 0.0
    %1777 = vmatpush.msra.mxu0 0.0
    %1778 = vmatpush.msra.mxu0 0.0
    %1779 = vmatpush.msra.mxu0 0.0
    %1780 = vmatpush.msra.mxu0 %v1220
    %1781 = vmatpush.msra.mxu0 %v1218
    %1782 = vmatpush.msra.mxu0 %v1216
    %1783 = vmatpush.msra.mxu0 %v1214
    %1784 = vmatpush.msra.mxu0 %v1212
    %1785 = vmatpush.msra.mxu0 %v1210
    %1786 = vmatpush.msra.mxu0 %v1208
    %1787 = vmatpush.msra.mxu0 %v1206
    %1788 = vmatmul.f32.gmra.mxu0 %v1750
    %v1789 = vpop.f32.mrf.mxu0
    %v1790 = vadd.f32 0.0, %v1789
    %1791 = vdwg.mxu0
    %v1794 = vrot.slane %v1790, 7
    %v1795 = vsel %vm254, %v1770, %v1794
    %v1797 = vadd.f32 %v1748, %v1795
    %v1798 = vadd.f32 %v1797, %v1222
    %v1799 = vxor.u32 %v1798, 2147483648
    %v1800 = vmul.f32 %v1799, 1.442695
    %v1801 = vpow.pop %v1800
    %v1802 = vadd.f32 %v1801, 1.0
    %v1803 = vrcp.pop %v1802
    %v1804 = vmul.f32 %v1802, %v1803
    %v1805 = vsub.f32 1.0, %v1804
    %v1806 = vmul.f32 %v1803, %v1805
    %v1807 = vadd.f32 %v1803, %v1806
    %vm1808 = vweird.f32 %v1802
    %vm1809 = vweird.f32 %v1803
    %vm1810 = vmor %vm1808, %vm1809
    %v1811 = vsel %vm1810, %v1803, %v1807
    %v1812 = vand.u32 2147483647, %v1802
    %vm1813 = vcmp.eq.f32.partialorder %v1812, 8.507059e+37
    %v1814 = vand.u32 %v1802, 2147483648
    %v1815 = vor.u32 1.1754944e-38, %v1814
    %v1816 = vsel %vm1813, %v1815, %v1811
    %v1817 = vmul.f32 1.0, %v1816
    %1819 = vrot.lane.b32.xlu0 %v1798, 64
    %v1820 = vpop.permute.xlu0 %1819
    %v1821 = vrot.slane %v1820, 1
    %v1823 = vtanh.pop %v1821
    %1825 = vrot.lane.b32.xlu0 %v1744, 64
    %v1826 = vpop.permute.xlu0 %1825
    %v1828 = vmul.f32 %v1817, %v1826
    %v1829 = vmul.f32 %v1817, %v1823
    %1831 = vrot.lane.b32.xlu0 %v1829, 64
    %v1832 = vpop.permute.xlu0 %1831
    %v1834 = vadd.f32 %v1828, %v1832
    %v1835 = vtanh.pop %v1834
    %v1837 = vrot.slane %v1817, 1
    %1840 = vrot.lane.b32.xlu0 %v1835, 64
    %v1841 = vpop.permute.xlu0 %1840
    %v1843 = vmul.f32 %v1837, %v1841
    %v1844 = vsel %vm854, %v1843, %v1738
    %v1846 = vperm.slane %v1834, 0
    %1847 = vrot.lane.b32.xlu0 %v1846, 64
    %v1848 = vpop.permute.xlu0 %1847
    %v1850 = vsel %vm854, %v1848, %v1744
    %1851 = vst.msk [vmem:[#allocation5 + $0x5] sm:$0x1] %vm311, %v1844
    %v1852 = vld [vmem:[%s863] ss:$8 sm:$0x3]
    %v1853 = vld [vmem:[%s865] ss:$8 sm:$0x3]
    %v1854 = vadd.f32 %v1852, %v1853
    %v1856 = vsel %vm83, %v1844, 0
    %1858 = vmatpush.msra.mxu0 0.0
    %1859 = vmatpush.msra.mxu0 0.0
    %1860 = vmatpush.msra.mxu0 0.0
    %1861 = vmatpush.msra.mxu0 0.0
    %1862 = vmatpush.msra.mxu0 0.0
    %1863 = vmatpush.msra.mxu0 0.0
    %1864 = vmatpush.msra.mxu0 0.0
    %1865 = vmatpush.msra.mxu0 0.0
    %1866 = vmatpush.msra.mxu0 %v1219
    %1867 = vmatpush.msra.mxu0 %v1217
    %1868 = vmatpush.msra.mxu0 %v1215
    %1869 = vmatpush.msra.mxu0 %v1213
    %1870 = vmatpush.msra.mxu0 %v1211
    %1871 = vmatpush.msra.mxu0 %v1209
    %1872 = vmatpush.msra.mxu0 %v1207
    %1873 = vmatpush.msra.mxu0 %v1205
    %1874 = vmatmul.f32.gmra.mxu0 %v1856
    %v1875 = vpop.f32.mrf.mxu0
    %v1876 = vadd.f32 0.0, %v1875
    %1877 = vdwg.mxu0
    %1878 = vmatpush.msra.mxu0 0.0
    %1879 = vmatpush.msra.mxu0 0.0
    %1880 = vmatpush.msra.mxu0 0.0
    %1881 = vmatpush.msra.mxu0 0.0
    %1882 = vmatpush.msra.mxu0 0.0
    %1883 = vmatpush.msra.mxu0 0.0
    %1884 = vmatpush.msra.mxu0 0.0
    %1885 = vmatpush.msra.mxu0 0.0
    %1886 = vmatpush.msra.mxu0 %v1220
    %1887 = vmatpush.msra.mxu0 %v1218
    %1888 = vmatpush.msra.mxu0 %v1216
    %1889 = vmatpush.msra.mxu0 %v1214
    %1890 = vmatpush.msra.mxu0 %v1212
    %1891 = vmatpush.msra.mxu0 %v1210
    %1892 = vmatpush.msra.mxu0 %v1208
    %1893 = vmatpush.msra.mxu0 %v1206
    %1894 = vmatmul.f32.gmra.mxu0 %v1856
    %v1895 = vpop.f32.mrf.mxu0
    %v1896 = vadd.f32 0.0, %v1895
    %1897 = vdwg.mxu0
    %v1900 = vrot.slane %v1896, 7
    %v1901 = vsel %vm254, %v1876, %v1900
    %v1903 = vadd.f32 %v1854, %v1901
    %v1904 = vadd.f32 %v1903, %v1222
    %v1905 = vxor.u32 %v1904, 2147483648
    %v1906 = vmul.f32 %v1905, 1.442695
    %v1907 = vpow.pop %v1906
    %v1908 = vadd.f32 %v1907, 1.0
    %v1909 = vrcp.pop %v1908
    %v1910 = vmul.f32 %v1908, %v1909
    %v1911 = vsub.f32 1.0, %v1910
    %v1912 = vmul.f32 %v1909, %v1911
    %v1913 = vadd.f32 %v1909, %v1912
    %vm1914 = vweird.f32 %v1908
    %vm1915 = vweird.f32 %v1909
    %vm1916 = vmor %vm1914, %vm1915
    %v1917 = vsel %vm1916, %v1909, %v1913
    %v1918 = vand.u32 2147483647, %v1908
    %vm1919 = vcmp.eq.f32.partialorder %v1918, 8.507059e+37
    %v1920 = vand.u32 %v1908, 2147483648
    %v1921 = vor.u32 1.1754944e-38, %v1920
    %v1922 = vsel %vm1919, %v1921, %v1917
    %v1923 = vmul.f32 1.0, %v1922
    %1925 = vrot.lane.b32.xlu0 %v1904, 64
    %v1926 = vpop.permute.xlu0 %1925
    %v1927 = vrot.slane %v1926, 1
    %v1929 = vtanh.pop %v1927
    %1931 = vrot.lane.b32.xlu0 %v1850, 64
    %v1932 = vpop.permute.xlu0 %1931
    %v1934 = vmul.f32 %v1923, %v1932
    %v1935 = vmul.f32 %v1923, %v1929
    %1937 = vrot.lane.b32.xlu0 %v1935, 64
    %v1938 = vpop.permute.xlu0 %1937
    %v1940 = vadd.f32 %v1934, %v1938
    %v1941 = vtanh.pop %v1940
    %v1943 = vrot.slane %v1923, 1
    %1946 = vrot.lane.b32.xlu0 %v1941, 64
    %v1947 = vpop.permute.xlu0 %1946
    %v1949 = vmul.f32 %v1943, %v1947
    %v1950 = vsel %vm964, %v1949, %v1844
    %v1952 = vperm.slane %v1940, 0
    %1953 = vrot.lane.b32.xlu0 %v1952, 64
    %v1954 = vpop.permute.xlu0 %1953
    %v1956 = vsel %vm964, %v1954, %v1850
    %1957 = vst.msk [vmem:[#allocation5 + $0x6] sm:$0x1] %vm311, %v1950
    %v1958 = vld [vmem:[%s973] ss:$8 sm:$0x3]
    %v1959 = vld [vmem:[#allocation3] ss:$8 sm:$0x3]
    %v1960 = vadd.f32 %v1958, %v1959
    %v1962 = vsel %vm83, %v1950, 0
    %1964 = vmatpush.msra.mxu0 0.0
    %1965 = vmatpush.msra.mxu0 0.0
    %1966 = vmatpush.msra.mxu0 0.0
    %1967 = vmatpush.msra.mxu0 0.0
    %1968 = vmatpush.msra.mxu0 0.0
    %1969 = vmatpush.msra.mxu0 0.0
    %1970 = vmatpush.msra.mxu0 0.0
    %1971 = vmatpush.msra.mxu0 0.0
    %1972 = vmatpush.msra.mxu0 %v1219
    %1973 = vmatpush.msra.mxu0 %v1217
    %1974 = vmatpush.msra.mxu0 %v1215
    %1975 = vmatpush.msra.mxu0 %v1213
    %1976 = vmatpush.msra.mxu0 %v1211
    %1977 = vmatpush.msra.mxu0 %v1209
    %1978 = vmatpush.msra.mxu0 %v1207
    %1979 = vmatpush.msra.mxu0 %v1205
    %1980 = vmatmul.f32.gmra.mxu0 %v1962
    %v1981 = vpop.f32.mrf.mxu0
    %v1982 = vadd.f32 0.0, %v1981
    %1983 = vdwg.mxu0
    %1984 = vmatpush.msra.mxu0 0.0
    %1985 = vmatpush.msra.mxu0 0.0
    %1986 = vmatpush.msra.mxu0 0.0
    %1987 = vmatpush.msra.mxu0 0.0
    %1988 = vmatpush.msra.mxu0 0.0
    %1989 = vmatpush.msra.mxu0 0.0
    %1990 = vmatpush.msra.mxu0 0.0
    %1991 = vmatpush.msra.mxu0 0.0
    %1992 = vmatpush.msra.mxu0 %v1220
    %1993 = vmatpush.msra.mxu0 %v1218
    %1994 = vmatpush.msra.mxu0 %v1216
    %1995 = vmatpush.msra.mxu0 %v1214
    %1996 = vmatpush.msra.mxu0 %v1212
    %1997 = vmatpush.msra.mxu0 %v1210
    %1998 = vmatpush.msra.mxu0 %v1208
    %1999 = vmatpush.msra.mxu0 %v1206
    %2000 = vmatmul.f32.gmra.mxu0 %v1962
    %v2001 = vpop.f32.mrf.mxu0
    %v2002 = vadd.f32 0.0, %v2001
    %2003 = vdwg.mxu0
    %v2006 = vrot.slane %v2002, 7
    %v2007 = vsel %vm254, %v1982, %v2006
    %v2009 = vadd.f32 %v1960, %v2007
    %v2010 = vadd.f32 %v2009, %v1222
    %v2011 = vxor.u32 %v2010, 2147483648
    %v2012 = vmul.f32 %v2011, 1.442695
    %v2013 = vpow.pop %v2012
    %v2014 = vadd.f32 %v2013, 1.0
    %v2015 = vrcp.pop %v2014
    %v2016 = vmul.f32 %v2014, %v2015
    %v2017 = vsub.f32 1.0, %v2016
    %v2018 = vmul.f32 %v2015, %v2017
    %v2019 = vadd.f32 %v2015, %v2018
    %vm2020 = vweird.f32 %v2014
    %vm2021 = vweird.f32 %v2015
    %vm2022 = vmor %vm2020, %vm2021
    %v2023 = vsel %vm2022, %v2015, %v2019
    %v2024 = vand.u32 2147483647, %v2014
    %vm2025 = vcmp.eq.f32.partialorder %v2024, 8.507059e+37
    %v2026 = vand.u32 %v2014, 2147483648
    %v2027 = vor.u32 1.1754944e-38, %v2026
    %v2028 = vsel %vm2025, %v2027, %v2023
    %v2029 = vmul.f32 1.0, %v2028
    %2031 = vrot.lane.b32.xlu0 %v2010, 64
    %v2032 = vpop.permute.xlu0 %2031
    %v2033 = vrot.slane %v2032, 1
    %v2035 = vtanh.pop %v2033
    %2037 = vrot.lane.b32.xlu0 %v1956, 64
    %v2038 = vpop.permute.xlu0 %2037
    %v2040 = vmul.f32 %v2029, %v2038
    %v2041 = vmul.f32 %v2029, %v2035
    %2043 = vrot.lane.b32.xlu0 %v2041, 64
    %v2044 = vpop.permute.xlu0 %2043
    %v2046 = vadd.f32 %v2040, %v2044
    %v2047 = vtanh.pop %v2046
    %v2049 = vrot.slane %v2029, 1
    %2052 = vrot.lane.b32.xlu0 %v2047, 64
    %v2053 = vpop.permute.xlu0 %2052
    %v2055 = vmul.f32 %v2049, %v2053
    %v2056 = vsel %vm1073, %v2055, %v1950
    %v2058 = vperm.slane %v2046, 0
    %2059 = vrot.lane.b32.xlu0 %v2058, 64
    %v2060 = vpop.permute.xlu0 %2059
    %v2062 = vsel %vm1073, %v2060, %v1956
    %2063 = vst.msk [vmem:[#allocation5 + $0x7] sm:$0x1] %vm311, %v2056
    %v2064 = vld [vmem:[#allocation5] sm:$0xff]
    %s2065 = scalar_lea.vmem %s2, 256
    %v2066 = vld [vmem:[%s2065] sm:$0xff]
    %v2067 = vld [vmem:[%s2065 + $0x8] sm:$0xff]
    %v2068 = vld [vmem:[%s2065 + $0x10] sm:$0xff]
    %v2069 = vld [vmem:[%s2065 + $0x18] sm:$0xff]
    %v2070 = vld [vmem:[%s2065 + $0x20] sm:$0xff]
    %v2071 = vld [vmem:[%s2065 + $0x28] sm:$0xff]
    %v2072 = vld [vmem:[%s2065 + $0x30] sm:$0xff]
    %v2073 = vld [vmem:[%s2065 + $0x38] sm:$0xff]
    %v2074 = vld [vmem:[%s2065 + $0x40] sm:$0xff]
    %v2075 = vld [vmem:[%s2065 + $0x48] sm:$0xff]
    %v2076 = vld [vmem:[%s2065 + $0x50] sm:$0xff]
    %v2077 = vld [vmem:[%s2065 + $0x58] sm:$0xff]
    %v2078 = vld [vmem:[%s2065 + $0x60] sm:$0xff]
    %v2079 = vld [vmem:[%s2065 + $0x68] sm:$0xff]
    %v2080 = vld [vmem:[%s2065 + $0x70] sm:$0xff]
    %v2081 = vld [vmem:[%s2065 + $0x78] sm:$0xff]
    %v2083 = vsel %vm83, %v2064, 0
    %2085 = vmatpush.msra.mxu0 0.0
    %2086 = vmatpush.msra.mxu0 0.0
    %2087 = vmatpush.msra.mxu0 0.0
    %2088 = vmatpush.msra.mxu0 0.0
    %2089 = vmatpush.msra.mxu0 0.0
    %2090 = vmatpush.msra.mxu0 0.0
    %2091 = vmatpush.msra.mxu0 0.0
    %2092 = vmatpush.msra.mxu0 0.0
    %2093 = vmatpush.msra.mxu0 %v2080
    %2094 = vmatpush.msra.mxu0 %v2078
    %2095 = vmatpush.msra.mxu0 %v2076
    %2096 = vmatpush.msra.mxu0 %v2074
    %2097 = vmatpush.msra.mxu0 %v2072
    %2098 = vmatpush.msra.mxu0 %v2070
    %2099 = vmatpush.msra.mxu0 %v2068
    %2100 = vmatpush.msra.mxu0 %v2066
    %2101 = vmatmul.f32.gmra.mxu0 %v2083
    %v2102 = vpop.f32.mrf.mxu0
    %v2103 = vadd.f32 0.0, %v2102
    %2104 = vdwg.mxu0
    %2105 = vmatpush.msra.mxu0 0.0
    %2106 = vmatpush.msra.mxu0 0.0
    %2107 = vmatpush.msra.mxu0 0.0
    %2108 = vmatpush.msra.mxu0 0.0
    %2109 = vmatpush.msra.mxu0 0.0
    %2110 = vmatpush.msra.mxu0 0.0
    %2111 = vmatpush.msra.mxu0 0.0
    %2112 = vmatpush.msra.mxu0 0.0
    %2113 = vmatpush.msra.mxu0 %v2081
    %2114 = vmatpush.msra.mxu0 %v2079
    %2115 = vmatpush.msra.mxu0 %v2077
    %2116 = vmatpush.msra.mxu0 %v2075
    %2117 = vmatpush.msra.mxu0 %v2073
    %2118 = vmatpush.msra.mxu0 %v2071
    %2119 = vmatpush.msra.mxu0 %v2069
    %2120 = vmatpush.msra.mxu0 %v2067
    %2121 = vmatmul.f32.gmra.mxu0 %v2083
    %v2122 = vpop.f32.mrf.mxu0
    %v2123 = vadd.f32 0.0, %v2122
    %2124 = vdwg.mxu0
    %2125 = vst [vmem:[#allocation2] sm:$0xff] %v2103
    %2126 = vst [vmem:[#allocation2 + $0x8] sm:$0xff] %v2123
    %s2127 = scalar_lea.vmem [#allocation7], 256
    %v2128 = vld [vmem:[%s2127] sm:$0xff]
    %v2129 = vld [vmem:[%s2127 + $0x8] sm:$0xff]
    %v2130 = vld [vmem:[%s2127 + $0x10] sm:$0xff]
    %v2131 = vld [vmem:[%s2127 + $0x18] sm:$0xff]
    %v2132 = vld [vmem:[%s2127 + $0x20] sm:$0xff]
    %v2133 = vld [vmem:[%s2127 + $0x28] sm:$0xff]
    %v2134 = vld [vmem:[%s2127 + $0x30] sm:$0xff]
    %v2135 = vld [vmem:[%s2127 + $0x38] sm:$0xff]
    %v2136 = vld [vmem:[%s2127 + $0x40] sm:$0xff]
    %v2137 = vld [vmem:[%s2127 + $0x48] sm:$0xff]
    %v2138 = vld [vmem:[%s2127 + $0x50] sm:$0xff]
    %v2139 = vld [vmem:[%s2127 + $0x58] sm:$0xff]
    %v2140 = vld [vmem:[%s2127 + $0x60] sm:$0xff]
    %v2141 = vld [vmem:[%s2127 + $0x68] sm:$0xff]
    %v2142 = vld [vmem:[%s2127 + $0x70] sm:$0xff]
    %v2143 = vld [vmem:[%s2127 + $0x78] sm:$0xff]
    %2144 = vmatpush.msra.mxu0 0.0
    %2145 = vmatpush.msra.mxu0 0.0
    %2146 = vmatpush.msra.mxu0 0.0
    %2147 = vmatpush.msra.mxu0 0.0
    %2148 = vmatpush.msra.mxu0 0.0
    %2149 = vmatpush.msra.mxu0 0.0
    %2150 = vmatpush.msra.mxu0 0.0
    %2151 = vmatpush.msra.mxu0 0.0
    %2152 = vmatpush.msra.mxu0 %v2142
    %2153 = vmatpush.msra.mxu0 %v2140
    %2154 = vmatpush.msra.mxu0 %v2138
    %2155 = vmatpush.msra.mxu0 %v2136
    %2156 = vmatpush.msra.mxu0 %v2134
    %2157 = vmatpush.msra.mxu0 %v2132
    %2158 = vmatpush.msra.mxu0 %v2130
    %2159 = vmatpush.msra.mxu0 %v2128
    %2160 = vmatmul.f32.gmra.mxu0 %v2083
    %v2161 = vpop.f32.mrf.mxu0
    %v2162 = vadd.f32 0.0, %v2161
    %2163 = vdwg.mxu0
    %2164 = vmatpush.msra.mxu0 0.0
    %2165 = vmatpush.msra.mxu0 0.0
    %2166 = vmatpush.msra.mxu0 0.0
    %2167 = vmatpush.msra.mxu0 0.0
    %2168 = vmatpush.msra.mxu0 0.0
    %2169 = vmatpush.msra.mxu0 0.0
    %2170 = vmatpush.msra.mxu0 0.0
    %2171 = vmatpush.msra.mxu0 0.0
    %2172 = vmatpush.msra.mxu0 %v2143
    %2173 = vmatpush.msra.mxu0 %v2141
    %2174 = vmatpush.msra.mxu0 %v2139
    %2175 = vmatpush.msra.mxu0 %v2137
    %2176 = vmatpush.msra.mxu0 %v2135
    %2177 = vmatpush.msra.mxu0 %v2133
    %2178 = vmatpush.msra.mxu0 %v2131
    %2179 = vmatpush.msra.mxu0 %v2129
    %2180 = vmatmul.f32.gmra.mxu0 %v2083
    %v2181 = vpop.f32.mrf.mxu0
    %v2182 = vadd.f32 0.0, %v2181
    %2183 = vdwg.mxu0
    %2184 = vst [vmem:[#allocation3] sm:$0xff] %v2162
    %2185 = vst [vmem:[#allocation3 + $0x8] sm:$0xff] %v2182
    %s2186 = scalar_lea.vmem [#allocation10], 256
    %v2187 = vld [vmem:[%s2186] sm:$0xff]
    %v2188 = vld [vmem:[%s2186 + $0x8] sm:$0xff]
    %v2189 = vld [vmem:[%s2186 + $0x10] sm:$0xff]
    %v2190 = vld [vmem:[%s2186 + $0x18] sm:$0xff]
    %v2191 = vld [vmem:[%s2186 + $0x20] sm:$0xff]
    %v2192 = vld [vmem:[%s2186 + $0x28] sm:$0xff]
    %v2193 = vld [vmem:[%s2186 + $0x30] sm:$0xff]
    %v2194 = vld [vmem:[%s2186 + $0x38] sm:$0xff]
    %v2195 = vld [vmem:[%s2186 + $0x40] sm:$0xff]
    %v2196 = vld [vmem:[%s2186 + $0x48] sm:$0xff]
    %v2197 = vld [vmem:[%s2186 + $0x50] sm:$0xff]
    %v2198 = vld [vmem:[%s2186 + $0x58] sm:$0xff]
    %v2199 = vld [vmem:[%s2186 + $0x60] sm:$0xff]
    %v2200 = vld [vmem:[%s2186 + $0x68] sm:$0xff]
    %v2201 = vld [vmem:[%s2186 + $0x70] sm:$0xff]
    %v2202 = vld [vmem:[%s2186 + $0x78] sm:$0xff]
    %s2203 = scalar_lea.vmem %s5, 4
    %v2204 = vld [vmem:[%s2203] sm:$0x3]
    %v2205 = vld [vmem:[#allocation2] ss:$8 sm:$0x3]
    %v2206 = vld [vmem:[%s205] ss:$8 sm:$0x3]
    %v2207 = vadd.f32 %v2205, %v2206
    %2208 = vmatpush.msra.mxu0 0.0
    %2209 = vmatpush.msra.mxu0 0.0
    %2210 = vmatpush.msra.mxu0 0.0
    %2211 = vmatpush.msra.mxu0 0.0
    %2212 = vmatpush.msra.mxu0 0.0
    %2213 = vmatpush.msra.mxu0 0.0
    %2214 = vmatpush.msra.mxu0 0.0
    %2215 = vmatpush.msra.mxu0 0.0
    %2216 = vmatpush.msra.mxu0 %v2201
    %2217 = vmatpush.msra.mxu0 %v2199
    %2218 = vmatpush.msra.mxu0 %v2197
    %2219 = vmatpush.msra.mxu0 %v2195
    %2220 = vmatpush.msra.mxu0 %v2193
    %2221 = vmatpush.msra.mxu0 %v2191
    %2222 = vmatpush.msra.mxu0 %v2189
    %2223 = vmatpush.msra.mxu0 %v2187
    %2224 = vmatmul.f32.gmra.mxu0 %v209
    %v2225 = vpop.f32.mrf.mxu0
    %v2226 = vadd.f32 0.0, %v2225
    %2227 = vdwg.mxu0
    %2228 = vmatpush.msra.mxu0 0.0
    %2229 = vmatpush.msra.mxu0 0.0
    %2230 = vmatpush.msra.mxu0 0.0
    %2231 = vmatpush.msra.mxu0 0.0
    %2232 = vmatpush.msra.mxu0 0.0
    %2233 = vmatpush.msra.mxu0 0.0
    %2234 = vmatpush.msra.mxu0 0.0
    %2235 = vmatpush.msra.mxu0 0.0
    %2236 = vmatpush.msra.mxu0 %v2202
    %2237 = vmatpush.msra.mxu0 %v2200
    %2238 = vmatpush.msra.mxu0 %v2198
    %2239 = vmatpush.msra.mxu0 %v2196
    %2240 = vmatpush.msra.mxu0 %v2194
    %2241 = vmatpush.msra.mxu0 %v2192
    %2242 = vmatpush.msra.mxu0 %v2190
    %2243 = vmatpush.msra.mxu0 %v2188
    %2244 = vmatmul.f32.gmra.mxu0 %v209
    %v2245 = vpop.f32.mrf.mxu0
    %v2246 = vadd.f32 0.0, %v2245
    %2247 = vdwg.mxu0
    %v2250 = vrot.slane %v2246, 7
    %v2251 = vsel %vm254, %v2226, %v2250
    %v2253 = vadd.f32 %v2207, %v2251
    %v2254 = vadd.f32 %v2253, %v2204
    %v2255 = vxor.u32 %v2254, 2147483648
    %v2256 = vmul.f32 %v2255, 1.442695
    %v2257 = vpow.pop %v2256
    %v2258 = vadd.f32 %v2257, 1.0
    %v2259 = vrcp.pop %v2258
    %v2260 = vmul.f32 %v2258, %v2259
    %v2261 = vsub.f32 1.0, %v2260
    %v2262 = vmul.f32 %v2259, %v2261
    %v2263 = vadd.f32 %v2259, %v2262
    %vm2264 = vweird.f32 %v2258
    %vm2265 = vweird.f32 %v2259
    %vm2266 = vmor %vm2264, %vm2265
    %v2267 = vsel %vm2266, %v2259, %v2263
    %v2268 = vand.u32 2147483647, %v2258
    %vm2269 = vcmp.eq.f32.partialorder %v2268, 8.507059e+37
    %v2270 = vand.u32 %v2258, 2147483648
    %v2271 = vor.u32 1.1754944e-38, %v2270
    %v2272 = vsel %vm2269, %v2271, %v2267
    %v2273 = vmul.f32 1.0, %v2272
    %2275 = vrot.lane.b32.xlu0 %v2254, 64
    %v2276 = vpop.permute.xlu0 %2275
    %v2277 = vrot.slane %v2276, 1
    %v2279 = vtanh.pop %v2277
    %v2280 = vmul.f32 %v2273, 0.0
    %v2281 = vmul.f32 %v2273, %v2279
    %2283 = vrot.lane.b32.xlu0 %v2281, 64
    %v2284 = vpop.permute.xlu0 %2283
    %v2286 = vadd.f32 %v2280, %v2284
    %v2287 = vtanh.pop %v2286
    %v2289 = vrot.slane %v2273, 1
    %2292 = vrot.lane.b32.xlu0 %v2287, 64
    %v2293 = vpop.permute.xlu0 %2292
    %v2295 = vmul.f32 %v2289, %v2293
    %v2296 = vsel %vm303, %v2295, 0.0
    %v2298 = vperm.slane %v2286, 0
    %2299 = vrot.lane.b32.xlu0 %v2298, 64
    %v2300 = vpop.permute.xlu0 %2299
    %v2302 = vsel %vm303, %v2300, 0.0
    %2303 = vst.msk [vmem:[#allocation4] sm:$0x1] %vm311, %v2296
    %v2304 = vld [vmem:[%s313] ss:$8 sm:$0x3]
    %v2305 = vld [vmem:[%s315] ss:$8 sm:$0x3]
    %v2306 = vadd.f32 %v2304, %v2305
    %v2308 = vsel %vm83, %v2296, 0
    %2310 = vmatpush.msra.mxu0 0.0
    %2311 = vmatpush.msra.mxu0 0.0
    %2312 = vmatpush.msra.mxu0 0.0
    %2313 = vmatpush.msra.mxu0 0.0
    %2314 = vmatpush.msra.mxu0 0.0
    %2315 = vmatpush.msra.mxu0 0.0
    %2316 = vmatpush.msra.mxu0 0.0
    %2317 = vmatpush.msra.mxu0 0.0
    %2318 = vmatpush.msra.mxu0 %v2201
    %2319 = vmatpush.msra.mxu0 %v2199
    %2320 = vmatpush.msra.mxu0 %v2197
    %2321 = vmatpush.msra.mxu0 %v2195
    %2322 = vmatpush.msra.mxu0 %v2193
    %2323 = vmatpush.msra.mxu0 %v2191
    %2324 = vmatpush.msra.mxu0 %v2189
    %2325 = vmatpush.msra.mxu0 %v2187
    %2326 = vmatmul.f32.gmra.mxu0 %v2308
    %v2327 = vpop.f32.mrf.mxu0
    %v2328 = vadd.f32 0.0, %v2327
    %2329 = vdwg.mxu0
    %2330 = vmatpush.msra.mxu0 0.0
    %2331 = vmatpush.msra.mxu0 0.0
    %2332 = vmatpush.msra.mxu0 0.0
    %2333 = vmatpush.msra.mxu0 0.0
    %2334 = vmatpush.msra.mxu0 0.0
    %2335 = vmatpush.msra.mxu0 0.0
    %2336 = vmatpush.msra.mxu0 0.0
    %2337 = vmatpush.msra.mxu0 0.0
    %2338 = vmatpush.msra.mxu0 %v2202
    %2339 = vmatpush.msra.mxu0 %v2200
    %2340 = vmatpush.msra.mxu0 %v2198
    %2341 = vmatpush.msra.mxu0 %v2196
    %2342 = vmatpush.msra.mxu0 %v2194
    %2343 = vmatpush.msra.mxu0 %v2192
    %2344 = vmatpush.msra.mxu0 %v2190
    %2345 = vmatpush.msra.mxu0 %v2188
    %2346 = vmatmul.f32.gmra.mxu0 %v2308
    %v2347 = vpop.f32.mrf.mxu0
    %v2348 = vadd.f32 0.0, %v2347
    %2349 = vdwg.mxu0
    %v2352 = vrot.slane %v2348, 7
    %v2353 = vsel %vm254, %v2328, %v2352
    %v2355 = vadd.f32 %v2306, %v2353
    %v2356 = vadd.f32 %v2355, %v2204
    %v2357 = vxor.u32 %v2356, 2147483648
    %v2358 = vmul.f32 %v2357, 1.442695
    %v2359 = vpow.pop %v2358
    %v2360 = vadd.f32 %v2359, 1.0
    %v2361 = vrcp.pop %v2360
    %v2362 = vmul.f32 %v2360, %v2361
    %v2363 = vsub.f32 1.0, %v2362
    %v2364 = vmul.f32 %v2361, %v2363
    %v2365 = vadd.f32 %v2361, %v2364
    %vm2366 = vweird.f32 %v2360
    %vm2367 = vweird.f32 %v2361
    %vm2368 = vmor %vm2366, %vm2367
    %v2369 = vsel %vm2368, %v2361, %v2365
    %v2370 = vand.u32 2147483647, %v2360
    %vm2371 = vcmp.eq.f32.partialorder %v2370, 8.507059e+37
    %v2372 = vand.u32 %v2360, 2147483648
    %v2373 = vor.u32 1.1754944e-38, %v2372
    %v2374 = vsel %vm2371, %v2373, %v2369
    %v2375 = vmul.f32 1.0, %v2374
    %2377 = vrot.lane.b32.xlu0 %v2356, 64
    %v2378 = vpop.permute.xlu0 %2377
    %v2379 = vrot.slane %v2378, 1
    %v2381 = vtanh.pop %v2379
    %2383 = vrot.lane.b32.xlu0 %v2302, 64
    %v2384 = vpop.permute.xlu0 %2383
    %v2386 = vmul.f32 %v2375, %v2384
    %v2387 = vmul.f32 %v2375, %v2381
    %2389 = vrot.lane.b32.xlu0 %v2387, 64
    %v2390 = vpop.permute.xlu0 %2389
    %v2392 = vadd.f32 %v2386, %v2390
    %v2393 = vtanh.pop %v2392
    %v2395 = vrot.slane %v2375, 1
    %2398 = vrot.lane.b32.xlu0 %v2393, 64
    %v2399 = vpop.permute.xlu0 %2398
    %v2401 = vmul.f32 %v2395, %v2399
    %v2402 = vsel %vm414, %v2401, %v2296
    %v2404 = vperm.slane %v2392, 0
    %2405 = vrot.lane.b32.xlu0 %v2404, 64
    %v2406 = vpop.permute.xlu0 %2405
    %v2408 = vsel %vm414, %v2406, %v2302
    %2409 = vst.msk [vmem:[#allocation4 + $0x1] sm:$0x1] %vm311, %v2402
    %v2410 = vld [vmem:[%s423] ss:$8 sm:$0x3]
    %v2411 = vld [vmem:[%s425] ss:$8 sm:$0x3]
    %v2412 = vadd.f32 %v2410, %v2411
    %v2414 = vsel %vm83, %v2402, 0
    %2416 = vmatpush.msra.mxu0 0.0
    %2417 = vmatpush.msra.mxu0 0.0
    %2418 = vmatpush.msra.mxu0 0.0
    %2419 = vmatpush.msra.mxu0 0.0
    %2420 = vmatpush.msra.mxu0 0.0
    %2421 = vmatpush.msra.mxu0 0.0
    %2422 = vmatpush.msra.mxu0 0.0
    %2423 = vmatpush.msra.mxu0 0.0
    %2424 = vmatpush.msra.mxu0 %v2201
    %2425 = vmatpush.msra.mxu0 %v2199
    %2426 = vmatpush.msra.mxu0 %v2197
    %2427 = vmatpush.msra.mxu0 %v2195
    %2428 = vmatpush.msra.mxu0 %v2193
    %2429 = vmatpush.msra.mxu0 %v2191
    %2430 = vmatpush.msra.mxu0 %v2189
    %2431 = vmatpush.msra.mxu0 %v2187
    %2432 = vmatmul.f32.gmra.mxu0 %v2414
    %v2433 = vpop.f32.mrf.mxu0
    %v2434 = vadd.f32 0.0, %v2433
    %2435 = vdwg.mxu0
    %2436 = vmatpush.msra.mxu0 0.0
    %2437 = vmatpush.msra.mxu0 0.0
    %2438 = vmatpush.msra.mxu0 0.0
    %2439 = vmatpush.msra.mxu0 0.0
    %2440 = vmatpush.msra.mxu0 0.0
    %2441 = vmatpush.msra.mxu0 0.0
    %2442 = vmatpush.msra.mxu0 0.0
    %2443 = vmatpush.msra.mxu0 0.0
    %2444 = vmatpush.msra.mxu0 %v2202
    %2445 = vmatpush.msra.mxu0 %v2200
    %2446 = vmatpush.msra.mxu0 %v2198
    %2447 = vmatpush.msra.mxu0 %v2196
    %2448 = vmatpush.msra.mxu0 %v2194
    %2449 = vmatpush.msra.mxu0 %v2192
    %2450 = vmatpush.msra.mxu0 %v2190
    %2451 = vmatpush.msra.mxu0 %v2188
    %2452 = vmatmul.f32.gmra.mxu0 %v2414
    %v2453 = vpop.f32.mrf.mxu0
    %v2454 = vadd.f32 0.0, %v2453
    %2455 = vdwg.mxu0
    %v2458 = vrot.slane %v2454, 7
    %v2459 = vsel %vm254, %v2434, %v2458
    %v2461 = vadd.f32 %v2412, %v2459
    %v2462 = vadd.f32 %v2461, %v2204
    %v2463 = vxor.u32 %v2462, 2147483648
    %v2464 = vmul.f32 %v2463, 1.442695
    %v2465 = vpow.pop %v2464
    %v2466 = vadd.f32 %v2465, 1.0
    %v2467 = vrcp.pop %v2466
    %v2468 = vmul.f32 %v2466, %v2467
    %v2469 = vsub.f32 1.0, %v2468
    %v2470 = vmul.f32 %v2467, %v2469
    %v2471 = vadd.f32 %v2467, %v2470
    %vm2472 = vweird.f32 %v2466
    %vm2473 = vweird.f32 %v2467
    %vm2474 = vmor %vm2472, %vm2473
    %v2475 = vsel %vm2474, %v2467, %v2471
    %v2476 = vand.u32 2147483647, %v2466
    %vm2477 = vcmp.eq.f32.partialorder %v2476, 8.507059e+37
    %v2478 = vand.u32 %v2466, 2147483648
    %v2479 = vor.u32 1.1754944e-38, %v2478
    %v2480 = vsel %vm2477, %v2479, %v2475
    %v2481 = vmul.f32 1.0, %v2480
    %2483 = vrot.lane.b32.xlu0 %v2462, 64
    %v2484 = vpop.permute.xlu0 %2483
    %v2485 = vrot.slane %v2484, 1
    %v2487 = vtanh.pop %v2485
    %2489 = vrot.lane.b32.xlu0 %v2408, 64
    %v2490 = vpop.permute.xlu0 %2489
    %v2492 = vmul.f32 %v2481, %v2490
    %v2493 = vmul.f32 %v2481, %v2487
    %2495 = vrot.lane.b32.xlu0 %v2493, 64
    %v2496 = vpop.permute.xlu0 %2495
    %v2498 = vadd.f32 %v2492, %v2496
    %v2499 = vtanh.pop %v2498
    %v2501 = vrot.slane %v2481, 1
    %2504 = vrot.lane.b32.xlu0 %v2499, 64
    %v2505 = vpop.permute.xlu0 %2504
    %v2507 = vmul.f32 %v2501, %v2505
    %v2508 = vsel %vm524, %v2507, %v2402
    %v2510 = vperm.slane %v2498, 0
    %2511 = vrot.lane.b32.xlu0 %v2510, 64
    %v2512 = vpop.permute.xlu0 %2511
    %v2514 = vsel %vm524, %v2512, %v2408
    %2515 = vst.msk [vmem:[#allocation4 + $0x2] sm:$0x1] %vm311, %v2508
    %v2516 = vld [vmem:[%s533] ss:$8 sm:$0x3]
    %v2517 = vld [vmem:[%s535] ss:$8 sm:$0x3]
    %v2518 = vadd.f32 %v2516, %v2517
    %v2520 = vsel %vm83, %v2508, 0
    %2522 = vmatpush.msra.mxu0 0.0
    %2523 = vmatpush.msra.mxu0 0.0
    %2524 = vmatpush.msra.mxu0 0.0
    %2525 = vmatpush.msra.mxu0 0.0
    %2526 = vmatpush.msra.mxu0 0.0
    %2527 = vmatpush.msra.mxu0 0.0
    %2528 = vmatpush.msra.mxu0 0.0
    %2529 = vmatpush.msra.mxu0 0.0
    %2530 = vmatpush.msra.mxu0 %v2201
    %2531 = vmatpush.msra.mxu0 %v2199
    %2532 = vmatpush.msra.mxu0 %v2197
    %2533 = vmatpush.msra.mxu0 %v2195
    %2534 = vmatpush.msra.mxu0 %v2193
    %2535 = vmatpush.msra.mxu0 %v2191
    %2536 = vmatpush.msra.mxu0 %v2189
    %2537 = vmatpush.msra.mxu0 %v2187
    %2538 = vmatmul.f32.gmra.mxu0 %v2520
    %v2539 = vpop.f32.mrf.mxu0
    %v2540 = vadd.f32 0.0, %v2539
    %2541 = vdwg.mxu0
    %2542 = vmatpush.msra.mxu0 0.0
    %2543 = vmatpush.msra.mxu0 0.0
    %2544 = vmatpush.msra.mxu0 0.0
    %2545 = vmatpush.msra.mxu0 0.0
    %2546 = vmatpush.msra.mxu0 0.0
    %2547 = vmatpush.msra.mxu0 0.0
    %2548 = vmatpush.msra.mxu0 0.0
    %2549 = vmatpush.msra.mxu0 0.0
    %2550 = vmatpush.msra.mxu0 %v2202
    %2551 = vmatpush.msra.mxu0 %v2200
    %2552 = vmatpush.msra.mxu0 %v2198
    %2553 = vmatpush.msra.mxu0 %v2196
    %2554 = vmatpush.msra.mxu0 %v2194
    %2555 = vmatpush.msra.mxu0 %v2192
    %2556 = vmatpush.msra.mxu0 %v2190
    %2557 = vmatpush.msra.mxu0 %v2188
    %2558 = vmatmul.f32.gmra.mxu0 %v2520
    %v2559 = vpop.f32.mrf.mxu0
    %v2560 = vadd.f32 0.0, %v2559
    %2561 = vdwg.mxu0
    %v2564 = vrot.slane %v2560, 7
    %v2565 = vsel %vm254, %v2540, %v2564
    %v2567 = vadd.f32 %v2518, %v2565
    %v2568 = vadd.f32 %v2567, %v2204
    %v2569 = vxor.u32 %v2568, 2147483648
    %v2570 = vmul.f32 %v2569, 1.442695
    %v2571 = vpow.pop %v2570
    %v2572 = vadd.f32 %v2571, 1.0
    %v2573 = vrcp.pop %v2572
    %v2574 = vmul.f32 %v2572, %v2573
    %v2575 = vsub.f32 1.0, %v2574
    %v2576 = vmul.f32 %v2573, %v2575
    %v2577 = vadd.f32 %v2573, %v2576
    %vm2578 = vweird.f32 %v2572
    %vm2579 = vweird.f32 %v2573
    %vm2580 = vmor %vm2578, %vm2579
    %v2581 = vsel %vm2580, %v2573, %v2577
    %v2582 = vand.u32 2147483647, %v2572
    %vm2583 = vcmp.eq.f32.partialorder %v2582, 8.507059e+37
    %v2584 = vand.u32 %v2572, 2147483648
    %v2585 = vor.u32 1.1754944e-38, %v2584
    %v2586 = vsel %vm2583, %v2585, %v2581
    %v2587 = vmul.f32 1.0, %v2586
    %2589 = vrot.lane.b32.xlu0 %v2568, 64
    %v2590 = vpop.permute.xlu0 %2589
    %v2591 = vrot.slane %v2590, 1
    %v2593 = vtanh.pop %v2591
    %2595 = vrot.lane.b32.xlu0 %v2514, 64
    %v2596 = vpop.permute.xlu0 %2595
    %v2598 = vmul.f32 %v2587, %v2596
    %v2599 = vmul.f32 %v2587, %v2593
    %2601 = vrot.lane.b32.xlu0 %v2599, 64
    %v2602 = vpop.permute.xlu0 %2601
    %v2604 = vadd.f32 %v2598, %v2602
    %v2605 = vtanh.pop %v2604
    %v2607 = vrot.slane %v2587, 1
    %2610 = vrot.lane.b32.xlu0 %v2605, 64
    %v2611 = vpop.permute.xlu0 %2610
    %v2613 = vmul.f32 %v2607, %v2611
    %v2614 = vsel %vm634, %v2613, %v2508
    %v2616 = vperm.slane %v2604, 0
    %2617 = vrot.lane.b32.xlu0 %v2616, 64
    %v2618 = vpop.permute.xlu0 %2617
    %v2620 = vsel %vm634, %v2618, %v2514
    %2621 = vst.msk [vmem:[#allocation4 + $0x3] sm:$0x1] %vm311, %v2614
    %v2622 = vld [vmem:[%s643] ss:$8 sm:$0x3]
    %v2623 = vld [vmem:[%s645] ss:$8 sm:$0x3]
    %v2624 = vadd.f32 %v2622, %v2623
    %v2626 = vsel %vm83, %v2614, 0
    %2628 = vmatpush.msra.mxu0 0.0
    %2629 = vmatpush.msra.mxu0 0.0
    %2630 = vmatpush.msra.mxu0 0.0
    %2631 = vmatpush.msra.mxu0 0.0
    %2632 = vmatpush.msra.mxu0 0.0
    %2633 = vmatpush.msra.mxu0 0.0
    %2634 = vmatpush.msra.mxu0 0.0
    %2635 = vmatpush.msra.mxu0 0.0
    %2636 = vmatpush.msra.mxu0 %v2201
    %2637 = vmatpush.msra.mxu0 %v2199
    %2638 = vmatpush.msra.mxu0 %v2197
    %2639 = vmatpush.msra.mxu0 %v2195
    %2640 = vmatpush.msra.mxu0 %v2193
    %2641 = vmatpush.msra.mxu0 %v2191
    %2642 = vmatpush.msra.mxu0 %v2189
    %2643 = vmatpush.msra.mxu0 %v2187
    %2644 = vmatmul.f32.gmra.mxu0 %v2626
    %v2645 = vpop.f32.mrf.mxu0
    %v2646 = vadd.f32 0.0, %v2645
    %2647 = vdwg.mxu0
    %2648 = vmatpush.msra.mxu0 0.0
    %2649 = vmatpush.msra.mxu0 0.0
    %2650 = vmatpush.msra.mxu0 0.0
    %2651 = vmatpush.msra.mxu0 0.0
    %2652 = vmatpush.msra.mxu0 0.0
    %2653 = vmatpush.msra.mxu0 0.0
    %2654 = vmatpush.msra.mxu0 0.0
    %2655 = vmatpush.msra.mxu0 0.0
    %2656 = vmatpush.msra.mxu0 %v2202
    %2657 = vmatpush.msra.mxu0 %v2200
    %2658 = vmatpush.msra.mxu0 %v2198
    %2659 = vmatpush.msra.mxu0 %v2196
    %2660 = vmatpush.msra.mxu0 %v2194
    %2661 = vmatpush.msra.mxu0 %v2192
    %2662 = vmatpush.msra.mxu0 %v2190
    %2663 = vmatpush.msra.mxu0 %v2188
    %2664 = vmatmul.f32.gmra.mxu0 %v2626
    %v2665 = vpop.f32.mrf.mxu0
    %v2666 = vadd.f32 0.0, %v2665
    %2667 = vdwg.mxu0
    %v2670 = vrot.slane %v2666, 7
    %v2671 = vsel %vm254, %v2646, %v2670
    %v2673 = vadd.f32 %v2624, %v2671
    %v2674 = vadd.f32 %v2673, %v2204
    %v2675 = vxor.u32 %v2674, 2147483648
    %v2676 = vmul.f32 %v2675, 1.442695
    %v2677 = vpow.pop %v2676
    %v2678 = vadd.f32 %v2677, 1.0
    %v2679 = vrcp.pop %v2678
    %v2680 = vmul.f32 %v2678, %v2679
    %v2681 = vsub.f32 1.0, %v2680
    %v2682 = vmul.f32 %v2679, %v2681
    %v2683 = vadd.f32 %v2679, %v2682
    %vm2684 = vweird.f32 %v2678
    %vm2685 = vweird.f32 %v2679
    %vm2686 = vmor %vm2684, %vm2685
    %v2687 = vsel %vm2686, %v2679, %v2683
    %v2688 = vand.u32 2147483647, %v2678
    %vm2689 = vcmp.eq.f32.partialorder %v2688, 8.507059e+37
    %v2690 = vand.u32 %v2678, 2147483648
    %v2691 = vor.u32 1.1754944e-38, %v2690
    %v2692 = vsel %vm2689, %v2691, %v2687
    %v2693 = vmul.f32 1.0, %v2692
    %2695 = vrot.lane.b32.xlu0 %v2674, 64
    %v2696 = vpop.permute.xlu0 %2695
    %v2697 = vrot.slane %v2696, 1
    %v2699 = vtanh.pop %v2697
    %2701 = vrot.lane.b32.xlu0 %v2620, 64
    %v2702 = vpop.permute.xlu0 %2701
    %v2704 = vmul.f32 %v2693, %v2702
    %v2705 = vmul.f32 %v2693, %v2699
    %2707 = vrot.lane.b32.xlu0 %v2705, 64
    %v2708 = vpop.permute.xlu0 %2707
    %v2710 = vadd.f32 %v2704, %v2708
    %v2711 = vtanh.pop %v2710
    %v2713 = vrot.slane %v2693, 1
    %2716 = vrot.lane.b32.xlu0 %v2711, 64
    %v2717 = vpop.permute.xlu0 %2716
    %v2719 = vmul.f32 %v2713, %v2717
    %v2720 = vsel %vm744, %v2719, %v2614
    %v2722 = vperm.slane %v2710, 0
    %2723 = vrot.lane.b32.xlu0 %v2722, 64
    %v2724 = vpop.permute.xlu0 %2723
    %v2726 = vsel %vm744, %v2724, %v2620
    %2727 = vst.msk [vmem:[#allocation4 + $0x4] sm:$0x1] %vm311, %v2720
    %v2728 = vld [vmem:[%s753] ss:$8 sm:$0x3]
    %v2729 = vld [vmem:[%s755] ss:$8 sm:$0x3]
    %v2730 = vadd.f32 %v2728, %v2729
    %v2732 = vsel %vm83, %v2720, 0
    %2734 = vmatpush.msra.mxu0 0.0
    %2735 = vmatpush.msra.mxu0 0.0
    %2736 = vmatpush.msra.mxu0 0.0
    %2737 = vmatpush.msra.mxu0 0.0
    %2738 = vmatpush.msra.mxu0 0.0
    %2739 = vmatpush.msra.mxu0 0.0
    %2740 = vmatpush.msra.mxu0 0.0
    %2741 = vmatpush.msra.mxu0 0.0
    %2742 = vmatpush.msra.mxu0 %v2201
    %2743 = vmatpush.msra.mxu0 %v2199
    %2744 = vmatpush.msra.mxu0 %v2197
    %2745 = vmatpush.msra.mxu0 %v2195
    %2746 = vmatpush.msra.mxu0 %v2193
    %2747 = vmatpush.msra.mxu0 %v2191
    %2748 = vmatpush.msra.mxu0 %v2189
    %2749 = vmatpush.msra.mxu0 %v2187
    %2750 = vmatmul.f32.gmra.mxu0 %v2732
    %v2751 = vpop.f32.mrf.mxu0
    %v2752 = vadd.f32 0.0, %v2751
    %2753 = vdwg.mxu0
    %2754 = vmatpush.msra.mxu0 0.0
    %2755 = vmatpush.msra.mxu0 0.0
    %2756 = vmatpush.msra.mxu0 0.0
    %2757 = vmatpush.msra.mxu0 0.0
    %2758 = vmatpush.msra.mxu0 0.0
    %2759 = vmatpush.msra.mxu0 0.0
    %2760 = vmatpush.msra.mxu0 0.0
    %2761 = vmatpush.msra.mxu0 0.0
    %2762 = vmatpush.msra.mxu0 %v2202
    %2763 = vmatpush.msra.mxu0 %v2200
    %2764 = vmatpush.msra.mxu0 %v2198
    %2765 = vmatpush.msra.mxu0 %v2196
    %2766 = vmatpush.msra.mxu0 %v2194
    %2767 = vmatpush.msra.mxu0 %v2192
    %2768 = vmatpush.msra.mxu0 %v2190
    %2769 = vmatpush.msra.mxu0 %v2188
    %2770 = vmatmul.f32.gmra.mxu0 %v2732
    %v2771 = vpop.f32.mrf.mxu0
    %v2772 = vadd.f32 0.0, %v2771
    %2773 = vdwg.mxu0
    %v2776 = vrot.slane %v2772, 7
    %v2777 = vsel %vm254, %v2752, %v2776
    %v2779 = vadd.f32 %v2730, %v2777
    %v2780 = vadd.f32 %v2779, %v2204
    %v2781 = vxor.u32 %v2780, 2147483648
    %v2782 = vmul.f32 %v2781, 1.442695
    %v2783 = vpow.pop %v2782
    %v2784 = vadd.f32 %v2783, 1.0
    %v2785 = vrcp.pop %v2784
    %v2786 = vmul.f32 %v2784, %v2785
    %v2787 = vsub.f32 1.0, %v2786
    %v2788 = vmul.f32 %v2785, %v2787
    %v2789 = vadd.f32 %v2785, %v2788
    %vm2790 = vweird.f32 %v2784
    %vm2791 = vweird.f32 %v2785
    %vm2792 = vmor %vm2790, %vm2791
    %v2793 = vsel %vm2792, %v2785, %v2789
    %v2794 = vand.u32 2147483647, %v2784
    %vm2795 = vcmp.eq.f32.partialorder %v2794, 8.507059e+37
    %v2796 = vand.u32 %v2784, 2147483648
    %v2797 = vor.u32 1.1754944e-38, %v2796
    %v2798 = vsel %vm2795, %v2797, %v2793
    %v2799 = vmul.f32 1.0, %v2798
    %2801 = vrot.lane.b32.xlu0 %v2780, 64
    %v2802 = vpop.permute.xlu0 %2801
    %v2803 = vrot.slane %v2802, 1
    %v2805 = vtanh.pop %v2803
    %2807 = vrot.lane.b32.xlu0 %v2726, 64
    %v2808 = vpop.permute.xlu0 %2807
    %v2810 = vmul.f32 %v2799, %v2808
    %v2811 = vmul.f32 %v2799, %v2805
    %2813 = vrot.lane.b32.xlu0 %v2811, 64
    %v2814 = vpop.permute.xlu0 %2813
    %v2816 = vadd.f32 %v2810, %v2814
    %v2817 = vtanh.pop %v2816
    %v2819 = vrot.slane %v2799, 1
    %2822 = vrot.lane.b32.xlu0 %v2817, 64
    %v2823 = vpop.permute.xlu0 %2822
    %v2825 = vmul.f32 %v2819, %v2823
    %v2826 = vsel %vm854, %v2825, %v2720
    %v2828 = vperm.slane %v2816, 0
    %2829 = vrot.lane.b32.xlu0 %v2828, 64
    %v2830 = vpop.permute.xlu0 %2829
    %v2832 = vsel %vm854, %v2830, %v2726
    %2833 = vst.msk [vmem:[#allocation4 + $0x5] sm:$0x1] %vm311, %v2826
    %v2834 = vld [vmem:[%s863] ss:$8 sm:$0x3]
    %v2835 = vld [vmem:[%s865] ss:$8 sm:$0x3]
    %v2836 = vadd.f32 %v2834, %v2835
    %v2838 = vsel %vm83, %v2826, 0
    %2840 = vmatpush.msra.mxu0 0.0
    %2841 = vmatpush.msra.mxu0 0.0
    %2842 = vmatpush.msra.mxu0 0.0
    %2843 = vmatpush.msra.mxu0 0.0
    %2844 = vmatpush.msra.mxu0 0.0
    %2845 = vmatpush.msra.mxu0 0.0
    %2846 = vmatpush.msra.mxu0 0.0
    %2847 = vmatpush.msra.mxu0 0.0
    %2848 = vmatpush.msra.mxu0 %v2201
    %2849 = vmatpush.msra.mxu0 %v2199
    %2850 = vmatpush.msra.mxu0 %v2197
    %2851 = vmatpush.msra.mxu0 %v2195
    %2852 = vmatpush.msra.mxu0 %v2193
    %2853 = vmatpush.msra.mxu0 %v2191
    %2854 = vmatpush.msra.mxu0 %v2189
    %2855 = vmatpush.msra.mxu0 %v2187
    %2856 = vmatmul.f32.gmra.mxu0 %v2838
    %v2857 = vpop.f32.mrf.mxu0
    %v2858 = vadd.f32 0.0, %v2857
    %2859 = vdwg.mxu0
    %2860 = vmatpush.msra.mxu0 0.0
    %2861 = vmatpush.msra.mxu0 0.0
    %2862 = vmatpush.msra.mxu0 0.0
    %2863 = vmatpush.msra.mxu0 0.0
    %2864 = vmatpush.msra.mxu0 0.0
    %2865 = vmatpush.msra.mxu0 0.0
    %2866 = vmatpush.msra.mxu0 0.0
    %2867 = vmatpush.msra.mxu0 0.0
    %2868 = vmatpush.msra.mxu0 %v2202
    %2869 = vmatpush.msra.mxu0 %v2200
    %2870 = vmatpush.msra.mxu0 %v2198
    %2871 = vmatpush.msra.mxu0 %v2196
    %2872 = vmatpush.msra.mxu0 %v2194
    %2873 = vmatpush.msra.mxu0 %v2192
    %2874 = vmatpush.msra.mxu0 %v2190
    %2875 = vmatpush.msra.mxu0 %v2188
    %2876 = vmatmul.f32.gmra.mxu0 %v2838
    %v2877 = vpop.f32.mrf.mxu0
    %v2878 = vadd.f32 0.0, %v2877
    %2879 = vdwg.mxu0
    %v2882 = vrot.slane %v2878, 7
    %v2883 = vsel %vm254, %v2858, %v2882
    %v2885 = vadd.f32 %v2836, %v2883
    %v2886 = vadd.f32 %v2885, %v2204
    %v2887 = vxor.u32 %v2886, 2147483648
    %v2888 = vmul.f32 %v2887, 1.442695
    %v2889 = vpow.pop %v2888
    %v2890 = vadd.f32 %v2889, 1.0
    %v2891 = vrcp.pop %v2890
    %v2892 = vmul.f32 %v2890, %v2891
    %v2893 = vsub.f32 1.0, %v2892
    %v2894 = vmul.f32 %v2891, %v2893
    %v2895 = vadd.f32 %v2891, %v2894
    %vm2896 = vweird.f32 %v2890
    %vm2897 = vweird.f32 %v2891
    %vm2898 = vmor %vm2896, %vm2897
    %v2899 = vsel %vm2898, %v2891, %v2895
    %v2900 = vand.u32 2147483647, %v2890
    %vm2901 = vcmp.eq.f32.partialorder %v2900, 8.507059e+37
    %v2902 = vand.u32 %v2890, 2147483648
    %v2903 = vor.u32 1.1754944e-38, %v2902
    %v2904 = vsel %vm2901, %v2903, %v2899
    %v2905 = vmul.f32 1.0, %v2904
    %2907 = vrot.lane.b32.xlu0 %v2886, 64
    %v2908 = vpop.permute.xlu0 %2907
    %v2909 = vrot.slane %v2908, 1
    %v2911 = vtanh.pop %v2909
    %2913 = vrot.lane.b32.xlu0 %v2832, 64
    %v2914 = vpop.permute.xlu0 %2913
    %v2916 = vmul.f32 %v2905, %v2914
    %v2917 = vmul.f32 %v2905, %v2911
    %2919 = vrot.lane.b32.xlu0 %v2917, 64
    %v2920 = vpop.permute.xlu0 %2919
    %v2922 = vadd.f32 %v2916, %v2920
    %v2923 = vtanh.pop %v2922
    %v2925 = vrot.slane %v2905, 1
    %2928 = vrot.lane.b32.xlu0 %v2923, 64
    %v2929 = vpop.permute.xlu0 %2928
    %v2931 = vmul.f32 %v2925, %v2929
    %v2932 = vsel %vm964, %v2931, %v2826
    %v2934 = vperm.slane %v2922, 0
    %2935 = vrot.lane.b32.xlu0 %v2934, 64
    %v2936 = vpop.permute.xlu0 %2935
    %v2938 = vsel %vm964, %v2936, %v2832
    %2939 = vst.msk [vmem:[#allocation4 + $0x6] sm:$0x1] %vm311, %v2932
    %v2940 = vld [vmem:[%s973] ss:$8 sm:$0x3]
    %v2941 = vld [vmem:[#allocation3] ss:$8 sm:$0x3]
    %v2942 = vadd.f32 %v2940, %v2941
    %v2944 = vsel %vm83, %v2932, 0
    %2946 = vmatpush.msra.mxu0 0.0
    %2947 = vmatpush.msra.mxu0 0.0
    %2948 = vmatpush.msra.mxu0 0.0
    %2949 = vmatpush.msra.mxu0 0.0
    %2950 = vmatpush.msra.mxu0 0.0
    %2951 = vmatpush.msra.mxu0 0.0
    %2952 = vmatpush.msra.mxu0 0.0
    %2953 = vmatpush.msra.mxu0 0.0
    %2954 = vmatpush.msra.mxu0 %v2201
    %2955 = vmatpush.msra.mxu0 %v2199
    %2956 = vmatpush.msra.mxu0 %v2197
    %2957 = vmatpush.msra.mxu0 %v2195
    %2958 = vmatpush.msra.mxu0 %v2193
    %2959 = vmatpush.msra.mxu0 %v2191
    %2960 = vmatpush.msra.mxu0 %v2189
    %2961 = vmatpush.msra.mxu0 %v2187
    %2962 = vmatmul.f32.gmra.mxu0 %v2944
    %v2963 = vpop.f32.mrf.mxu0
    %v2964 = vadd.f32 0.0, %v2963
    %2965 = vdwg.mxu0
    %2966 = vmatpush.msra.mxu0 0.0
    %2967 = vmatpush.msra.mxu0 0.0
    %2968 = vmatpush.msra.mxu0 0.0
    %2969 = vmatpush.msra.mxu0 0.0
    %2970 = vmatpush.msra.mxu0 0.0
    %2971 = vmatpush.msra.mxu0 0.0
    %2972 = vmatpush.msra.mxu0 0.0
    %2973 = vmatpush.msra.mxu0 0.0
    %2974 = vmatpush.msra.mxu0 %v2202
    %2975 = vmatpush.msra.mxu0 %v2200
    %2976 = vmatpush.msra.mxu0 %v2198
    %2977 = vmatpush.msra.mxu0 %v2196
    %2978 = vmatpush.msra.mxu0 %v2194
    %2979 = vmatpush.msra.mxu0 %v2192
    %2980 = vmatpush.msra.mxu0 %v2190
    %2981 = vmatpush.msra.mxu0 %v2188
    %2982 = vmatmul.f32.gmra.mxu0 %v2944
    %v2983 = vpop.f32.mrf.mxu0
    %v2984 = vadd.f32 0.0, %v2983
    %2985 = vdwg.mxu0
    %v2988 = vrot.slane %v2984, 7
    %v2989 = vsel %vm254, %v2964, %v2988
    %v2991 = vadd.f32 %v2942, %v2989
    %v2992 = vadd.f32 %v2991, %v2204
    %v2993 = vxor.u32 %v2992, 2147483648
    %v2994 = vmul.f32 %v2993, 1.442695
    %v2995 = vpow.pop %v2994
    %v2996 = vadd.f32 %v2995, 1.0
    %v2997 = vrcp.pop %v2996
    %v2998 = vmul.f32 %v2996, %v2997
    %v2999 = vsub.f32 1.0, %v2998
    %v3000 = vmul.f32 %v2997, %v2999
    %v3001 = vadd.f32 %v2997, %v3000
    %vm3002 = vweird.f32 %v2996
    %vm3003 = vweird.f32 %v2997
    %vm3004 = vmor %vm3002, %vm3003
    %v3005 = vsel %vm3004, %v2997, %v3001
    %v3006 = vand.u32 2147483647, %v2996
    %vm3007 = vcmp.eq.f32.partialorder %v3006, 8.507059e+37
    %v3008 = vand.u32 %v2996, 2147483648
    %v3009 = vor.u32 1.1754944e-38, %v3008
    %v3010 = vsel %vm3007, %v3009, %v3005
    %v3011 = vmul.f32 1.0, %v3010
    %3013 = vrot.lane.b32.xlu0 %v2992, 64
    %v3014 = vpop.permute.xlu0 %3013
    %v3015 = vrot.slane %v3014, 1
    %v3017 = vtanh.pop %v3015
    %3019 = vrot.lane.b32.xlu0 %v2938, 64
    %v3020 = vpop.permute.xlu0 %3019
    %v3022 = vmul.f32 %v3011, %v3020
    %v3023 = vmul.f32 %v3011, %v3017
    %3025 = vrot.lane.b32.xlu0 %v3023, 64
    %v3026 = vpop.permute.xlu0 %3025
    %v3028 = vadd.f32 %v3022, %v3026
    %v3029 = vtanh.pop %v3028
    %v3031 = vrot.slane %v3011, 1
    %3034 = vrot.lane.b32.xlu0 %v3029, 64
    %v3035 = vpop.permute.xlu0 %3034
    %v3037 = vmul.f32 %v3031, %v3035
    %v3038 = vsel %vm1073, %v3037, %v2932
    %v3040 = vperm.slane %v3028, 0
    %3041 = vrot.lane.b32.xlu0 %v3040, 64
    %v3042 = vpop.permute.xlu0 %3041
    %v3044 = vsel %vm1073, %v3042, %v2938
    %3045 = vst.msk [vmem:[#allocation4 + $0x7] sm:$0x1] %vm311, %v3038
    %v3046 = vld [vmem:[#allocation4] sm:$0xff]
    %s3047 = scalar_lea.vmem %s2, 384
    %v3048 = vld [vmem:[%s3047] sm:$0xff]
    %v3049 = vld [vmem:[%s3047 + $0x8] sm:$0xff]
    %v3050 = vld [vmem:[%s3047 + $0x10] sm:$0xff]
    %v3051 = vld [vmem:[%s3047 + $0x18] sm:$0xff]
    %v3052 = vld [vmem:[%s3047 + $0x20] sm:$0xff]
    %v3053 = vld [vmem:[%s3047 + $0x28] sm:$0xff]
    %v3054 = vld [vmem:[%s3047 + $0x30] sm:$0xff]
    %v3055 = vld [vmem:[%s3047 + $0x38] sm:$0xff]
    %v3056 = vld [vmem:[%s3047 + $0x40] sm:$0xff]
    %v3057 = vld [vmem:[%s3047 + $0x48] sm:$0xff]
    %v3058 = vld [vmem:[%s3047 + $0x50] sm:$0xff]
    %v3059 = vld [vmem:[%s3047 + $0x58] sm:$0xff]
    %v3060 = vld [vmem:[%s3047 + $0x60] sm:$0xff]
    %v3061 = vld [vmem:[%s3047 + $0x68] sm:$0xff]
    %v3062 = vld [vmem:[%s3047 + $0x70] sm:$0xff]
    %v3063 = vld [vmem:[%s3047 + $0x78] sm:$0xff]
    %v3065 = vsel %vm83, %v3046, 0
    %3067 = vmatpush.msra.mxu0 0.0
    %3068 = vmatpush.msra.mxu0 0.0
    %3069 = vmatpush.msra.mxu0 0.0
    %3070 = vmatpush.msra.mxu0 0.0
    %3071 = vmatpush.msra.mxu0 0.0
    %3072 = vmatpush.msra.mxu0 0.0
    %3073 = vmatpush.msra.mxu0 0.0
    %3074 = vmatpush.msra.mxu0 0.0
    %3075 = vmatpush.msra.mxu0 %v3062
    %3076 = vmatpush.msra.mxu0 %v3060
    %3077 = vmatpush.msra.mxu0 %v3058
    %3078 = vmatpush.msra.mxu0 %v3056
    %3079 = vmatpush.msra.mxu0 %v3054
    %3080 = vmatpush.msra.mxu0 %v3052
    %3081 = vmatpush.msra.mxu0 %v3050
    %3082 = vmatpush.msra.mxu0 %v3048
    %3083 = vmatmul.f32.gmra.mxu0 %v3065
    %v3084 = vpop.f32.mrf.mxu0
    %v3085 = vadd.f32 0.0, %v3084
    %3086 = vdwg.mxu0
    %3087 = vmatpush.msra.mxu0 0.0
    %3088 = vmatpush.msra.mxu0 0.0
    %3089 = vmatpush.msra.mxu0 0.0
    %3090 = vmatpush.msra.mxu0 0.0
    %3091 = vmatpush.msra.mxu0 0.0
    %3092 = vmatpush.msra.mxu0 0.0
    %3093 = vmatpush.msra.mxu0 0.0
    %3094 = vmatpush.msra.mxu0 0.0
    %3095 = vmatpush.msra.mxu0 %v3063
    %3096 = vmatpush.msra.mxu0 %v3061
    %3097 = vmatpush.msra.mxu0 %v3059
    %3098 = vmatpush.msra.mxu0 %v3057
    %3099 = vmatpush.msra.mxu0 %v3055
    %3100 = vmatpush.msra.mxu0 %v3053
    %3101 = vmatpush.msra.mxu0 %v3051
    %3102 = vmatpush.msra.mxu0 %v3049
    %3103 = vmatmul.f32.gmra.mxu0 %v3065
    %v3104 = vpop.f32.mrf.mxu0
    %v3105 = vadd.f32 0.0, %v3104
    %3106 = vdwg.mxu0
    %3107 = vst [vmem:[#allocation2] sm:$0xff] %v3085
    %3108 = vst [vmem:[#allocation2 + $0x8] sm:$0xff] %v3105
    %s3109 = scalar_lea.vmem [#allocation7], 384
    %v3110 = vld [vmem:[%s3109] sm:$0xff]
    %v3111 = vld [vmem:[%s3109 + $0x8] sm:$0xff]
    %v3112 = vld [vmem:[%s3109 + $0x10] sm:$0xff]
    %v3113 = vld [vmem:[%s3109 + $0x18] sm:$0xff]
    %v3114 = vld [vmem:[%s3109 + $0x20] sm:$0xff]
    %v3115 = vld [vmem:[%s3109 + $0x28] sm:$0xff]
    %v3116 = vld [vmem:[%s3109 + $0x30] sm:$0xff]
    %v3117 = vld [vmem:[%s3109 + $0x38] sm:$0xff]
    %v3118 = vld [vmem:[%s3109 + $0x40] sm:$0xff]
    %v3119 = vld [vmem:[%s3109 + $0x48] sm:$0xff]
    %v3120 = vld [vmem:[%s3109 + $0x50] sm:$0xff]
    %v3121 = vld [vmem:[%s3109 + $0x58] sm:$0xff]
    %v3122 = vld [vmem:[%s3109 + $0x60] sm:$0xff]
    %v3123 = vld [vmem:[%s3109 + $0x68] sm:$0xff]
    %v3124 = vld [vmem:[%s3109 + $0x70] sm:$0xff]
    %v3125 = vld [vmem:[%s3109 + $0x78] sm:$0xff]
    %3126 = vmatpush.msra.mxu0 0.0
    %3127 = vmatpush.msra.mxu0 0.0
    %3128 = vmatpush.msra.mxu0 0.0
    %3129 = vmatpush.msra.mxu0 0.0
    %3130 = vmatpush.msra.mxu0 0.0
    %3131 = vmatpush.msra.mxu0 0.0
    %3132 = vmatpush.msra.mxu0 0.0
    %3133 = vmatpush.msra.mxu0 0.0
    %3134 = vmatpush.msra.mxu0 %v3124
    %3135 = vmatpush.msra.mxu0 %v3122
    %3136 = vmatpush.msra.mxu0 %v3120
    %3137 = vmatpush.msra.mxu0 %v3118
    %3138 = vmatpush.msra.mxu0 %v3116
    %3139 = vmatpush.msra.mxu0 %v3114
    %3140 = vmatpush.msra.mxu0 %v3112
    %3141 = vmatpush.msra.mxu0 %v3110
    %3142 = vmatmul.f32.gmra.mxu0 %v3065
    %v3143 = vpop.f32.mrf.mxu0
    %v3144 = vadd.f32 0.0, %v3143
    %3145 = vdwg.mxu0
    %3146 = vmatpush.msra.mxu0 0.0
    %3147 = vmatpush.msra.mxu0 0.0
    %3148 = vmatpush.msra.mxu0 0.0
    %3149 = vmatpush.msra.mxu0 0.0
    %3150 = vmatpush.msra.mxu0 0.0
    %3151 = vmatpush.msra.mxu0 0.0
    %3152 = vmatpush.msra.mxu0 0.0
    %3153 = vmatpush.msra.mxu0 0.0
    %3154 = vmatpush.msra.mxu0 %v3125
    %3155 = vmatpush.msra.mxu0 %v3123
    %3156 = vmatpush.msra.mxu0 %v3121
    %3157 = vmatpush.msra.mxu0 %v3119
    %3158 = vmatpush.msra.mxu0 %v3117
    %3159 = vmatpush.msra.mxu0 %v3115
    %3160 = vmatpush.msra.mxu0 %v3113
    %3161 = vmatpush.msra.mxu0 %v3111
    %3162 = vmatmul.f32.gmra.mxu0 %v3065
    %v3163 = vpop.f32.mrf.mxu0
    %v3164 = vadd.f32 0.0, %v3163
    %3165 = vdwg.mxu0
    %3166 = vst [vmem:[#allocation3] sm:$0xff] %v3144
    %3167 = vst [vmem:[#allocation3 + $0x8] sm:$0xff] %v3164
    %s3168 = scalar_lea.vmem [#allocation10], 384
    %v3169 = vld [vmem:[%s3168] sm:$0xff]
    %v3170 = vld [vmem:[%s3168 + $0x8] sm:$0xff]
    %v3171 = vld [vmem:[%s3168 + $0x10] sm:$0xff]
    %v3172 = vld [vmem:[%s3168 + $0x18] sm:$0xff]
    %v3173 = vld [vmem:[%s3168 + $0x20] sm:$0xff]
    %v3174 = vld [vmem:[%s3168 + $0x28] sm:$0xff]
    %v3175 = vld [vmem:[%s3168 + $0x30] sm:$0xff]
    %v3176 = vld [vmem:[%s3168 + $0x38] sm:$0xff]
    %v3177 = vld [vmem:[%s3168 + $0x40] sm:$0xff]
    %v3178 = vld [vmem:[%s3168 + $0x48] sm:$0xff]
    %v3179 = vld [vmem:[%s3168 + $0x50] sm:$0xff]
    %v3180 = vld [vmem:[%s3168 + $0x58] sm:$0xff]
    %v3181 = vld [vmem:[%s3168 + $0x60] sm:$0xff]
    %v3182 = vld [vmem:[%s3168 + $0x68] sm:$0xff]
    %v3183 = vld [vmem:[%s3168 + $0x70] sm:$0xff]
    %v3184 = vld [vmem:[%s3168 + $0x78] sm:$0xff]
    %s3185 = scalar_lea.vmem %s5, 6
    %v3186 = vld [vmem:[%s3185] sm:$0x3]
    %v3187 = vld [vmem:[#allocation2] ss:$8 sm:$0x3]
    %v3188 = vld [vmem:[%s205] ss:$8 sm:$0x3]
    %v3189 = vadd.f32 %v3187, %v3188
    %3190 = vmatpush.msra.mxu0 0.0
    %3191 = vmatpush.msra.mxu0 0.0
    %3192 = vmatpush.msra.mxu0 0.0
    %3193 = vmatpush.msra.mxu0 0.0
    %3194 = vmatpush.msra.mxu0 0.0
    %3195 = vmatpush.msra.mxu0 0.0
    %3196 = vmatpush.msra.mxu0 0.0
    %3197 = vmatpush.msra.mxu0 0.0
    %3198 = vmatpush.msra.mxu0 %v3183
    %3199 = vmatpush.msra.mxu0 %v3181
    %3200 = vmatpush.msra.mxu0 %v3179
    %3201 = vmatpush.msra.mxu0 %v3177
    %3202 = vmatpush.msra.mxu0 %v3175
    %3203 = vmatpush.msra.mxu0 %v3173
    %3204 = vmatpush.msra.mxu0 %v3171
    %3205 = vmatpush.msra.mxu0 %v3169
    %3206 = vmatmul.f32.gmra.mxu0 %v209
    %v3207 = vpop.f32.mrf.mxu0
    %v3208 = vadd.f32 0.0, %v3207
    %3209 = vdwg.mxu0
    %3210 = vmatpush.msra.mxu0 0.0
    %3211 = vmatpush.msra.mxu0 0.0
    %3212 = vmatpush.msra.mxu0 0.0
    %3213 = vmatpush.msra.mxu0 0.0
    %3214 = vmatpush.msra.mxu0 0.0
    %3215 = vmatpush.msra.mxu0 0.0
    %3216 = vmatpush.msra.mxu0 0.0
    %3217 = vmatpush.msra.mxu0 0.0
    %3218 = vmatpush.msra.mxu0 %v3184
    %3219 = vmatpush.msra.mxu0 %v3182
    %3220 = vmatpush.msra.mxu0 %v3180
    %3221 = vmatpush.msra.mxu0 %v3178
    %3222 = vmatpush.msra.mxu0 %v3176
    %3223 = vmatpush.msra.mxu0 %v3174
    %3224 = vmatpush.msra.mxu0 %v3172
    %3225 = vmatpush.msra.mxu0 %v3170
    %3226 = vmatmul.f32.gmra.mxu0 %v209
    %v3227 = vpop.f32.mrf.mxu0
    %v3228 = vadd.f32 0.0, %v3227
    %3229 = vdwg.mxu0
    %v3232 = vrot.slane %v3228, 7
    %v3233 = vsel %vm254, %v3208, %v3232
    %v3235 = vadd.f32 %v3189, %v3233
    %v3236 = vadd.f32 %v3235, %v3186
    %v3237 = vxor.u32 %v3236, 2147483648
    %v3238 = vmul.f32 %v3237, 1.442695
    %v3239 = vpow.pop %v3238
    %v3240 = vadd.f32 %v3239, 1.0
    %v3241 = vrcp.pop %v3240
    %v3242 = vmul.f32 %v3240, %v3241
    %v3243 = vsub.f32 1.0, %v3242
    %v3244 = vmul.f32 %v3241, %v3243
    %v3245 = vadd.f32 %v3241, %v3244
    %vm3246 = vweird.f32 %v3240
    %vm3247 = vweird.f32 %v3241
    %vm3248 = vmor %vm3246, %vm3247
    %v3249 = vsel %vm3248, %v3241, %v3245
    %v3250 = vand.u32 2147483647, %v3240
    %vm3251 = vcmp.eq.f32.partialorder %v3250, 8.507059e+37
    %v3252 = vand.u32 %v3240, 2147483648
    %v3253 = vor.u32 1.1754944e-38, %v3252
    %v3254 = vsel %vm3251, %v3253, %v3249
    %v3255 = vmul.f32 1.0, %v3254
    %3257 = vrot.lane.b32.xlu0 %v3236, 64
    %v3258 = vpop.permute.xlu0 %3257
    %v3259 = vrot.slane %v3258, 1
    %v3261 = vtanh.pop %v3259
    %v3262 = vmul.f32 %v3255, 0.0
    %v3263 = vmul.f32 %v3255, %v3261
    %3265 = vrot.lane.b32.xlu0 %v3263, 64
    %v3266 = vpop.permute.xlu0 %3265
    %v3268 = vadd.f32 %v3262, %v3266
    %v3269 = vtanh.pop %v3268
    %v3271 = vrot.slane %v3255, 1
    %3274 = vrot.lane.b32.xlu0 %v3269, 64
    %v3275 = vpop.permute.xlu0 %3274
    %v3277 = vmul.f32 %v3271, %v3275
    %v3278 = vsel %vm303, %v3277, 0.0
    %v3280 = vperm.slane %v3268, 0
    %3281 = vrot.lane.b32.xlu0 %v3280, 64
    %v3282 = vpop.permute.xlu0 %3281
    %v3284 = vsel %vm303, %v3282, 0.0
    %v3285 = vld [vmem:[%s313] ss:$8 sm:$0x3]
    %v3286 = vld [vmem:[%s315] ss:$8 sm:$0x3]
    %v3287 = vadd.f32 %v3285, %v3286
    %v3289 = vsel %vm83, %v3278, 0
    %3291 = vmatpush.msra.mxu0 0.0
    %3292 = vmatpush.msra.mxu0 0.0
    %3293 = vmatpush.msra.mxu0 0.0
    %3294 = vmatpush.msra.mxu0 0.0
    %3295 = vmatpush.msra.mxu0 0.0
    %3296 = vmatpush.msra.mxu0 0.0
    %3297 = vmatpush.msra.mxu0 0.0
    %3298 = vmatpush.msra.mxu0 0.0
    %3299 = vmatpush.msra.mxu0 %v3183
    %3300 = vmatpush.msra.mxu0 %v3181
    %3301 = vmatpush.msra.mxu0 %v3179
    %3302 = vmatpush.msra.mxu0 %v3177
    %3303 = vmatpush.msra.mxu0 %v3175
    %3304 = vmatpush.msra.mxu0 %v3173
    %3305 = vmatpush.msra.mxu0 %v3171
    %3306 = vmatpush.msra.mxu0 %v3169
    %3307 = vmatmul.f32.gmra.mxu0 %v3289
    %v3308 = vpop.f32.mrf.mxu0
    %v3309 = vadd.f32 0.0, %v3308
    %3310 = vdwg.mxu0
    %3311 = vmatpush.msra.mxu0 0.0
    %3312 = vmatpush.msra.mxu0 0.0
    %3313 = vmatpush.msra.mxu0 0.0
    %3314 = vmatpush.msra.mxu0 0.0
    %3315 = vmatpush.msra.mxu0 0.0
    %3316 = vmatpush.msra.mxu0 0.0
    %3317 = vmatpush.msra.mxu0 0.0
    %3318 = vmatpush.msra.mxu0 0.0
    %3319 = vmatpush.msra.mxu0 %v3184
    %3320 = vmatpush.msra.mxu0 %v3182
    %3321 = vmatpush.msra.mxu0 %v3180
    %3322 = vmatpush.msra.mxu0 %v3178
    %3323 = vmatpush.msra.mxu0 %v3176
    %3324 = vmatpush.msra.mxu0 %v3174
    %3325 = vmatpush.msra.mxu0 %v3172
    %3326 = vmatpush.msra.mxu0 %v3170
    %3327 = vmatmul.f32.gmra.mxu0 %v3289
    %v3328 = vpop.f32.mrf.mxu0
    %v3329 = vadd.f32 0.0, %v3328
    %3330 = vdwg.mxu0
    %v3333 = vrot.slane %v3329, 7
    %v3334 = vsel %vm254, %v3309, %v3333
    %v3336 = vadd.f32 %v3287, %v3334
    %v3337 = vadd.f32 %v3336, %v3186
    %v3338 = vxor.u32 %v3337, 2147483648
    %v3339 = vmul.f32 %v3338, 1.442695
    %v3340 = vpow.pop %v3339
    %v3341 = vadd.f32 %v3340, 1.0
    %v3342 = vrcp.pop %v3341
    %v3343 = vmul.f32 %v3341, %v3342
    %v3344 = vsub.f32 1.0, %v3343
    %v3345 = vmul.f32 %v3342, %v3344
    %v3346 = vadd.f32 %v3342, %v3345
    %vm3347 = vweird.f32 %v3341
    %vm3348 = vweird.f32 %v3342
    %vm3349 = vmor %vm3347, %vm3348
    %v3350 = vsel %vm3349, %v3342, %v3346
    %v3351 = vand.u32 2147483647, %v3341
    %vm3352 = vcmp.eq.f32.partialorder %v3351, 8.507059e+37
    %v3353 = vand.u32 %v3341, 2147483648
    %v3354 = vor.u32 1.1754944e-38, %v3353
    %v3355 = vsel %vm3352, %v3354, %v3350
    %v3356 = vmul.f32 1.0, %v3355
    %3358 = vrot.lane.b32.xlu0 %v3337, 64
    %v3359 = vpop.permute.xlu0 %3358
    %v3360 = vrot.slane %v3359, 1
    %v3362 = vtanh.pop %v3360
    %3364 = vrot.lane.b32.xlu0 %v3284, 64
    %v3365 = vpop.permute.xlu0 %3364
    %v3367 = vmul.f32 %v3356, %v3365
    %v3368 = vmul.f32 %v3356, %v3362
    %3370 = vrot.lane.b32.xlu0 %v3368, 64
    %v3371 = vpop.permute.xlu0 %3370
    %v3373 = vadd.f32 %v3367, %v3371
    %v3374 = vtanh.pop %v3373
    %v3376 = vrot.slane %v3356, 1
    %3379 = vrot.lane.b32.xlu0 %v3374, 64
    %v3380 = vpop.permute.xlu0 %3379
    %v3382 = vmul.f32 %v3376, %v3380
    %v3383 = vsel %vm414, %v3382, %v3278
    %v3385 = vperm.slane %v3373, 0
    %3386 = vrot.lane.b32.xlu0 %v3385, 64
    %v3387 = vpop.permute.xlu0 %3386
    %v3389 = vsel %vm414, %v3387, %v3284
    %v3390 = vld [vmem:[%s423] ss:$8 sm:$0x3]
    %v3391 = vld [vmem:[%s425] ss:$8 sm:$0x3]
    %v3392 = vadd.f32 %v3390, %v3391
    %v3394 = vsel %vm83, %v3383, 0
    %3396 = vmatpush.msra.mxu0 0.0
    %3397 = vmatpush.msra.mxu0 0.0
    %3398 = vmatpush.msra.mxu0 0.0
    %3399 = vmatpush.msra.mxu0 0.0
    %3400 = vmatpush.msra.mxu0 0.0
    %3401 = vmatpush.msra.mxu0 0.0
    %3402 = vmatpush.msra.mxu0 0.0
    %3403 = vmatpush.msra.mxu0 0.0
    %3404 = vmatpush.msra.mxu0 %v3183
    %3405 = vmatpush.msra.mxu0 %v3181
    %3406 = vmatpush.msra.mxu0 %v3179
    %3407 = vmatpush.msra.mxu0 %v3177
    %3408 = vmatpush.msra.mxu0 %v3175
    %3409 = vmatpush.msra.mxu0 %v3173
    %3410 = vmatpush.msra.mxu0 %v3171
    %3411 = vmatpush.msra.mxu0 %v3169
    %3412 = vmatmul.f32.gmra.mxu0 %v3394
    %v3413 = vpop.f32.mrf.mxu0
    %v3414 = vadd.f32 0.0, %v3413
    %3415 = vdwg.mxu0
    %3416 = vmatpush.msra.mxu0 0.0
    %3417 = vmatpush.msra.mxu0 0.0
    %3418 = vmatpush.msra.mxu0 0.0
    %3419 = vmatpush.msra.mxu0 0.0
    %3420 = vmatpush.msra.mxu0 0.0
    %3421 = vmatpush.msra.mxu0 0.0
    %3422 = vmatpush.msra.mxu0 0.0
    %3423 = vmatpush.msra.mxu0 0.0
    %3424 = vmatpush.msra.mxu0 %v3184
    %3425 = vmatpush.msra.mxu0 %v3182
    %3426 = vmatpush.msra.mxu0 %v3180
    %3427 = vmatpush.msra.mxu0 %v3178
    %3428 = vmatpush.msra.mxu0 %v3176
    %3429 = vmatpush.msra.mxu0 %v3174
    %3430 = vmatpush.msra.mxu0 %v3172
    %3431 = vmatpush.msra.mxu0 %v3170
    %3432 = vmatmul.f32.gmra.mxu0 %v3394
    %v3433 = vpop.f32.mrf.mxu0
    %v3434 = vadd.f32 0.0, %v3433
    %3435 = vdwg.mxu0
    %v3438 = vrot.slane %v3434, 7
    %v3439 = vsel %vm254, %v3414, %v3438
    %v3441 = vadd.f32 %v3392, %v3439
    %v3442 = vadd.f32 %v3441, %v3186
    %v3443 = vxor.u32 %v3442, 2147483648
    %v3444 = vmul.f32 %v3443, 1.442695
    %v3445 = vpow.pop %v3444
    %v3446 = vadd.f32 %v3445, 1.0
    %v3447 = vrcp.pop %v3446
    %v3448 = vmul.f32 %v3446, %v3447
    %v3449 = vsub.f32 1.0, %v3448
    %v3450 = vmul.f32 %v3447, %v3449
    %v3451 = vadd.f32 %v3447, %v3450
    %vm3452 = vweird.f32 %v3446
    %vm3453 = vweird.f32 %v3447
    %vm3454 = vmor %vm3452, %vm3453
    %v3455 = vsel %vm3454, %v3447, %v3451
    %v3456 = vand.u32 2147483647, %v3446
    %vm3457 = vcmp.eq.f32.partialorder %v3456, 8.507059e+37
    %v3458 = vand.u32 %v3446, 2147483648
    %v3459 = vor.u32 1.1754944e-38, %v3458
    %v3460 = vsel %vm3457, %v3459, %v3455
    %v3461 = vmul.f32 1.0, %v3460
    %3463 = vrot.lane.b32.xlu0 %v3442, 64
    %v3464 = vpop.permute.xlu0 %3463
    %v3465 = vrot.slane %v3464, 1
    %v3467 = vtanh.pop %v3465
    %3469 = vrot.lane.b32.xlu0 %v3389, 64
    %v3470 = vpop.permute.xlu0 %3469
    %v3472 = vmul.f32 %v3461, %v3470
    %v3473 = vmul.f32 %v3461, %v3467
    %3475 = vrot.lane.b32.xlu0 %v3473, 64
    %v3476 = vpop.permute.xlu0 %3475
    %v3478 = vadd.f32 %v3472, %v3476
    %v3479 = vtanh.pop %v3478
    %v3481 = vrot.slane %v3461, 1
    %3484 = vrot.lane.b32.xlu0 %v3479, 64
    %v3485 = vpop.permute.xlu0 %3484
    %v3487 = vmul.f32 %v3481, %v3485
    %v3488 = vsel %vm524, %v3487, %v3383
    %v3490 = vperm.slane %v3478, 0
    %3491 = vrot.lane.b32.xlu0 %v3490, 64
    %v3492 = vpop.permute.xlu0 %3491
    %v3494 = vsel %vm524, %v3492, %v3389
    %v3495 = vld [vmem:[%s533] ss:$8 sm:$0x3]
    %v3496 = vld [vmem:[%s535] ss:$8 sm:$0x3]
    %v3497 = vadd.f32 %v3495, %v3496
    %v3499 = vsel %vm83, %v3488, 0
    %3501 = vmatpush.msra.mxu0 0.0
    %3502 = vmatpush.msra.mxu0 0.0
    %3503 = vmatpush.msra.mxu0 0.0
    %3504 = vmatpush.msra.mxu0 0.0
    %3505 = vmatpush.msra.mxu0 0.0
    %3506 = vmatpush.msra.mxu0 0.0
    %3507 = vmatpush.msra.mxu0 0.0
    %3508 = vmatpush.msra.mxu0 0.0
    %3509 = vmatpush.msra.mxu0 %v3183
    %3510 = vmatpush.msra.mxu0 %v3181
    %3511 = vmatpush.msra.mxu0 %v3179
    %3512 = vmatpush.msra.mxu0 %v3177
    %3513 = vmatpush.msra.mxu0 %v3175
    %3514 = vmatpush.msra.mxu0 %v3173
    %3515 = vmatpush.msra.mxu0 %v3171
    %3516 = vmatpush.msra.mxu0 %v3169
    %3517 = vmatmul.f32.gmra.mxu0 %v3499
    %v3518 = vpop.f32.mrf.mxu0
    %v3519 = vadd.f32 0.0, %v3518
    %3520 = vdwg.mxu0
    %3521 = vmatpush.msra.mxu0 0.0
    %3522 = vmatpush.msra.mxu0 0.0
    %3523 = vmatpush.msra.mxu0 0.0
    %3524 = vmatpush.msra.mxu0 0.0
    %3525 = vmatpush.msra.mxu0 0.0
    %3526 = vmatpush.msra.mxu0 0.0
    %3527 = vmatpush.msra.mxu0 0.0
    %3528 = vmatpush.msra.mxu0 0.0
    %3529 = vmatpush.msra.mxu0 %v3184
    %3530 = vmatpush.msra.mxu0 %v3182
    %3531 = vmatpush.msra.mxu0 %v3180
    %3532 = vmatpush.msra.mxu0 %v3178
    %3533 = vmatpush.msra.mxu0 %v3176
    %3534 = vmatpush.msra.mxu0 %v3174
    %3535 = vmatpush.msra.mxu0 %v3172
    %3536 = vmatpush.msra.mxu0 %v3170
    %3537 = vmatmul.f32.gmra.mxu0 %v3499
    %v3538 = vpop.f32.mrf.mxu0
    %v3539 = vadd.f32 0.0, %v3538
    %3540 = vdwg.mxu0
    %v3543 = vrot.slane %v3539, 7
    %v3544 = vsel %vm254, %v3519, %v3543
    %v3546 = vadd.f32 %v3497, %v3544
    %v3547 = vadd.f32 %v3546, %v3186
    %v3548 = vxor.u32 %v3547, 2147483648
    %v3549 = vmul.f32 %v3548, 1.442695
    %v3550 = vpow.pop %v3549
    %v3551 = vadd.f32 %v3550, 1.0
    %v3552 = vrcp.pop %v3551
    %v3553 = vmul.f32 %v3551, %v3552
    %v3554 = vsub.f32 1.0, %v3553
    %v3555 = vmul.f32 %v3552, %v3554
    %v3556 = vadd.f32 %v3552, %v3555
    %vm3557 = vweird.f32 %v3551
    %vm3558 = vweird.f32 %v3552
    %vm3559 = vmor %vm3557, %vm3558
    %v3560 = vsel %vm3559, %v3552, %v3556
    %v3561 = vand.u32 2147483647, %v3551
    %vm3562 = vcmp.eq.f32.partialorder %v3561, 8.507059e+37
    %v3563 = vand.u32 %v3551, 2147483648
    %v3564 = vor.u32 1.1754944e-38, %v3563
    %v3565 = vsel %vm3562, %v3564, %v3560
    %v3566 = vmul.f32 1.0, %v3565
    %3568 = vrot.lane.b32.xlu0 %v3547, 64
    %v3569 = vpop.permute.xlu0 %3568
    %v3570 = vrot.slane %v3569, 1
    %v3572 = vtanh.pop %v3570
    %3574 = vrot.lane.b32.xlu0 %v3494, 64
    %v3575 = vpop.permute.xlu0 %3574
    %v3577 = vmul.f32 %v3566, %v3575
    %v3578 = vmul.f32 %v3566, %v3572
    %3580 = vrot.lane.b32.xlu0 %v3578, 64
    %v3581 = vpop.permute.xlu0 %3580
    %v3583 = vadd.f32 %v3577, %v3581
    %v3584 = vtanh.pop %v3583
    %v3586 = vrot.slane %v3566, 1
    %3589 = vrot.lane.b32.xlu0 %v3584, 64
    %v3590 = vpop.permute.xlu0 %3589
    %v3592 = vmul.f32 %v3586, %v3590
    %v3593 = vsel %vm634, %v3592, %v3488
    %v3595 = vperm.slane %v3583, 0
    %3596 = vrot.lane.b32.xlu0 %v3595, 64
    %v3597 = vpop.permute.xlu0 %3596
    %v3599 = vsel %vm634, %v3597, %v3494
    %v3600 = vld [vmem:[%s643] ss:$8 sm:$0x3]
    %v3601 = vld [vmem:[%s645] ss:$8 sm:$0x3]
    %v3602 = vadd.f32 %v3600, %v3601
    %v3604 = vsel %vm83, %v3593, 0
    %3606 = vmatpush.msra.mxu0 0.0
    %3607 = vmatpush.msra.mxu0 0.0
    %3608 = vmatpush.msra.mxu0 0.0
    %3609 = vmatpush.msra.mxu0 0.0
    %3610 = vmatpush.msra.mxu0 0.0
    %3611 = vmatpush.msra.mxu0 0.0
    %3612 = vmatpush.msra.mxu0 0.0
    %3613 = vmatpush.msra.mxu0 0.0
    %3614 = vmatpush.msra.mxu0 %v3183
    %3615 = vmatpush.msra.mxu0 %v3181
    %3616 = vmatpush.msra.mxu0 %v3179
    %3617 = vmatpush.msra.mxu0 %v3177
    %3618 = vmatpush.msra.mxu0 %v3175
    %3619 = vmatpush.msra.mxu0 %v3173
    %3620 = vmatpush.msra.mxu0 %v3171
    %3621 = vmatpush.msra.mxu0 %v3169
    %3622 = vmatmul.f32.gmra.mxu0 %v3604
    %v3623 = vpop.f32.mrf.mxu0
    %v3624 = vadd.f32 0.0, %v3623
    %3625 = vdwg.mxu0
    %3626 = vmatpush.msra.mxu0 0.0
    %3627 = vmatpush.msra.mxu0 0.0
    %3628 = vmatpush.msra.mxu0 0.0
    %3629 = vmatpush.msra.mxu0 0.0
    %3630 = vmatpush.msra.mxu0 0.0
    %3631 = vmatpush.msra.mxu0 0.0
    %3632 = vmatpush.msra.mxu0 0.0
    %3633 = vmatpush.msra.mxu0 0.0
    %3634 = vmatpush.msra.mxu0 %v3184
    %3635 = vmatpush.msra.mxu0 %v3182
    %3636 = vmatpush.msra.mxu0 %v3180
    %3637 = vmatpush.msra.mxu0 %v3178
    %3638 = vmatpush.msra.mxu0 %v3176
    %3639 = vmatpush.msra.mxu0 %v3174
    %3640 = vmatpush.msra.mxu0 %v3172
    %3641 = vmatpush.msra.mxu0 %v3170
    %3642 = vmatmul.f32.gmra.mxu0 %v3604
    %v3643 = vpop.f32.mrf.mxu0
    %v3644 = vadd.f32 0.0, %v3643
    %3645 = vdwg.mxu0
    %v3648 = vrot.slane %v3644, 7
    %v3649 = vsel %vm254, %v3624, %v3648
    %v3651 = vadd.f32 %v3602, %v3649
    %v3652 = vadd.f32 %v3651, %v3186
    %v3653 = vxor.u32 %v3652, 2147483648
    %v3654 = vmul.f32 %v3653, 1.442695
    %v3655 = vpow.pop %v3654
    %v3656 = vadd.f32 %v3655, 1.0
    %v3657 = vrcp.pop %v3656
    %v3658 = vmul.f32 %v3656, %v3657
    %v3659 = vsub.f32 1.0, %v3658
    %v3660 = vmul.f32 %v3657, %v3659
    %v3661 = vadd.f32 %v3657, %v3660
    %vm3662 = vweird.f32 %v3656
    %vm3663 = vweird.f32 %v3657
    %vm3664 = vmor %vm3662, %vm3663
    %v3665 = vsel %vm3664, %v3657, %v3661
    %v3666 = vand.u32 2147483647, %v3656
    %vm3667 = vcmp.eq.f32.partialorder %v3666, 8.507059e+37
    %v3668 = vand.u32 %v3656, 2147483648
    %v3669 = vor.u32 1.1754944e-38, %v3668
    %v3670 = vsel %vm3667, %v3669, %v3665
    %v3671 = vmul.f32 1.0, %v3670
    %3673 = vrot.lane.b32.xlu0 %v3652, 64
    %v3674 = vpop.permute.xlu0 %3673
    %v3675 = vrot.slane %v3674, 1
    %v3677 = vtanh.pop %v3675
    %3679 = vrot.lane.b32.xlu0 %v3599, 64
    %v3680 = vpop.permute.xlu0 %3679
    %v3682 = vmul.f32 %v3671, %v3680
    %v3683 = vmul.f32 %v3671, %v3677
    %3685 = vrot.lane.b32.xlu0 %v3683, 64
    %v3686 = vpop.permute.xlu0 %3685
    %v3688 = vadd.f32 %v3682, %v3686
    %v3689 = vtanh.pop %v3688
    %v3691 = vrot.slane %v3671, 1
    %3694 = vrot.lane.b32.xlu0 %v3689, 64
    %v3695 = vpop.permute.xlu0 %3694
    %v3697 = vmul.f32 %v3691, %v3695
    %v3698 = vsel %vm744, %v3697, %v3593
    %v3700 = vperm.slane %v3688, 0
    %3701 = vrot.lane.b32.xlu0 %v3700, 64
    %v3702 = vpop.permute.xlu0 %3701
    %v3704 = vsel %vm744, %v3702, %v3599
    %v3705 = vld [vmem:[%s753] ss:$8 sm:$0x3]
    %v3706 = vld [vmem:[%s755] ss:$8 sm:$0x3]
    %v3707 = vadd.f32 %v3705, %v3706
    %v3709 = vsel %vm83, %v3698, 0
    %3711 = vmatpush.msra.mxu0 0.0
    %3712 = vmatpush.msra.mxu0 0.0
    %3713 = vmatpush.msra.mxu0 0.0
    %3714 = vmatpush.msra.mxu0 0.0
    %3715 = vmatpush.msra.mxu0 0.0
    %3716 = vmatpush.msra.mxu0 0.0
    %3717 = vmatpush.msra.mxu0 0.0
    %3718 = vmatpush.msra.mxu0 0.0
    %3719 = vmatpush.msra.mxu0 %v3183
    %3720 = vmatpush.msra.mxu0 %v3181
    %3721 = vmatpush.msra.mxu0 %v3179
    %3722 = vmatpush.msra.mxu0 %v3177
    %3723 = vmatpush.msra.mxu0 %v3175
    %3724 = vmatpush.msra.mxu0 %v3173
    %3725 = vmatpush.msra.mxu0 %v3171
    %3726 = vmatpush.msra.mxu0 %v3169
    %3727 = vmatmul.f32.gmra.mxu0 %v3709
    %v3728 = vpop.f32.mrf.mxu0
    %v3729 = vadd.f32 0.0, %v3728
    %3730 = vdwg.mxu0
    %3731 = vmatpush.msra.mxu0 0.0
    %3732 = vmatpush.msra.mxu0 0.0
    %3733 = vmatpush.msra.mxu0 0.0
    %3734 = vmatpush.msra.mxu0 0.0
    %3735 = vmatpush.msra.mxu0 0.0
    %3736 = vmatpush.msra.mxu0 0.0
    %3737 = vmatpush.msra.mxu0 0.0
    %3738 = vmatpush.msra.mxu0 0.0
    %3739 = vmatpush.msra.mxu0 %v3184
    %3740 = vmatpush.msra.mxu0 %v3182
    %3741 = vmatpush.msra.mxu0 %v3180
    %3742 = vmatpush.msra.mxu0 %v3178
    %3743 = vmatpush.msra.mxu0 %v3176
    %3744 = vmatpush.msra.mxu0 %v3174
    %3745 = vmatpush.msra.mxu0 %v3172
    %3746 = vmatpush.msra.mxu0 %v3170
    %3747 = vmatmul.f32.gmra.mxu0 %v3709
    %v3748 = vpop.f32.mrf.mxu0
    %v3749 = vadd.f32 0.0, %v3748
    %3750 = vdwg.mxu0
    %v3753 = vrot.slane %v3749, 7
    %v3754 = vsel %vm254, %v3729, %v3753
    %v3756 = vadd.f32 %v3707, %v3754
    %v3757 = vadd.f32 %v3756, %v3186
    %v3758 = vxor.u32 %v3757, 2147483648
    %v3759 = vmul.f32 %v3758, 1.442695
    %v3760 = vpow.pop %v3759
    %v3761 = vadd.f32 %v3760, 1.0
    %v3762 = vrcp.pop %v3761
    %v3763 = vmul.f32 %v3761, %v3762
    %v3764 = vsub.f32 1.0, %v3763
    %v3765 = vmul.f32 %v3762, %v3764
    %v3766 = vadd.f32 %v3762, %v3765
    %vm3767 = vweird.f32 %v3761
    %vm3768 = vweird.f32 %v3762
    %vm3769 = vmor %vm3767, %vm3768
    %v3770 = vsel %vm3769, %v3762, %v3766
    %v3771 = vand.u32 2147483647, %v3761
    %vm3772 = vcmp.eq.f32.partialorder %v3771, 8.507059e+37
    %v3773 = vand.u32 %v3761, 2147483648
    %v3774 = vor.u32 1.1754944e-38, %v3773
    %v3775 = vsel %vm3772, %v3774, %v3770
    %v3776 = vmul.f32 1.0, %v3775
    %3778 = vrot.lane.b32.xlu0 %v3757, 64
    %v3779 = vpop.permute.xlu0 %3778
    %v3780 = vrot.slane %v3779, 1
    %v3782 = vtanh.pop %v3780
    %3784 = vrot.lane.b32.xlu0 %v3704, 64
    %v3785 = vpop.permute.xlu0 %3784
    %v3787 = vmul.f32 %v3776, %v3785
    %v3788 = vmul.f32 %v3776, %v3782
    %3790 = vrot.lane.b32.xlu0 %v3788, 64
    %v3791 = vpop.permute.xlu0 %3790
    %v3793 = vadd.f32 %v3787, %v3791
    %v3794 = vtanh.pop %v3793
    %v3796 = vrot.slane %v3776, 1
    %3799 = vrot.lane.b32.xlu0 %v3794, 64
    %v3800 = vpop.permute.xlu0 %3799
    %v3802 = vmul.f32 %v3796, %v3800
    %v3803 = vsel %vm854, %v3802, %v3698
    %v3805 = vperm.slane %v3793, 0
    %3806 = vrot.lane.b32.xlu0 %v3805, 64
    %v3807 = vpop.permute.xlu0 %3806
    %v3809 = vsel %vm854, %v3807, %v3704
    %v3810 = vld [vmem:[%s863] ss:$8 sm:$0x3]
    %v3811 = vld [vmem:[%s865] ss:$8 sm:$0x3]
    %v3812 = vadd.f32 %v3810, %v3811
    %v3814 = vsel %vm83, %v3803, 0
    %3816 = vmatpush.msra.mxu0 0.0
    %3817 = vmatpush.msra.mxu0 0.0
    %3818 = vmatpush.msra.mxu0 0.0
    %3819 = vmatpush.msra.mxu0 0.0
    %3820 = vmatpush.msra.mxu0 0.0
    %3821 = vmatpush.msra.mxu0 0.0
    %3822 = vmatpush.msra.mxu0 0.0
    %3823 = vmatpush.msra.mxu0 0.0
    %3824 = vmatpush.msra.mxu0 %v3183
    %3825 = vmatpush.msra.mxu0 %v3181
    %3826 = vmatpush.msra.mxu0 %v3179
    %3827 = vmatpush.msra.mxu0 %v3177
    %3828 = vmatpush.msra.mxu0 %v3175
    %3829 = vmatpush.msra.mxu0 %v3173
    %3830 = vmatpush.msra.mxu0 %v3171
    %3831 = vmatpush.msra.mxu0 %v3169
    %3832 = vmatmul.f32.gmra.mxu0 %v3814
    %v3833 = vpop.f32.mrf.mxu0
    %v3834 = vadd.f32 0.0, %v3833
    %3835 = vdwg.mxu0
    %3836 = vmatpush.msra.mxu0 0.0
    %3837 = vmatpush.msra.mxu0 0.0
    %3838 = vmatpush.msra.mxu0 0.0
    %3839 = vmatpush.msra.mxu0 0.0
    %3840 = vmatpush.msra.mxu0 0.0
    %3841 = vmatpush.msra.mxu0 0.0
    %3842 = vmatpush.msra.mxu0 0.0
    %3843 = vmatpush.msra.mxu0 0.0
    %3844 = vmatpush.msra.mxu0 %v3184
    %3845 = vmatpush.msra.mxu0 %v3182
    %3846 = vmatpush.msra.mxu0 %v3180
    %3847 = vmatpush.msra.mxu0 %v3178
    %3848 = vmatpush.msra.mxu0 %v3176
    %3849 = vmatpush.msra.mxu0 %v3174
    %3850 = vmatpush.msra.mxu0 %v3172
    %3851 = vmatpush.msra.mxu0 %v3170
    %3852 = vmatmul.f32.gmra.mxu0 %v3814
    %v3853 = vpop.f32.mrf.mxu0
    %v3854 = vadd.f32 0.0, %v3853
    %3855 = vdwg.mxu0
    %v3858 = vrot.slane %v3854, 7
    %v3859 = vsel %vm254, %v3834, %v3858
    %v3861 = vadd.f32 %v3812, %v3859
    %v3862 = vadd.f32 %v3861, %v3186
    %v3863 = vxor.u32 %v3862, 2147483648
    %v3864 = vmul.f32 %v3863, 1.442695
    %v3865 = vpow.pop %v3864
    %v3866 = vadd.f32 %v3865, 1.0
    %v3867 = vrcp.pop %v3866
    %v3868 = vmul.f32 %v3866, %v3867
    %v3869 = vsub.f32 1.0, %v3868
    %v3870 = vmul.f32 %v3867, %v3869
    %v3871 = vadd.f32 %v3867, %v3870
    %vm3872 = vweird.f32 %v3866
    %vm3873 = vweird.f32 %v3867
    %vm3874 = vmor %vm3872, %vm3873
    %v3875 = vsel %vm3874, %v3867, %v3871
    %v3876 = vand.u32 2147483647, %v3866
    %vm3877 = vcmp.eq.f32.partialorder %v3876, 8.507059e+37
    %v3878 = vand.u32 %v3866, 2147483648
    %v3879 = vor.u32 1.1754944e-38, %v3878
    %v3880 = vsel %vm3877, %v3879, %v3875
    %v3881 = vmul.f32 1.0, %v3880
    %3883 = vrot.lane.b32.xlu0 %v3862, 64
    %v3884 = vpop.permute.xlu0 %3883
    %v3885 = vrot.slane %v3884, 1
    %v3887 = vtanh.pop %v3885
    %3889 = vrot.lane.b32.xlu0 %v3809, 64
    %v3890 = vpop.permute.xlu0 %3889
    %v3892 = vmul.f32 %v3881, %v3890
    %v3893 = vmul.f32 %v3881, %v3887
    %3895 = vrot.lane.b32.xlu0 %v3893, 64
    %v3896 = vpop.permute.xlu0 %3895
    %v3898 = vadd.f32 %v3892, %v3896
    %v3899 = vtanh.pop %v3898
    %v3901 = vrot.slane %v3881, 1
    %3904 = vrot.lane.b32.xlu0 %v3899, 64
    %v3905 = vpop.permute.xlu0 %3904
    %v3907 = vmul.f32 %v3901, %v3905
    %v3908 = vsel %vm964, %v3907, %v3803
    %v3910 = vperm.slane %v3898, 0
    %3911 = vrot.lane.b32.xlu0 %v3910, 64
    %v3912 = vpop.permute.xlu0 %3911
    %v3914 = vsel %vm964, %v3912, %v3809
    %v3915 = vld [vmem:[%s973] ss:$8 sm:$0x3]
    %v3916 = vld [vmem:[#allocation3] ss:$8 sm:$0x3]
    %v3917 = vadd.f32 %v3915, %v3916
    %v3919 = vsel %vm83, %v3908, 0
    %3921 = vmatpush.msra.mxu0 0.0
    %3922 = vmatpush.msra.mxu0 0.0
    %3923 = vmatpush.msra.mxu0 0.0
    %3924 = vmatpush.msra.mxu0 0.0
    %3925 = vmatpush.msra.mxu0 0.0
    %3926 = vmatpush.msra.mxu0 0.0
    %3927 = vmatpush.msra.mxu0 0.0
    %3928 = vmatpush.msra.mxu0 0.0
    %3929 = vmatpush.msra.mxu0 %v3183
    %3930 = vmatpush.msra.mxu0 %v3181
    %3931 = vmatpush.msra.mxu0 %v3179
    %3932 = vmatpush.msra.mxu0 %v3177
    %3933 = vmatpush.msra.mxu0 %v3175
    %3934 = vmatpush.msra.mxu0 %v3173
    %3935 = vmatpush.msra.mxu0 %v3171
    %3936 = vmatpush.msra.mxu0 %v3169
    %3937 = vmatmul.f32.gmra.mxu0 %v3919
    %v3938 = vpop.f32.mrf.mxu0
    %v3939 = vadd.f32 0.0, %v3938
    %3940 = vdwg.mxu0
    %3941 = vmatpush.msra.mxu0 0.0
    %3942 = vmatpush.msra.mxu0 0.0
    %3943 = vmatpush.msra.mxu0 0.0
    %3944 = vmatpush.msra.mxu0 0.0
    %3945 = vmatpush.msra.mxu0 0.0
    %3946 = vmatpush.msra.mxu0 0.0
    %3947 = vmatpush.msra.mxu0 0.0
    %3948 = vmatpush.msra.mxu0 0.0
    %3949 = vmatpush.msra.mxu0 %v3184
    %3950 = vmatpush.msra.mxu0 %v3182
    %3951 = vmatpush.msra.mxu0 %v3180
    %3952 = vmatpush.msra.mxu0 %v3178
    %3953 = vmatpush.msra.mxu0 %v3176
    %3954 = vmatpush.msra.mxu0 %v3174
    %3955 = vmatpush.msra.mxu0 %v3172
    %3956 = vmatpush.msra.mxu0 %v3170
    %3957 = vmatmul.f32.gmra.mxu0 %v3919
    %v3958 = vpop.f32.mrf.mxu0
    %v3959 = vadd.f32 0.0, %v3958
    %3960 = vdwg.mxu0
    %v3963 = vrot.slane %v3959, 7
    %v3964 = vsel %vm254, %v3939, %v3963
    %v3966 = vadd.f32 %v3917, %v3964
    %v3967 = vadd.f32 %v3966, %v3186
    %v3968 = vxor.u32 %v3967, 2147483648
    %v3969 = vmul.f32 %v3968, 1.442695
    %v3970 = vpow.pop %v3969
    %v3971 = vadd.f32 %v3970, 1.0
    %v3972 = vrcp.pop %v3971
    %v3973 = vmul.f32 %v3971, %v3972
    %v3974 = vsub.f32 1.0, %v3973
    %v3975 = vmul.f32 %v3972, %v3974
    %v3976 = vadd.f32 %v3972, %v3975
    %vm3977 = vweird.f32 %v3971
    %vm3978 = vweird.f32 %v3972
    %vm3979 = vmor %vm3977, %vm3978
    %v3980 = vsel %vm3979, %v3972, %v3976
    %v3981 = vand.u32 2147483647, %v3971
    %vm3982 = vcmp.eq.f32.partialorder %v3981, 8.507059e+37
    %v3983 = vand.u32 %v3971, 2147483648
    %v3984 = vor.u32 1.1754944e-38, %v3983
    %v3985 = vsel %vm3982, %v3984, %v3980
    %v3986 = vmul.f32 1.0, %v3985
    %3988 = vrot.lane.b32.xlu0 %v3967, 64
    %v3989 = vpop.permute.xlu0 %3988
    %v3990 = vrot.slane %v3989, 1
    %v3992 = vtanh.pop %v3990
    %3994 = vrot.lane.b32.xlu0 %v3914, 64
    %v3995 = vpop.permute.xlu0 %3994
    %v3997 = vmul.f32 %v3986, %v3995
    %v3998 = vmul.f32 %v3986, %v3992
    %4000 = vrot.lane.b32.xlu0 %v3998, 64
    %v4001 = vpop.permute.xlu0 %4000
    %v4003 = vadd.f32 %v3997, %v4001
    %v4004 = vtanh.pop %v4003
    %v4006 = vrot.slane %v3986, 1
    %4009 = vrot.lane.b32.xlu0 %v4004, 64
    %v4010 = vpop.permute.xlu0 %4009
    %v4012 = vmul.f32 %v4006, %v4010
    %v4013 = vsel %vm1073, %v4012, %v3908
    %v4015 = vperm.slane %v4003, 0
    %4016 = vrot.lane.b32.xlu0 %v4015, 64
    %v4017 = vpop.permute.xlu0 %4016
    %v4019 = vsel %vm1073, %v4017, %v3914
    %4021 = vrot.lane.b32.xlu0 %v1080, 64
    %v4022 = vpop.permute.xlu0 %4021
    %4025 = vrot.lane.b32.xlu0 %v2062, 64
    %v4026 = vpop.permute.xlu0 %4025
    %4029 = vrot.lane.b32.xlu0 %v3044, 64
    %v4030 = vpop.permute.xlu0 %4029
    %4033 = vrot.lane.b32.xlu0 %v4019, 64
    %v4034 = vpop.permute.xlu0 %4033
    %v4036 = vsel %vm83, %v1074, %v4022
    %v4037 = vsel %vm83, %v2056, %v4026
    %v4038 = vsel %vm83, %v3038, %v4030
    %v4039 = vsel %vm83, %v4013, %v4034
    %v4040 = vld [vmem:[%s6] sm:$0xff]
    %v4041 = vld [vmem:[%s6 + $0x8] sm:$0xff]
    %v4042 = vld [vmem:[%s6 + $0x10] sm:$0xff]
    %v4043 = vld [vmem:[%s6 + $0x18] sm:$0xff]
    %v4044 = vld [vmem:[%s6 + $0x20] sm:$0xff]
    %v4045 = vld [vmem:[%s6 + $0x28] sm:$0xff]
    %v4046 = vld [vmem:[%s6 + $0x30] sm:$0xff]
    %v4047 = vld [vmem:[%s6 + $0x38] sm:$0xff]
    %v4048 = vld [vmem:[%s6 + $0x40] sm:$0xff]
    %v4049 = vld [vmem:[%s6 + $0x48] sm:$0xff]
    %v4050 = vld [vmem:[%s6 + $0x50] sm:$0xff]
    %v4051 = vld [vmem:[%s6 + $0x58] sm:$0xff]
    %v4052 = vld [vmem:[%s6 + $0x60] sm:$0xff]
    %v4053 = vld [vmem:[%s6 + $0x68] sm:$0xff]
    %v4054 = vld [vmem:[%s6 + $0x70] sm:$0xff]
    %v4055 = vld [vmem:[%s6 + $0x78] sm:$0xff]
    %v4056 = vld [vmem:[%s6 + $0x80] sm:$0xff]
    %v4057 = vld [vmem:[%s6 + $0x88] sm:$0xff]
    %v4058 = vld [vmem:[%s6 + $0x90] sm:$0xff]
    %v4059 = vld [vmem:[%s6 + $0x98] sm:$0xff]
    %v4060 = vld [vmem:[%s6 + $0xa0] sm:$0xff]
    %v4061 = vld [vmem:[%s6 + $0xa8] sm:$0xff]
    %v4062 = vld [vmem:[%s6 + $0xb0] sm:$0xff]
    %v4063 = vld [vmem:[%s6 + $0xb8] sm:$0xff]
    %v4064 = vld [vmem:[%s6 + $0xc0] sm:$0xff]
    %v4065 = vld [vmem:[%s6 + $0xc8] sm:$0xff]
    %v4066 = vld [vmem:[%s6 + $0xd0] sm:$0xff]
    %v4067 = vld [vmem:[%s6 + $0xd8] sm:$0xff]
    %v4068 = vld [vmem:[%s6 + $0xe0] sm:$0xff]
    %v4069 = vld [vmem:[%s6 + $0xe8] sm:$0xff]
    %v4070 = vld [vmem:[%s6 + $0xf0] sm:$0xff]
    %v4071 = vld [vmem:[%s6 + $0xf8] sm:$0xff]
    %v4072 = vld [vmem:[%s6 + $0x100] sm:$0xff]
    %v4073 = vld [vmem:[%s6 + $0x108] sm:$0xff]
    %v4074 = vld [vmem:[%s6 + $0x110] sm:$0xff]
    %v4075 = vld [vmem:[%s6 + $0x118] sm:$0xff]
    %v4076 = vld [vmem:[%s6 + $0x120] sm:$0xff]
    %v4077 = vld [vmem:[%s6 + $0x128] sm:$0xff]
    %v4078 = vld [vmem:[%s6 + $0x130] sm:$0xff]
    %v4079 = vld [vmem:[%s6 + $0x138] sm:$0xff]
    %v4080 = vld [vmem:[%s6 + $0x140] sm:$0xff]
    %v4081 = vld [vmem:[%s6 + $0x148] sm:$0xff]
    %v4082 = vld [vmem:[%s6 + $0x150] sm:$0xff]
    %v4083 = vld [vmem:[%s6 + $0x158] sm:$0xff]
    %v4084 = vld [vmem:[%s6 + $0x160] sm:$0xff]
    %v4085 = vld [vmem:[%s6 + $0x168] sm:$0xff]
    %v4086 = vld [vmem:[%s6 + $0x170] sm:$0xff]
    %v4087 = vld [vmem:[%s6 + $0x178] sm:$0xff]
    %v4088 = vld [vmem:[%s6 + $0x180] sm:$0xff]
    %v4089 = vld [vmem:[%s6 + $0x188] sm:$0xff]
    %v4090 = vld [vmem:[%s6 + $0x190] sm:$0xff]
    %v4091 = vld [vmem:[%s6 + $0x198] sm:$0xff]
    %v4092 = vld [vmem:[%s6 + $0x1a0] sm:$0xff]
    %v4093 = vld [vmem:[%s6 + $0x1a8] sm:$0xff]
    %v4094 = vld [vmem:[%s6 + $0x1b0] sm:$0xff]
    %v4095 = vld [vmem:[%s6 + $0x1b8] sm:$0xff]
    %v4096 = vld [vmem:[%s6 + $0x1c0] sm:$0xff]
    %v4097 = vld [vmem:[%s6 + $0x1c8] sm:$0xff]
    %v4098 = vld [vmem:[%s6 + $0x1d0] sm:$0xff]
    %v4099 = vld [vmem:[%s6 + $0x1d8] sm:$0xff]
    %v4100 = vld [vmem:[%s6 + $0x1e0] sm:$0xff]
    %v4101 = vld [vmem:[%s6 + $0x1e8] sm:$0xff]
    %v4102 = vld [vmem:[%s6 + $0x1f0] sm:$0xff]
    %v4103 = vld [vmem:[%s6 + $0x1f8] sm:$0xff]
    %v4104 = vld [vmem:[%s7] sm:$0x1]
    %4105 = vmatpush.msra.mxu0 %v4055
    %4106 = vmatpush.msra.mxu0 %v4054
    %4107 = vmatpush.msra.mxu0 %v4053
    %4108 = vmatpush.msra.mxu0 %v4052
    %4109 = vmatpush.msra.mxu0 %v4051
    %4110 = vmatpush.msra.mxu0 %v4050
    %4111 = vmatpush.msra.mxu0 %v4049
    %4112 = vmatpush.msra.mxu0 %v4048
    %4113 = vmatpush.msra.mxu0 %v4047
    %4114 = vmatpush.msra.mxu0 %v4046
    %4115 = vmatpush.msra.mxu0 %v4045
    %4116 = vmatpush.msra.mxu0 %v4044
    %4117 = vmatpush.msra.mxu0 %v4043
    %4118 = vmatpush.msra.mxu0 %v4042
    %4119 = vmatpush.msra.mxu0 %v4041
    %4120 = vmatpush.msra.mxu0 %v4040
    %4121 = vmatmul.f32.gmra.mxu0 %v4036
    %v4122 = vpop.f32.mrf.mxu0
    %v4123 = vadd.f32 %v4104, %v4122
    %4124 = vdwg.mxu0
    %4125 = vmatpush.msra.mxu0 %v4071
    %4126 = vmatpush.msra.mxu0 %v4070
    %4127 = vmatpush.msra.mxu0 %v4069
    %4128 = vmatpush.msra.mxu0 %v4068
    %4129 = vmatpush.msra.mxu0 %v4067
    %4130 = vmatpush.msra.mxu0 %v4066
    %4131 = vmatpush.msra.mxu0 %v4065
    %4132 = vmatpush.msra.mxu0 %v4064
    %4133 = vmatpush.msra.mxu0 %v4063
    %4134 = vmatpush.msra.mxu0 %v4062
    %4135 = vmatpush.msra.mxu0 %v4061
    %4136 = vmatpush.msra.mxu0 %v4060
    %4137 = vmatpush.msra.mxu0 %v4059
    %4138 = vmatpush.msra.mxu0 %v4058
    %4139 = vmatpush.msra.mxu0 %v4057
    %4140 = vmatpush.msra.mxu0 %v4056
    %4141 = vmatmul.f32.gmra.mxu0 %v4037
    %v4142 = vpop.f32.mrf.mxu0
    %v4143 = vadd.f32 %v4123, %v4142
    %4144 = vdwg.mxu0
    %4145 = vmatpush.msra.mxu0 %v4087
    %4146 = vmatpush.msra.mxu0 %v4086
    %4147 = vmatpush.msra.mxu0 %v4085
    %4148 = vmatpush.msra.mxu0 %v4084
    %4149 = vmatpush.msra.mxu0 %v4083
    %4150 = vmatpush.msra.mxu0 %v4082
    %4151 = vmatpush.msra.mxu0 %v4081
    %4152 = vmatpush.msra.mxu0 %v4080
    %4153 = vmatpush.msra.mxu0 %v4079
    %4154 = vmatpush.msra.mxu0 %v4078
    %4155 = vmatpush.msra.mxu0 %v4077
    %4156 = vmatpush.msra.mxu0 %v4076
    %4157 = vmatpush.msra.mxu0 %v4075
    %4158 = vmatpush.msra.mxu0 %v4074
    %4159 = vmatpush.msra.mxu0 %v4073
    %4160 = vmatpush.msra.mxu0 %v4072
    %4161 = vmatmul.f32.gmra.mxu0 %v4038
    %v4162 = vpop.f32.mrf.mxu0
    %v4163 = vadd.f32 %v4143, %v4162
    %4164 = vdwg.mxu0
    %4165 = vmatpush.msra.mxu0 %v4103
    %4166 = vmatpush.msra.mxu0 %v4102
    %4167 = vmatpush.msra.mxu0 %v4101
    %4168 = vmatpush.msra.mxu0 %v4100
    %4169 = vmatpush.msra.mxu0 %v4099
    %4170 = vmatpush.msra.mxu0 %v4098
    %4171 = vmatpush.msra.mxu0 %v4097
    %4172 = vmatpush.msra.mxu0 %v4096
    %4173 = vmatpush.msra.mxu0 %v4095
    %4174 = vmatpush.msra.mxu0 %v4094
    %4175 = vmatpush.msra.mxu0 %v4093
    %4176 = vmatpush.msra.mxu0 %v4092
    %4177 = vmatpush.msra.mxu0 %v4091
    %4178 = vmatpush.msra.mxu0 %v4090
    %4179 = vmatpush.msra.mxu0 %v4089
    %4180 = vmatpush.msra.mxu0 %v4088
    %4181 = vmatmul.f32.gmra.mxu0 %v4039
    %v4182 = vpop.f32.mrf.mxu0
    %v4183 = vadd.f32 %v4163, %v4182
    %4184 = vdwg.mxu0
    %vm4185 = vcmask 57344
    %v4186 = vsel %vm4185, %v4183, -inf
    %4187 = vmax.xlane.f32.xlu0 %v4186
    %v4188 = vpop.xlane.xlu0 %4187
    %v4189 = vsub.f32 %v4183, %v4188
    %v4190 = vmul.f32 %v4189, 1.442695
    %v4191 = vpow.pop %v4190
    %v4192 = vsel %vm4185, %v4191, 0.0
    %4193 = vadd.xlane.f32.xlu0 %v4192
    %v4194 = vpop.xlane.xlu0 %4193
    %v4195 = vrcp.pop %v4194
    %v4196 = vmul.f32 %v4194, %v4195
    %v4197 = vsub.f32 1.0, %v4196
    %v4198 = vmul.f32 %v4195, %v4197
    %v4199 = vadd.f32 %v4195, %v4198
    %vm4200 = vweird.f32 %v4194
    %vm4201 = vweird.f32 %v4195
    %vm4202 = vmor %vm4200, %vm4201
    %v4203 = vsel %vm4202, %v4195, %v4199
    %v4204 = vand.u32 2147483647, %v4194
    %vm4205 = vcmp.eq.f32.partialorder %v4204, 8.507059e+37
    %v4206 = vand.u32 %v4194, 2147483648
    %v4207 = vor.u32 1.1754944e-38, %v4206
    %v4208 = vsel %vm4205, %v4207, %v4203
    %v4209 = vmul.f32 %v4191, %v4208
    %4210 = vst.msk [vmem:[#allocation12] sm:$0x1] %vm4185, %v4209
    // Predicated region
    $region42: #{name_format_forward.1} parent=1 // pred_check
      _
    $region43: #{name_format_forward.1} parent=1 // pred_check_branch
      %4212 = sbr.rel (0) target = $region45
    $region44: #{name_format_forward.1} parent=1 // pred_region
      %4214 = vsyncadd [#allocation9], 0
      %s4216 = sshll.u32 [#allocation12], 4
      %s4217 = int_to_ptr.vmem [resolvable:$true] %s4216
      %s4218 = sshll.u32 %s8, 4
      %s4219 = int_to_ptr.hbm [resolvable:$true] %s4218
      %4221 = dma.vmem_to_hbm [thread:$0]  %s4217, 16, %s4219, [#allocation9]
    $region45: #{name_format_forward.1} parent=1 // pred_fallthru
      _
    // Predicated region
    $region46: #{name_format_forward.1} parent=1 // pred_check
      _
    $region47: #{name_format_forward.1} parent=1 // pred_check_branch
      %4223 = sbr.rel (0) target = $region49
    $region48: #{name_format_forward.1} parent=1 // pred_region
      %4225 = dma.done [#allocation9], 16
    $region49: #{name_format_forward.1} parent=1 // pred_fallthru
      _
    %4226 = vsyncpa [#allocation8], 1
    %4227 = vsyncpa [#allocation11], 1
    %4228 = vsyncpa [#allocation9], 1

</llo_original>
